<compile_context>
chip_gen: v7x
topology: tpu7x:2x2x1
jax: 0.10.0
libtpu: 0.0.40
codegen_flags: <defaults>
</compile_context>

<pallas_src>
import functools

import numpy as np

import jax
import jax.numpy as jnp
from jax.experimental import pallas as pl
from jax.experimental.pallas import tpu as pltpu

SENT_DIM = 200


# --------------------------------------------------------------------------
# Fused Pallas kernel
# --------------------------------------------------------------------------
def _dfmcnn_kernel(x_ref, m_ref, p_ref, sw_ref, sb_ref, dw_hbm, db_ref,
                   tw_hbm, tb_ref, fw_ref, fb_ref,
                   t_ref, logits_ref,
                   dw_vmem, tw_vmem, sem,
                   *, B, H, C, n_blocks):
    BH = B * H
    f32 = jnp.float32
    bf16 = jnp.bfloat16

    # ---- kick off all weight DMAs so they overlap with the compute below ----
    blk_cp = [pltpu.make_async_copy(dw_hbm.at[i], dw_vmem.at[i], sem.at[i])
              for i in range(n_blocks)]
    tail_cp = pltpu.make_async_copy(tw_hbm, tw_vmem, sem.at[n_blocks])
    for cp in blk_cp:
        cp.start()
    tail_cp.start()

    # ---- single: Conv2d(Cin, C, (1, sent_dim)) == per-(b,h) linear + ReLU ----
    y = jnp.dot(x_ref[...], sw_ref[...], preferred_element_type=f32) + sb_ref[...]
    y = jnp.maximum(y, 0.0)                                      # (BH, C) f32

    mask_prev = m_ref[:, 0:1]                                    # (BH, 1) f32
    mask_next = m_ref[:, 1:2]
    P = p_ref[...]                                               # (4BH, BH) bf16
    zrow = jnp.zeros((1, C), f32)

    for blk in range(n_blocks):
        blk_cp[blk].wait()                                       # weights resident
        b_blk = db_ref[blk]                                      # (3, C) f32

        # conv2 (3,1), padding (1,0): sublane-shifted copies of y (masked at
        # batch boundaries) feeding three accumulated K=C matmuls.
        y_prev = jnp.concatenate([zrow, y[:BH - 1]], axis=0) * mask_prev
        y_next = jnp.concatenate([y[1:], zrow], axis=0) * mask_next
        z = (jnp.dot(y_prev.astype(bf16), dw_vmem[blk, 0:C, :],
                     preferred_element_type=f32)
             + jnp.dot(y.astype(bf16), dw_vmem[blk, C:2 * C, :],
                       preferred_element_type=f32)
             + jnp.dot(y_next.astype(bf16), dw_vmem[blk, 2 * C:3 * C, :],
                       preferred_element_type=f32)
             + b_blk[0:1])
        z = jnp.maximum(z, 0.0)

        # value projection (the 2 heads concatenated == one (BH,C)@(C,C) matmul)
        v = jnp.dot(z.astype(bf16), dw_vmem[blk, 3 * C:4 * C, :],
                    preferred_element_type=f32) + b_blk[1:2]     # (BH, C)

        # pdg @ V for all 4 pdg slices and the whole batch in one matmul
        a = jnp.dot(P, v.astype(bf16), preferred_element_type=f32)   # (4BH, C)

        # fused (output-linear o conv4-1x1): move heads to lanes (pure vreg
        # regroup) and do one K=4C matmul against the pre-stacked w4' slab.
        a16 = a.astype(bf16)
        a_wide = jnp.concatenate(
            [a16[i * BH:(i + 1) * BH] for i in range(4)], axis=1)    # (BH, 4C)
        acc = jnp.dot(a_wide, dw_vmem[blk, 4 * C:8 * C, :],
                      preferred_element_type=f32) + b_blk[2:3]

        # residual add + ReLU
        y = jnp.maximum(y + acc, 0.0)                            # (BH, C) f32

    # ---- tail: Conv2d(C, out_channel, (1,1)), no ReLU ----
    tail_cp.wait()
    t = jnp.dot(y.astype(bf16), tw_vmem[...],
                preferred_element_type=f32) + tb_ref[...]
    t_ref[...] = t.astype(t_ref.dtype)

    # ---- side branch: AdaptiveMaxPool2d(1) -> Dropout (eval identity) -> fc ----
    pooled = jnp.concatenate(
        [jnp.max(t[b * H:(b + 1) * H], axis=0, keepdims=True) for b in range(B)],
        axis=0)                                                  # (B, out_c)
    logits = jnp.dot(pooled, fw_ref[...], preferred_element_type=f32) + fb_ref[...]
    logits_ref[...] = logits.astype(logits_ref.dtype)


def dfmcnn_pallas(x_flat, masks, p_stack, params, *, B, H):
    BH, KW = x_flat.shape
    C = params["single_w"].shape[1]
    out_c = params["tail_w"].shape[1]
    ncls = params["fc_w"].shape[1]
    n_blocks = params["dfm_w"].shape[0]

    kernel = functools.partial(_dfmcnn_kernel, B=B, H=H, C=C, n_blocks=n_blocks)
    return pl.pallas_call(
        kernel,
        out_shape=(jax.ShapeDtypeStruct((BH, out_c), jnp.float32),
                   jax.ShapeDtypeStruct((B, ncls), jnp.float32)),
        grid=(1,),
        in_specs=[
            pl.BlockSpec((BH, KW), lambda i: (0, 0)),                 # x_flat (bf16)
            pl.BlockSpec((BH, 2), lambda i: (0, 0)),                  # edge masks
            pl.BlockSpec((4 * BH, BH), lambda i: (0, 0)),             # pdg stack (bf16)
            pl.BlockSpec((KW, C), lambda i: (0, 0)),                  # single_w (bf16)
            pl.BlockSpec((1, C), lambda i: (0, 0)),                   # single_b
            pl.BlockSpec(memory_space=pl.ANY),                        # dfm_w (HBM)
            pl.BlockSpec((n_blocks, 3, C), lambda i: (0, 0, 0)),      # dfm_b
            pl.BlockSpec(memory_space=pl.ANY),                        # tail_w (HBM)
            pl.BlockSpec((1, out_c), lambda i: (0, 0)),               # tail_b
            pl.BlockSpec((out_c, ncls), lambda i: (0, 0)),            # fc_w
            pl.BlockSpec((1, ncls), lambda i: (0, 0)),                # fc_b
        ],
        out_specs=(pl.BlockSpec((BH, out_c), lambda i: (0, 0)),
                   pl.BlockSpec((B, ncls), lambda i: (0, 0))),
        scratch_shapes=[
            pltpu.VMEM((n_blocks, 8 * C, C), jnp.bfloat16),   # dfm_w staging
            pltpu.VMEM((C, out_c), jnp.bfloat16),             # tail_w staging
            pltpu.SemaphoreType.DMA((n_blocks + 1,)),
        ],
        compiler_params=pltpu.CompilerParams(
            dimension_semantics=("arbitrary",)),
    )(x_flat, masks, p_stack, params["single_w"], params["single_b"],
      params["dfm_w"], params["dfm_b"], params["tail_w"], params["tail_b"],
      params["fc_w"], params["fc_b"])


# --------------------------------------------------------------------------
# Host-side structural helpers
# --------------------------------------------------------------------------
def _edge_masks(B, H):
    """(BH, 2) f32: col 0 zeroes the h-1 neighbor at h==0, col 1 zeroes the
    h+1 neighbor at h==H-1 (so shifts never cross a batch boundary)."""
    BH = B * H
    m = np.ones((BH, 2), np.float32)
    for b in range(B):
        m[b * H, 0] = 0.0
        m[b * H + H - 1, 1] = 0.0
    return jnp.asarray(m)


def _stack_pdg(pdg):
    """pdg (B, 4, H, H) -> block-diagonal stack (4*B*H, B*H):
    row i*BH + b*H + h , col b*H + k  ==  pdg[b, i, h, k]."""
    B, nh, H, _ = pdg.shape
    eye = jnp.eye(B, dtype=pdg.dtype)
    p5 = jnp.einsum('bihk,bc->ibhck', pdg, eye)          # (4, B, H, B, H)
    return p5.reshape(nh * B * H, B * H)


# --------------------------------------------------------------------------
# Parameter init (PyTorch shapes) + packing into kernel layout
# --------------------------------------------------------------------------
def init_raw_params(key, in_channel=4, C=128, out_channel=256, class_num=2,
                    sent_dim=SENT_DIM):
    def nrm(k, shape, fan_in):
        return jax.random.normal(k, shape, jnp.float32) / jnp.sqrt(float(fan_in))

    keys = iter(jax.random.split(key, 64))
    raw = {"conv2_w": [], "conv2_b": [], "wv": [], "bv": [],
           "lin_w": [], "lin_b": [], "conv4_w": [], "conv4_b": []}

    raw["single_w"] = nrm(next(keys), (C, in_channel, 1, sent_dim),
                          in_channel * sent_dim)
    raw["single_b"] = nrm(next(keys), (C,), in_channel * sent_dim)

    for _ in range(3):
        raw["conv2_w"].append(nrm(next(keys), (C, C, 3, 1), 3 * C))
        raw["conv2_b"].append(nrm(next(keys), (C,), 3 * C))
        wv0 = nrm(next(keys), (C // 2, C), C)
        bv0 = nrm(next(keys), (C // 2,), C)
        wv1 = nrm(next(keys), (C // 2, C), C)
        bv1 = nrm(next(keys), (C // 2,), C)
        raw["wv"].append([wv0, wv1])
        raw["bv"].append([bv0, bv1])
        raw["lin_w"].append(nrm(next(keys), (C, C), C))
        raw["lin_b"].append(nrm(next(keys), (C,), C))
        raw["conv4_w"].append(nrm(next(keys), (C, 4 * C, 1, 1), 4 * C))
        raw["conv4_b"].append(nrm(next(keys), (C,), 4 * C))
        # NOTE: DFM.linear (nn.Linear(C, C)) exists in __init__ but is unused
        # in the PyTorch forward, so it is not materialized.

    raw["tail_w"] = nrm(next(keys), (out_channel, C, 1, 1), C)
    raw["tail_b"] = nrm(next(keys), (out_channel,), C)
    raw["fc_w"] = nrm(next(keys), (class_num, out_channel), out_channel)
    raw["fc_b"] = nrm(next(keys), (class_num,), out_channel)
    return raw


def pack_params(raw):
    """Repack the PyTorch-layout weights into kernel layout (bf16 matmul
    weights, f32 biases); fold the shared multi-head output linear into the
    conv4 1x1 weights."""
    bf16 = jnp.bfloat16
    C = raw["single_b"].shape[0]
    params = {}

    params["single_w"] = raw["single_w"].reshape(C, -1).T.astype(bf16)  # (Cin*W, C)
    params["single_b"] = raw["single_b"].reshape(1, C)

    dfm_w, dfm_b = [], []
    for blk in range(len(raw["conv2_w"])):
        conv2_w, conv2_b = raw["conv2_w"][blk], raw["conv2_b"][blk]
        wv0, wv1 = raw["wv"][blk]
        bv0, bv1 = raw["bv"][blk]
        lin_w, lin_b = raw["lin_w"][blk], raw["lin_b"][blk]
        conv4_w, conv4_b = raw["conv4_w"][blk], raw["conv4_b"][blk]

        # conv2 weights as (3C, C): rows [0:C]=k-1 taps, [C:2C]=k0, [2C:3C]=k+1
        w2cat = jnp.transpose(conv2_w[:, :, :, 0], (2, 1, 0)).reshape(3 * C, C)
        # two value-projection heads concatenated along output channels
        wv = jnp.concatenate([wv0.T, wv1.T], axis=1)                    # (C, C)
        bv = jnp.concatenate([bv0, bv1], axis=0)                        # (C,)
        # shared multi-head output linear, applied as  a = z @ wl + bl
        wl = lin_w.T                                                    # (C, C)
        # conv4 1x1 split per pdg slice: w4[i] is (Cin, Cout)
        w4 = jnp.transpose(conv4_w[:, :, 0, 0].reshape(C, 4, C), (1, 2, 0))
        # constant-fold (wl, bl) into conv4:  w4'_i = wl @ w4_i
        w4p = jnp.einsum('kc,ico->iko', wl, w4)                         # (4, C, C)
        b4p = conv4_b + jnp.einsum('c,ico->o', lin_b, w4)               # (C,)

        dfm_w.append(jnp.concatenate([w2cat, wv, w4p.reshape(4 * C, C)], axis=0))
        dfm_b.append(jnp.stack([conv2_b, bv, b4p], axis=0))             # (3, C)

    params["dfm_w"] = jnp.stack(dfm_w, axis=0).astype(bf16)             # (3, 8C, C)
    params["dfm_b"] = jnp.stack(dfm_b, axis=0)                          # (3, 3, C)

    params["tail_w"] = raw["tail_w"][:, :, 0, 0].T.astype(bf16)         # (C, out)
    params["tail_b"] = raw["tail_b"].reshape(1, -1)
    params["fc_w"] = raw["fc_w"].T                                      # (out, cls)
    params["fc_b"] = raw["fc_b"].reshape(1, -1)
    return params


# --------------------------------------------------------------------------
# Full forward pass
# --------------------------------------------------------------------------
def dfmcnn_forward(x, pdg, params):
    """x: (B, in_channel, H, sent_dim) NCHW, pdg: (B, 4, H, H).

    Returns (out, logits): out is PyTorch-NCHW (B, out_channel, H, 1) matching
    the module's return value; logits is the print-only fc(maxpool(...)) branch.
    """
    B, Cin, H, W = x.shape
    BH = B * H
    out_c = params["tail_w"].shape[1]

    # channels-last flatten for the `single` (1, sent_dim) conv
    x_flat = jnp.transpose(x.astype(jnp.float32), (0, 2, 1, 3)).reshape(
        BH, Cin * W).astype(jnp.bfloat16)
    masks = _edge_masks(B, H)
    p_stack = _stack_pdg(pdg.astype(jnp.float32)).astype(jnp.bfloat16)

    t, logits = dfmcnn_pallas(x_flat, masks, p_stack, params, B=B, H=H)

    out = jnp.transpose(t.reshape(B, H, out_c), (0, 2, 1))[..., None]
    return out, logits


# --------------------------------------------------------------------------
# Pure-JAX f32 reference of the PyTorch forward (validation only)
# --------------------------------------------------------------------------
def dfmcnn_reference(x, pdg, raw):
    x = x.astype(jnp.float32)
    pdg = pdg.astype(jnp.float32)
    B, Cin, H, W = x.shape
    y = jnp.einsum('bchw,ocw->bho', x, raw["single_w"][:, :, 0, :]) + raw["single_b"]
    y = jnp.maximum(y, 0.0)
    for blk in range(len(raw["conv2_w"])):
        r = y
        w2 = raw["conv2_w"][blk][:, :, :, 0]                     # (C, C, 3)
        ypad = jnp.pad(y, ((0, 0), (1, 1), (0, 0)))
        z = (jnp.einsum('bhc,oc->bho', ypad[:, 0:H], w2[:, :, 0])
             + jnp.einsum('bhc,oc->bho', ypad[:, 1:H + 1], w2[:, :, 1])
             + jnp.einsum('bhc,oc->bho', ypad[:, 2:H + 2], w2[:, :, 2])
             + raw["conv2_b"][blk])
        z = jnp.maximum(z, 0.0)
        rev = []
        for i in range(4):
            heads = []
            for j in range(2):
                v = jnp.einsum('bhc,dc->bhd', z, raw["wv"][blk][j]) + raw["bv"][blk][j]
                heads.append(jnp.einsum('bhk,bkd->bhd', pdg[:, i], v))
            cat = jnp.concatenate(heads, axis=-1)
            rev.append(jnp.einsum('bhc,oc->bho', cat, raw["lin_w"][blk])
                       + raw["lin_b"][blk])
        cat4 = jnp.concatenate(rev, axis=-1)                     # (B, H, 4C)
        o4 = jnp.einsum('bhk,ok->bho', cat4,
                        raw["conv4_w"][blk][:, :, 0, 0]) + raw["conv4_b"][blk]
        y = jnp.maximum(r + o4, 0.0)
    t = jnp.einsum('bhc,oc->bho', y, raw["tail_w"][:, :, 0, 0]) + raw["tail_b"]
    out_nchw = jnp.transpose(t, (0, 2, 1))[..., None]
    pooled = jnp.max(t, axis=1)
    logits = pooled @ raw["fc_w"].T + raw["fc_b"]
    return out_nchw, logits


if __name__ == "__main__":
    key = jax.random.PRNGKey(0)
    k_x, k_p, k_w = jax.random.split(key, 3)

    B, IN_CH, H = 2, 4, 8
    CHANNEL_SIZE, OUT_CHANNEL, CLASS_NUM = 128, 256, 2

    x = jax.random.normal(k_x, (B, IN_CH, H, SENT_DIM), jnp.float32)
    pdg = jax.random.normal(k_p, (B, 4, H, H), jnp.float32)
    raw = init_raw_params(k_w, in_channel=IN_CH, C=CHANNEL_SIZE,
                          out_channel=OUT_CHANNEL, class_num=CLASS_NUM)
    params = pack_params(raw)

    out, logits = dfmcnn_forward(x, pdg, params)
    jax.block_until_ready((out, logits))

    assert out.shape == (B, OUT_CHANNEL, H, 1)
    assert logits.shape == (B, CLASS_NUM)

    # Loose sanity check vs. a pure-JAX reference (kernel matmuls run in bf16,
    # f32 accumulate), normalized by output magnitude so it only trips on
    # structural errors, not bf16 rounding.
    out_ref, logits_ref = dfmcnn_reference(x, pdg, raw)

    def rel_err(a, b):
        return float(jnp.max(jnp.abs(a - b)) / (jnp.max(jnp.abs(b)) + 1e-6))

    assert rel_err(out, out_ref) < 0.15, f"out mismatch: {rel_err(out, out_ref)}"
    assert rel_err(logits, logits_ref) < 0.15, \
        f"logits mismatch: {rel_err(logits, logits_ref)}"

    print("KERNEL_OK")
</pallas_src>

<mosaic_0001>
module attributes {stable_mosaic.version = 11 : i64} {
  func.func @_dfmcnn_kernel(%arg0: i32, %arg1: memref<16x800xbf16, #tpu.memory_space<vmem>>, %arg2: memref<16x2xf32, #tpu.memory_space<vmem>>, %arg3: memref<64x16xbf16, #tpu.memory_space<vmem>>, %arg4: memref<800x128xbf16, #tpu.memory_space<vmem>>, %arg5: memref<1x128xf32, #tpu.memory_space<vmem>>, %arg6: memref<3x1024x128xbf16, #tpu.memory_space<any>>, %arg7: memref<3x3x128xf32, #tpu.memory_space<vmem>>, %arg8: memref<128x256xbf16, #tpu.memory_space<any>>, %arg9: memref<1x256xf32, #tpu.memory_space<vmem>>, %arg10: memref<256x2xf32, #tpu.memory_space<vmem>>, %arg11: memref<1x2xf32, #tpu.memory_space<vmem>>, %arg12: memref<16x256xf32, #tpu.memory_space<vmem>>, %arg13: memref<2x2xf32, #tpu.memory_space<vmem>>, %arg14: memref<3x1024x128xbf16, #tpu.memory_space<vmem>>, %arg15: memref<128x256xbf16, #tpu.memory_space<vmem>>, %arg16: memref<4x!tpu.dma_semaphore, #tpu.memory_space<semaphore_mem>>) attributes {dimension_semantics = [#tpu.dimension_semantics<arbitrary>], iteration_bounds = array<i64: 1>, scalar_prefetch = 0 : i64, scratch_operands = 3 : i64, tpu.core_type = #tpu.core_type<tc>, window_params = [{pipeline_mode = #tpu.pipeline_mode<synchronous>, transform_indices = @transform_0, window_bounds = array<i64: 16, 800>}, {pipeline_mode = #tpu.pipeline_mode<synchronous>, transform_indices = @transform_1, window_bounds = array<i64: 16, 2>}, {pipeline_mode = #tpu.pipeline_mode<synchronous>, transform_indices = @transform_2, window_bounds = array<i64: 64, 16>}, {pipeline_mode = #tpu.pipeline_mode<synchronous>, transform_indices = @transform_3, window_bounds = array<i64: 800, 128>}, {pipeline_mode = #tpu.pipeline_mode<synchronous>, transform_indices = @transform_4, window_bounds = array<i64: 1, 128>}, {}, {pipeline_mode = #tpu.pipeline_mode<synchronous>, transform_indices = @transform_6, window_bounds = array<i64: 3, 3, 128>}, {}, {pipeline_mode = #tpu.pipeline_mode<synchronous>, transform_indices = @transform_8, window_bounds = array<i64: 1, 256>}, {pipeline_mode = #tpu.pipeline_mode<synchronous>, transform_indices = @transform_9, window_bounds = array<i64: 256, 2>}, {pipeline_mode = #tpu.pipeline_mode<synchronous>, transform_indices = @transform_10, window_bounds = array<i64: 1, 2>}, {pipeline_mode = #tpu.pipeline_mode<synchronous>, transform_indices = @transform_11, window_bounds = array<i64: 16, 256>}, {pipeline_mode = #tpu.pipeline_mode<synchronous>, transform_indices = @transform_12, window_bounds = array<i64: 2, 2>}]} {
    %c0_i32 = arith.constant 0 : i32
    %c0_i32_0 = arith.constant 0 : i32
    %c0_i32_1 = arith.constant 0 : i32
    %c0_i32_2 = arith.constant 0 : i32
    %c0_i32_3 = arith.constant 0 : i32
    %0 = tpu.memref_slice %arg6[%c0_i32, %c0_i32_2, %c0_i32_3] : memref<3x1024x128xbf16, #tpu.memory_space<any>> -> memref<1x1024x128xbf16, #tpu.memory_space<any>>
    %1 = tpu.memref_squeeze %0 : memref<1x1024x128xbf16, #tpu.memory_space<any>> -> memref<1024x128xbf16, #tpu.memory_space<any>>
    %c0_i32_4 = arith.constant 0 : i32
    %c0_i32_5 = arith.constant 0 : i32
    %2 = tpu.memref_slice %arg14[%c0_i32_0, %c0_i32_4, %c0_i32_5] : memref<3x1024x128xbf16, #tpu.memory_space<vmem>> -> memref<1x1024x128xbf16, #tpu.memory_space<vmem>>
    %3 = tpu.memref_squeeze %2 : memref<1x1024x128xbf16, #tpu.memory_space<vmem>> -> memref<1024x128xbf16, #tpu.memory_space<vmem>>
    %4 = tpu.memref_slice %arg16[%c0_i32_1] : memref<4x!tpu.dma_semaphore, #tpu.memory_space<semaphore_mem>> -> memref<1x!tpu.dma_semaphore, #tpu.memory_space<semaphore_mem>>
    %5 = tpu.memref_squeeze %4 : memref<1x!tpu.dma_semaphore, #tpu.memory_space<semaphore_mem>> -> memref<!tpu.dma_semaphore, #tpu.memory_space<semaphore_mem>>
    tpu.enqueue_dma source(%1 : memref<1024x128xbf16, #tpu.memory_space<any>>) target(%3 : memref<1024x128xbf16, #tpu.memory_space<vmem>>) target_semaphore(%5 : memref<!tpu.dma_semaphore, #tpu.memory_space<semaphore_mem>>)
    %c1_i32 = arith.constant 1 : i32
    %c1_i32_6 = arith.constant 1 : i32
    %c1_i32_7 = arith.constant 1 : i32
    %c0_i32_8 = arith.constant 0 : i32
    %c0_i32_9 = arith.constant 0 : i32
    %6 = tpu.memref_slice %arg6[%c1_i32, %c0_i32_8, %c0_i32_9] : memref<3x1024x128xbf16, #tpu.memory_space<any>> -> memref<1x1024x128xbf16, #tpu.memory_space<any>>
    %7 = tpu.memref_squeeze %6 : memref<1x1024x128xbf16, #tpu.memory_space<any>> -> memref<1024x128xbf16, #tpu.memory_space<any>>
    %c0_i32_10 = arith.constant 0 : i32
    %c0_i32_11 = arith.constant 0 : i32
    %8 = tpu.memref_slice %arg14[%c1_i32_6, %c0_i32_10, %c0_i32_11] : memref<3x1024x128xbf16, #tpu.memory_space<vmem>> -> memref<1x1024x128xbf16, #tpu.memory_space<vmem>>
    %9 = tpu.memref_squeeze %8 : memref<1x1024x128xbf16, #tpu.memory_space<vmem>> -> memref<1024x128xbf16, #tpu.memory_space<vmem>>
    %10 = tpu.memref_slice %arg16[%c1_i32_7] : memref<4x!tpu.dma_semaphore, #tpu.memory_space<semaphore_mem>> -> memref<1x!tpu.dma_semaphore, #tpu.memory_space<semaphore_mem>>
    %11 = tpu.memref_squeeze %10 : memref<1x!tpu.dma_semaphore, #tpu.memory_space<semaphore_mem>> -> memref<!tpu.dma_semaphore, #tpu.memory_space<semaphore_mem>>
    tpu.enqueue_dma source(%7 : memref<1024x128xbf16, #tpu.memory_space<any>>) target(%9 : memref<1024x128xbf16, #tpu.memory_space<vmem>>) target_semaphore(%11 : memref<!tpu.dma_semaphore, #tpu.memory_space<semaphore_mem>>)
    %c2_i32 = arith.constant 2 : i32
    %c2_i32_12 = arith.constant 2 : i32
    %c2_i32_13 = arith.constant 2 : i32
    %c0_i32_14 = arith.constant 0 : i32
    %c0_i32_15 = arith.constant 0 : i32
    %12 = tpu.memref_slice %arg6[%c2_i32, %c0_i32_14, %c0_i32_15] : memref<3x1024x128xbf16, #tpu.memory_space<any>> -> memref<1x1024x128xbf16, #tpu.memory_space<any>>
    %13 = tpu.memref_squeeze %12 : memref<1x1024x128xbf16, #tpu.memory_space<any>> -> memref<1024x128xbf16, #tpu.memory_space<any>>
    %c0_i32_16 = arith.constant 0 : i32
    %c0_i32_17 = arith.constant 0 : i32
    %14 = tpu.memref_slice %arg14[%c2_i32_12, %c0_i32_16, %c0_i32_17] : memref<3x1024x128xbf16, #tpu.memory_space<vmem>> -> memref<1x1024x128xbf16, #tpu.memory_space<vmem>>
    %15 = tpu.memref_squeeze %14 : memref<1x1024x128xbf16, #tpu.memory_space<vmem>> -> memref<1024x128xbf16, #tpu.memory_space<vmem>>
    %16 = tpu.memref_slice %arg16[%c2_i32_13] : memref<4x!tpu.dma_semaphore, #tpu.memory_space<semaphore_mem>> -> memref<1x!tpu.dma_semaphore, #tpu.memory_space<semaphore_mem>>
    %17 = tpu.memref_squeeze %16 : memref<1x!tpu.dma_semaphore, #tpu.memory_space<semaphore_mem>> -> memref<!tpu.dma_semaphore, #tpu.memory_space<semaphore_mem>>
    tpu.enqueue_dma source(%13 : memref<1024x128xbf16, #tpu.memory_space<any>>) target(%15 : memref<1024x128xbf16, #tpu.memory_space<vmem>>) target_semaphore(%17 : memref<!tpu.dma_semaphore, #tpu.memory_space<semaphore_mem>>)
    %c3_i32 = arith.constant 3 : i32
    %18 = tpu.memref_slice %arg16[%c3_i32] : memref<4x!tpu.dma_semaphore, #tpu.memory_space<semaphore_mem>> -> memref<1x!tpu.dma_semaphore, #tpu.memory_space<semaphore_mem>>
    %19 = tpu.memref_squeeze %18 : memref<1x!tpu.dma_semaphore, #tpu.memory_space<semaphore_mem>> -> memref<!tpu.dma_semaphore, #tpu.memory_space<semaphore_mem>>
    tpu.enqueue_dma source(%arg8 : memref<128x256xbf16, #tpu.memory_space<any>>) target(%arg15 : memref<128x256xbf16, #tpu.memory_space<vmem>>) target_semaphore(%19 : memref<!tpu.dma_semaphore, #tpu.memory_space<semaphore_mem>>)
    %c0 = arith.constant 0 : index
    %c0_18 = arith.constant 0 : index
    %20 = vector.load %arg1[%c0, %c0_18] : memref<16x800xbf16, #tpu.memory_space<vmem>>, vector<16x800xbf16>
    %c0_19 = arith.constant 0 : index
    %c0_20 = arith.constant 0 : index
    %21 = vector.load %arg4[%c0_19, %c0_20] : memref<800x128xbf16, #tpu.memory_space<vmem>>, vector<800x128xbf16>
    %cst = arith.constant dense<0.000000e+00> : vector<16x128xf32>
    %22 = tpu.matmul %20, %21, %cst {dimension_numbers = #tpu.dot_dimension_numbers<[1], [0], [0], [1], [0, 0, 1, 1], [], []>} : vector<16x800xbf16>, vector<800x128xbf16>, vector<16x128xf32> -> vector<16x128xf32>
    %c0_21 = arith.constant 0 : index
    %c0_22 = arith.constant 0 : index
    %23 = vector.load %arg5[%c0_21, %c0_22] : memref<1x128xf32, #tpu.memory_space<vmem>>, vector<1x128xf32>
    %24 = vector.broadcast %23 : vector<1x128xf32> to vector<16x128xf32>
    %25 = arith.addf %22, %24 : vector<16x128xf32>
    %cst_23 = arith.constant 0.000000e+00 : f32
    %26 = vector.broadcast %cst_23 : f32 to vector<16x128xf32>
    %27 = arith.maximumf %25, %26 : vector<16x128xf32>
    %c0_24 = arith.constant 0 : index
    %c0_25 = arith.constant 0 : index
    %28 = vector.load %arg2[%c0_24, %c0_25] : memref<16x2xf32, #tpu.memory_space<vmem>>, vector<16x1xf32>
    %c0_26 = arith.constant 0 : index
    %c1 = arith.constant 1 : index
    %29 = vector.load %arg2[%c0_26, %c1] : memref<16x2xf32, #tpu.memory_space<vmem>>, vector<16x1xf32>
    %c0_27 = arith.constant 0 : index
    %c0_28 = arith.constant 0 : index
    %30 = vector.load %arg3[%c0_27, %c0_28] : memref<64x16xbf16, #tpu.memory_space<vmem>>, vector<64x16xbf16>
    %cst_29 = arith.constant 0.000000e+00 : f32
    %31 = vector.broadcast %cst_29 : f32 to vector<1x128xf32>
    %c0_i32_30 = arith.constant 0 : i32
    %c0_i32_31 = arith.constant 0 : i32
    %c0_i32_32 = arith.constant 0 : i32
    %c0_i32_33 = arith.constant 0 : i32
    %c0_i32_34 = arith.constant 0 : i32
    %32 = tpu.memref_slice %arg6[%c0_i32_30, %c0_i32_33, %c0_i32_34] : memref<3x1024x128xbf16, #tpu.memory_space<any>> -> memref<1x1024x128xbf16, #tpu.memory_space<any>>
    %33 = tpu.memref_squeeze %32 : memref<1x1024x128xbf16, #tpu.memory_space<any>> -> memref<1024x128xbf16, #tpu.memory_space<any>>
    %c0_i32_35 = arith.constant 0 : i32
    %c0_i32_36 = arith.constant 0 : i32
    %34 = tpu.memref_slice %arg14[%c0_i32_31, %c0_i32_35, %c0_i32_36] : memref<3x1024x128xbf16, #tpu.memory_space<vmem>> -> memref<1x1024x128xbf16, #tpu.memory_space<vmem>>
    %35 = tpu.memref_squeeze %34 : memref<1x1024x128xbf16, #tpu.memory_space<vmem>> -> memref<1024x128xbf16, #tpu.memory_space<vmem>>
    %36 = tpu.memref_slice %arg16[%c0_i32_32] : memref<4x!tpu.dma_semaphore, #tpu.memory_space<semaphore_mem>> -> memref<1x!tpu.dma_semaphore, #tpu.memory_space<semaphore_mem>>
    %37 = tpu.memref_squeeze %36 : memref<1x!tpu.dma_semaphore, #tpu.memory_space<semaphore_mem>> -> memref<!tpu.dma_semaphore, #tpu.memory_space<semaphore_mem>>
    tpu.wait_dma2 semaphore(%37 : memref<!tpu.dma_semaphore, #tpu.memory_space<semaphore_mem>>) src(%33 : memref<1024x128xbf16, #tpu.memory_space<any>>) dst(%35 : memref<1024x128xbf16, #tpu.memory_space<vmem>>)
    %c0_37 = arith.constant 0 : index
    %c0_38 = arith.constant 0 : index
    %c0_39 = arith.constant 0 : index
    %38 = vector.load %arg7[%c0_37, %c0_38, %c0_39] : memref<3x3x128xf32, #tpu.memory_space<vmem>>, vector<1x3x128xf32>
    %39 = vector.shape_cast %38 : vector<1x3x128xf32> to vector<3x128xf32>
    %40 = vector.extract_strided_slice %27 {offsets = [0, 0], sizes = [15, 128], strides = [1, 1]} : vector<16x128xf32> to vector<15x128xf32>
    %41 = tpu.concatenate %31, %40 in 0 : vector<1x128xf32>, vector<15x128xf32> -> vector<16x128xf32>
    %42 = vector.broadcast %28 : vector<16x1xf32> to vector<16x128xf32>
    %43 = arith.mulf %41, %42 : vector<16x128xf32>
    %44 = vector.extract_strided_slice %27 {offsets = [1, 0], sizes = [15, 128], strides = [1, 1]} : vector<16x128xf32> to vector<15x128xf32>
    %45 = tpu.concatenate %44, %31 in 0 : vector<15x128xf32>, vector<1x128xf32> -> vector<16x128xf32>
    %46 = vector.broadcast %29 : vector<16x1xf32> to vector<16x128xf32>
    %47 = arith.mulf %45, %46 : vector<16x128xf32>
    %48 = arith.truncf %43 : vector<16x128xf32> to vector<16x128xbf16>
    %c0_40 = arith.constant 0 : index
    %c0_41 = arith.constant 0 : index
    %c0_42 = arith.constant 0 : index
    %49 = vector.load %arg14[%c0_40, %c0_41, %c0_42] : memref<3x1024x128xbf16, #tpu.memory_space<vmem>>, vector<1x128x128xbf16>
    %50 = vector.shape_cast %49 : vector<1x128x128xbf16> to vector<128x128xbf16>
    %cst_43 = arith.constant dense<0.000000e+00> : vector<16x128xf32>
    %51 = tpu.matmul %48, %50, %cst_43 {dimension_numbers = #tpu.dot_dimension_numbers<[1], [0], [0], [1], [0, 0, 1, 1], [], []>} : vector<16x128xbf16>, vector<128x128xbf16>, vector<16x128xf32> -> vector<16x128xf32>
    %52 = arith.truncf %27 : vector<16x128xf32> to vector<16x128xbf16>
    %c0_44 = arith.constant 0 : index
    %c128 = arith.constant 128 : index
    %c0_45 = arith.constant 0 : index
    %53 = vector.load %arg14[%c0_44, %c128, %c0_45] : memref<3x1024x128xbf16, #tpu.memory_space<vmem>>, vector<1x128x128xbf16>
    %54 = vector.shape_cast %53 : vector<1x128x128xbf16> to vector<128x128xbf16>
    %cst_46 = arith.constant dense<0.000000e+00> : vector<16x128xf32>
    %55 = tpu.matmul %52, %54, %cst_46 {dimension_numbers = #tpu.dot_dimension_numbers<[1], [0], [0], [1], [0, 0, 1, 1], [], []>} : vector<16x128xbf16>, vector<128x128xbf16>, vector<16x128xf32> -> vector<16x128xf32>
    %56 = arith.addf %51, %55 : vector<16x128xf32>
    %57 = arith.truncf %47 : vector<16x128xf32> to vector<16x128xbf16>
    %c0_47 = arith.constant 0 : index
    %c256 = arith.constant 256 : index
    %c0_48 = arith.constant 0 : index
    %58 = vector.load %arg14[%c0_47, %c256, %c0_48] : memref<3x1024x128xbf16, #tpu.memory_space<vmem>>, vector<1x128x128xbf16>
    %59 = vector.shape_cast %58 : vector<1x128x128xbf16> to vector<128x128xbf16>
    %cst_49 = arith.constant dense<0.000000e+00> : vector<16x128xf32>
    %60 = tpu.matmul %57, %59, %cst_49 {dimension_numbers = #tpu.dot_dimension_numbers<[1], [0], [0], [1], [0, 0, 1, 1], [], []>} : vector<16x128xbf16>, vector<128x128xbf16>, vector<16x128xf32> -> vector<16x128xf32>
    %61 = arith.addf %56, %60 : vector<16x128xf32>
    %62 = vector.extract_strided_slice %39 {offsets = [0, 0], sizes = [1, 128], strides = [1, 1]} : vector<3x128xf32> to vector<1x128xf32>
    %63 = vector.broadcast %62 : vector<1x128xf32> to vector<16x128xf32>
    %64 = arith.addf %61, %63 : vector<16x128xf32>
    %cst_50 = arith.constant 0.000000e+00 : f32
    %65 = vector.broadcast %cst_50 : f32 to vector<16x128xf32>
    %66 = arith.maximumf %64, %65 : vector<16x128xf32>
    %67 = arith.truncf %66 : vector<16x128xf32> to vector<16x128xbf16>
    %c0_51 = arith.constant 0 : index
    %c384 = arith.constant 384 : index
    %c0_52 = arith.constant 0 : index
    %68 = vector.load %arg14[%c0_51, %c384, %c0_52] : memref<3x1024x128xbf16, #tpu.memory_space<vmem>>, vector<1x128x128xbf16>
    %69 = vector.shape_cast %68 : vector<1x128x128xbf16> to vector<128x128xbf16>
    %cst_53 = arith.constant dense<0.000000e+00> : vector<16x128xf32>
    %70 = tpu.matmul %67, %69, %cst_53 {dimension_numbers = #tpu.dot_dimension_numbers<[1], [0], [0], [1], [0, 0, 1, 1], [], []>} : vector<16x128xbf16>, vector<128x128xbf16>, vector<16x128xf32> -> vector<16x128xf32>
    %71 = vector.extract_strided_slice %39 {offsets = [1, 0], sizes = [1, 128], strides = [1, 1]} : vector<3x128xf32> to vector<1x128xf32>
    %72 = vector.broadcast %71 : vector<1x128xf32> to vector<16x128xf32>
    %73 = arith.addf %70, %72 : vector<16x128xf32>
    %74 = arith.truncf %73 : vector<16x128xf32> to vector<16x128xbf16>
    %cst_54 = arith.constant dense<0.000000e+00> : vector<64x128xf32>
    %75 = tpu.matmul %30, %74, %cst_54 {dimension_numbers = #tpu.dot_dimension_numbers<[1], [0], [0], [1], [0, 0, 1, 1], [], []>} : vector<64x16xbf16>, vector<16x128xbf16>, vector<64x128xf32> -> vector<64x128xf32>
    %76 = arith.truncf %75 : vector<64x128xf32> to vector<64x128xbf16>
    %77 = vector.extract_strided_slice %76 {offsets = [0, 0], sizes = [16, 128], strides = [1, 1]} : vector<64x128xbf16> to vector<16x128xbf16>
    %78 = vector.extract_strided_slice %76 {offsets = [16, 0], sizes = [16, 128], strides = [1, 1]} : vector<64x128xbf16> to vector<16x128xbf16>
    %79 = vector.extract_strided_slice %76 {offsets = [32, 0], sizes = [16, 128], strides = [1, 1]} : vector<64x128xbf16> to vector<16x128xbf16>
    %80 = vector.extract_strided_slice %76 {offsets = [48, 0], sizes = [16, 128], strides = [1, 1]} : vector<64x128xbf16> to vector<16x128xbf16>
    %81 = tpu.concatenate %77, %78, %79, %80 in 1 : vector<16x128xbf16>, vector<16x128xbf16>, vector<16x128xbf16>, vector<16x128xbf16> -> vector<16x512xbf16>
    %c0_55 = arith.constant 0 : index
    %c512 = arith.constant 512 : index
    %c0_56 = arith.constant 0 : index
    %82 = vector.load %arg14[%c0_55, %c512, %c0_56] : memref<3x1024x128xbf16, #tpu.memory_space<vmem>>, vector<1x512x128xbf16>
    %83 = vector.shape_cast %82 : vector<1x512x128xbf16> to vector<512x128xbf16>
    %cst_57 = arith.constant dense<0.000000e+00> : vector<16x128xf32>
    %84 = tpu.matmul %81, %83, %cst_57 {dimension_numbers = #tpu.dot_dimension_numbers<[1], [0], [0], [1], [0, 0, 1, 1], [], []>} : vector<16x512xbf16>, vector<512x128xbf16>, vector<16x128xf32> -> vector<16x128xf32>
    %85 = vector.extract_strided_slice %39 {offsets = [2, 0], sizes = [1, 128], strides = [1, 1]} : vector<3x128xf32> to vector<1x128xf32>
    %86 = vector.broadcast %85 : vector<1x128xf32> to vector<16x128xf32>
    %87 = arith.addf %84, %86 : vector<16x128xf32>
    %88 = arith.addf %27, %87 : vector<16x128xf32>
    %cst_58 = arith.constant 0.000000e+00 : f32
    %89 = vector.broadcast %cst_58 : f32 to vector<16x128xf32>
    %90 = arith.maximumf %88, %89 : vector<16x128xf32>
    %c1_i32_59 = arith.constant 1 : i32
    %c1_i32_60 = arith.constant 1 : i32
    %c1_i32_61 = arith.constant 1 : i32
    %c0_i32_62 = arith.constant 0 : i32
    %c0_i32_63 = arith.constant 0 : i32
    %91 = tpu.memref_slice %arg6[%c1_i32_59, %c0_i32_62, %c0_i32_63] : memref<3x1024x128xbf16, #tpu.memory_space<any>> -> memref<1x1024x128xbf16, #tpu.memory_space<any>>
    %92 = tpu.memref_squeeze %91 : memref<1x1024x128xbf16, #tpu.memory_space<any>> -> memref<1024x128xbf16, #tpu.memory_space<any>>
    %c0_i32_64 = arith.constant 0 : i32
    %c0_i32_65 = arith.constant 0 : i32
    %93 = tpu.memref_slice %arg14[%c1_i32_60, %c0_i32_64, %c0_i32_65] : memref<3x1024x128xbf16, #tpu.memory_space<vmem>> -> memref<1x1024x128xbf16, #tpu.memory_space<vmem>>
    %94 = tpu.memref_squeeze %93 : memref<1x1024x128xbf16, #tpu.memory_space<vmem>> -> memref<1024x128xbf16, #tpu.memory_space<vmem>>
    %95 = tpu.memref_slice %arg16[%c1_i32_61] : memref<4x!tpu.dma_semaphore, #tpu.memory_space<semaphore_mem>> -> memref<1x!tpu.dma_semaphore, #tpu.memory_space<semaphore_mem>>
    %96 = tpu.memref_squeeze %95 : memref<1x!tpu.dma_semaphore, #tpu.memory_space<semaphore_mem>> -> memref<!tpu.dma_semaphore, #tpu.memory_space<semaphore_mem>>
    tpu.wait_dma2 semaphore(%96 : memref<!tpu.dma_semaphore, #tpu.memory_space<semaphore_mem>>) src(%92 : memref<1024x128xbf16, #tpu.memory_space<any>>) dst(%94 : memref<1024x128xbf16, #tpu.memory_space<vmem>>)
    %c1_66 = arith.constant 1 : index
    %c0_67 = arith.constant 0 : index
    %c0_68 = arith.constant 0 : index
    %97 = vector.load %arg7[%c1_66, %c0_67, %c0_68] : memref<3x3x128xf32, #tpu.memory_space<vmem>>, vector<1x3x128xf32>
    %98 = vector.shape_cast %97 : vector<1x3x128xf32> to vector<3x128xf32>
    %99 = vector.extract_strided_slice %90 {offsets = [0, 0], sizes = [15, 128], strides = [1, 1]} : vector<16x128xf32> to vector<15x128xf32>
    %100 = tpu.concatenate %31, %99 in 0 : vector<1x128xf32>, vector<15x128xf32> -> vector<16x128xf32>
    %101 = vector.broadcast %28 : vector<16x1xf32> to vector<16x128xf32>
    %102 = arith.mulf %100, %101 : vector<16x128xf32>
    %103 = vector.extract_strided_slice %90 {offsets = [1, 0], sizes = [15, 128], strides = [1, 1]} : vector<16x128xf32> to vector<15x128xf32>
    %104 = tpu.concatenate %103, %31 in 0 : vector<15x128xf32>, vector<1x128xf32> -> vector<16x128xf32>
    %105 = vector.broadcast %29 : vector<16x1xf32> to vector<16x128xf32>
    %106 = arith.mulf %104, %105 : vector<16x128xf32>
    %107 = arith.truncf %102 : vector<16x128xf32> to vector<16x128xbf16>
    %c1_69 = arith.constant 1 : index
    %c0_70 = arith.constant 0 : index
    %c0_71 = arith.constant 0 : index
    %108 = vector.load %arg14[%c1_69, %c0_70, %c0_71] : memref<3x1024x128xbf16, #tpu.memory_space<vmem>>, vector<1x128x128xbf16>
    %109 = vector.shape_cast %108 : vector<1x128x128xbf16> to vector<128x128xbf16>
    %cst_72 = arith.constant dense<0.000000e+00> : vector<16x128xf32>
    %110 = tpu.matmul %107, %109, %cst_72 {dimension_numbers = #tpu.dot_dimension_numbers<[1], [0], [0], [1], [0, 0, 1, 1], [], []>} : vector<16x128xbf16>, vector<128x128xbf16>, vector<16x128xf32> -> vector<16x128xf32>
    %111 = arith.truncf %90 : vector<16x128xf32> to vector<16x128xbf16>
    %c1_73 = arith.constant 1 : index
    %c128_74 = arith.constant 128 : index
    %c0_75 = arith.constant 0 : index
    %112 = vector.load %arg14[%c1_73, %c128_74, %c0_75] : memref<3x1024x128xbf16, #tpu.memory_space<vmem>>, vector<1x128x128xbf16>
    %113 = vector.shape_cast %112 : vector<1x128x128xbf16> to vector<128x128xbf16>
    %cst_76 = arith.constant dense<0.000000e+00> : vector<16x128xf32>
    %114 = tpu.matmul %111, %113, %cst_76 {dimension_numbers = #tpu.dot_dimension_numbers<[1], [0], [0], [1], [0, 0, 1, 1], [], []>} : vector<16x128xbf16>, vector<128x128xbf16>, vector<16x128xf32> -> vector<16x128xf32>
    %115 = arith.addf %110, %114 : vector<16x128xf32>
    %116 = arith.truncf %106 : vector<16x128xf32> to vector<16x128xbf16>
    %c1_77 = arith.constant 1 : index
    %c256_78 = arith.constant 256 : index
    %c0_79 = arith.constant 0 : index
    %117 = vector.load %arg14[%c1_77, %c256_78, %c0_79] : memref<3x1024x128xbf16, #tpu.memory_space<vmem>>, vector<1x128x128xbf16>
    %118 = vector.shape_cast %117 : vector<1x128x128xbf16> to vector<128x128xbf16>
    %cst_80 = arith.constant dense<0.000000e+00> : vector<16x128xf32>
    %119 = tpu.matmul %116, %118, %cst_80 {dimension_numbers = #tpu.dot_dimension_numbers<[1], [0], [0], [1], [0, 0, 1, 1], [], []>} : vector<16x128xbf16>, vector<128x128xbf16>, vector<16x128xf32> -> vector<16x128xf32>
    %120 = arith.addf %115, %119 : vector<16x128xf32>
    %121 = vector.extract_strided_slice %98 {offsets = [0, 0], sizes = [1, 128], strides = [1, 1]} : vector<3x128xf32> to vector<1x128xf32>
    %122 = vector.broadcast %121 : vector<1x128xf32> to vector<16x128xf32>
    %123 = arith.addf %120, %122 : vector<16x128xf32>
    %cst_81 = arith.constant 0.000000e+00 : f32
    %124 = vector.broadcast %cst_81 : f32 to vector<16x128xf32>
    %125 = arith.maximumf %123, %124 : vector<16x128xf32>
    %126 = arith.truncf %125 : vector<16x128xf32> to vector<16x128xbf16>
    %c1_82 = arith.constant 1 : index
    %c384_83 = arith.constant 384 : index
    %c0_84 = arith.constant 0 : index
    %127 = vector.load %arg14[%c1_82, %c384_83, %c0_84] : memref<3x1024x128xbf16, #tpu.memory_space<vmem>>, vector<1x128x128xbf16>
    %128 = vector.shape_cast %127 : vector<1x128x128xbf16> to vector<128x128xbf16>
    %cst_85 = arith.constant dense<0.000000e+00> : vector<16x128xf32>
    %129 = tpu.matmul %126, %128, %cst_85 {dimension_numbers = #tpu.dot_dimension_numbers<[1], [0], [0], [1], [0, 0, 1, 1], [], []>} : vector<16x128xbf16>, vector<128x128xbf16>, vector<16x128xf32> -> vector<16x128xf32>
    %130 = vector.extract_strided_slice %98 {offsets = [1, 0], sizes = [1, 128], strides = [1, 1]} : vector<3x128xf32> to vector<1x128xf32>
    %131 = vector.broadcast %130 : vector<1x128xf32> to vector<16x128xf32>
    %132 = arith.addf %129, %131 : vector<16x128xf32>
    %133 = arith.truncf %132 : vector<16x128xf32> to vector<16x128xbf16>
    %cst_86 = arith.constant dense<0.000000e+00> : vector<64x128xf32>
    %134 = tpu.matmul %30, %133, %cst_86 {dimension_numbers = #tpu.dot_dimension_numbers<[1], [0], [0], [1], [0, 0, 1, 1], [], []>} : vector<64x16xbf16>, vector<16x128xbf16>, vector<64x128xf32> -> vector<64x128xf32>
    %135 = arith.truncf %134 : vector<64x128xf32> to vector<64x128xbf16>
    %136 = vector.extract_strided_slice %135 {offsets = [0, 0], sizes = [16, 128], strides = [1, 1]} : vector<64x128xbf16> to vector<16x128xbf16>
    %137 = vector.extract_strided_slice %135 {offsets = [16, 0], sizes = [16, 128], strides = [1, 1]} : vector<64x128xbf16> to vector<16x128xbf16>
    %138 = vector.extract_strided_slice %135 {offsets = [32, 0], sizes = [16, 128], strides = [1, 1]} : vector<64x128xbf16> to vector<16x128xbf16>
    %139 = vector.extract_strided_slice %135 {offsets = [48, 0], sizes = [16, 128], strides = [1, 1]} : vector<64x128xbf16> to vector<16x128xbf16>
    %140 = tpu.concatenate %136, %137, %138, %139 in 1 : vector<16x128xbf16>, vector<16x128xbf16>, vector<16x128xbf16>, vector<16x128xbf16> -> vector<16x512xbf16>
    %c1_87 = arith.constant 1 : index
    %c512_88 = arith.constant 512 : index
    %c0_89 = arith.constant 0 : index
    %141 = vector.load %arg14[%c1_87, %c512_88, %c0_89] : memref<3x1024x128xbf16, #tpu.memory_space<vmem>>, vector<1x512x128xbf16>
    %142 = vector.shape_cast %141 : vector<1x512x128xbf16> to vector<512x128xbf16>
    %cst_90 = arith.constant dense<0.000000e+00> : vector<16x128xf32>
    %143 = tpu.matmul %140, %142, %cst_90 {dimension_numbers = #tpu.dot_dimension_numbers<[1], [0], [0], [1], [0, 0, 1, 1], [], []>} : vector<16x512xbf16>, vector<512x128xbf16>, vector<16x128xf32> -> vector<16x128xf32>
    %144 = vector.extract_strided_slice %98 {offsets = [2, 0], sizes = [1, 128], strides = [1, 1]} : vector<3x128xf32> to vector<1x128xf32>
    %145 = vector.broadcast %144 : vector<1x128xf32> to vector<16x128xf32>
    %146 = arith.addf %143, %145 : vector<16x128xf32>
    %147 = arith.addf %90, %146 : vector<16x128xf32>
    %cst_91 = arith.constant 0.000000e+00 : f32
    %148 = vector.broadcast %cst_91 : f32 to vector<16x128xf32>
    %149 = arith.maximumf %147, %148 : vector<16x128xf32>
    %c2_i32_92 = arith.constant 2 : i32
    %c2_i32_93 = arith.constant 2 : i32
    %c2_i32_94 = arith.constant 2 : i32
    %c0_i32_95 = arith.constant 0 : i32
    %c0_i32_96 = arith.constant 0 : i32
    %150 = tpu.memref_slice %arg6[%c2_i32_92, %c0_i32_95, %c0_i32_96] : memref<3x1024x128xbf16, #tpu.memory_space<any>> -> memref<1x1024x128xbf16, #tpu.memory_space<any>>
    %151 = tpu.memref_squeeze %150 : memref<1x1024x128xbf16, #tpu.memory_space<any>> -> memref<1024x128xbf16, #tpu.memory_space<any>>
    %c0_i32_97 = arith.constant 0 : i32
    %c0_i32_98 = arith.constant 0 : i32
    %152 = tpu.memref_slice %arg14[%c2_i32_93, %c0_i32_97, %c0_i32_98] : memref<3x1024x128xbf16, #tpu.memory_space<vmem>> -> memref<1x1024x128xbf16, #tpu.memory_space<vmem>>
    %153 = tpu.memref_squeeze %152 : memref<1x1024x128xbf16, #tpu.memory_space<vmem>> -> memref<1024x128xbf16, #tpu.memory_space<vmem>>
    %154 = tpu.memref_slice %arg16[%c2_i32_94] : memref<4x!tpu.dma_semaphore, #tpu.memory_space<semaphore_mem>> -> memref<1x!tpu.dma_semaphore, #tpu.memory_space<semaphore_mem>>
    %155 = tpu.memref_squeeze %154 : memref<1x!tpu.dma_semaphore, #tpu.memory_space<semaphore_mem>> -> memref<!tpu.dma_semaphore, #tpu.memory_space<semaphore_mem>>
    tpu.wait_dma2 semaphore(%155 : memref<!tpu.dma_semaphore, #tpu.memory_space<semaphore_mem>>) src(%151 : memref<1024x128xbf16, #tpu.memory_space<any>>) dst(%153 : memref<1024x128xbf16, #tpu.memory_space<vmem>>)
    %c2 = arith.constant 2 : index
    %c0_99 = arith.constant 0 : index
    %c0_100 = arith.constant 0 : index
    %156 = vector.load %arg7[%c2, %c0_99, %c0_100] : memref<3x3x128xf32, #tpu.memory_space<vmem>>, vector<1x3x128xf32>
    %157 = vector.shape_cast %156 : vector<1x3x128xf32> to vector<3x128xf32>
    %158 = vector.extract_strided_slice %149 {offsets = [0, 0], sizes = [15, 128], strides = [1, 1]} : vector<16x128xf32> to vector<15x128xf32>
    %159 = tpu.concatenate %31, %158 in 0 : vector<1x128xf32>, vector<15x128xf32> -> vector<16x128xf32>
    %160 = vector.broadcast %28 : vector<16x1xf32> to vector<16x128xf32>
    %161 = arith.mulf %159, %160 : vector<16x128xf32>
    %162 = vector.extract_strided_slice %149 {offsets = [1, 0], sizes = [15, 128], strides = [1, 1]} : vector<16x128xf32> to vector<15x128xf32>
    %163 = tpu.concatenate %162, %31 in 0 : vector<15x128xf32>, vector<1x128xf32> -> vector<16x128xf32>
    %164 = vector.broadcast %29 : vector<16x1xf32> to vector<16x128xf32>
    %165 = arith.mulf %163, %164 : vector<16x128xf32>
    %166 = arith.truncf %161 : vector<16x128xf32> to vector<16x128xbf16>
    %c2_101 = arith.constant 2 : index
    %c0_102 = arith.constant 0 : index
    %c0_103 = arith.constant 0 : index
    %167 = vector.load %arg14[%c2_101, %c0_102, %c0_103] : memref<3x1024x128xbf16, #tpu.memory_space<vmem>>, vector<1x128x128xbf16>
    %168 = vector.shape_cast %167 : vector<1x128x128xbf16> to vector<128x128xbf16>
    %cst_104 = arith.constant dense<0.000000e+00> : vector<16x128xf32>
    %169 = tpu.matmul %166, %168, %cst_104 {dimension_numbers = #tpu.dot_dimension_numbers<[1], [0], [0], [1], [0, 0, 1, 1], [], []>} : vector<16x128xbf16>, vector<128x128xbf16>, vector<16x128xf32> -> vector<16x128xf32>
    %170 = arith.truncf %149 : vector<16x128xf32> to vector<16x128xbf16>
    %c2_105 = arith.constant 2 : index
    %c128_106 = arith.constant 128 : index
    %c0_107 = arith.constant 0 : index
    %171 = vector.load %arg14[%c2_105, %c128_106, %c0_107] : memref<3x1024x128xbf16, #tpu.memory_space<vmem>>, vector<1x128x128xbf16>
    %172 = vector.shape_cast %171 : vector<1x128x128xbf16> to vector<128x128xbf16>
    %cst_108 = arith.constant dense<0.000000e+00> : vector<16x128xf32>
    %173 = tpu.matmul %170, %172, %cst_108 {dimension_numbers = #tpu.dot_dimension_numbers<[1], [0], [0], [1], [0, 0, 1, 1], [], []>} : vector<16x128xbf16>, vector<128x128xbf16>, vector<16x128xf32> -> vector<16x128xf32>
    %174 = arith.addf %169, %173 : vector<16x128xf32>
    %175 = arith.truncf %165 : vector<16x128xf32> to vector<16x128xbf16>
    %c2_109 = arith.constant 2 : index
    %c256_110 = arith.constant 256 : index
    %c0_111 = arith.constant 0 : index
    %176 = vector.load %arg14[%c2_109, %c256_110, %c0_111] : memref<3x1024x128xbf16, #tpu.memory_space<vmem>>, vector<1x128x128xbf16>
    %177 = vector.shape_cast %176 : vector<1x128x128xbf16> to vector<128x128xbf16>
    %cst_112 = arith.constant dense<0.000000e+00> : vector<16x128xf32>
    %178 = tpu.matmul %175, %177, %cst_112 {dimension_numbers = #tpu.dot_dimension_numbers<[1], [0], [0], [1], [0, 0, 1, 1], [], []>} : vector<16x128xbf16>, vector<128x128xbf16>, vector<16x128xf32> -> vector<16x128xf32>
    %179 = arith.addf %174, %178 : vector<16x128xf32>
    %180 = vector.extract_strided_slice %157 {offsets = [0, 0], sizes = [1, 128], strides = [1, 1]} : vector<3x128xf32> to vector<1x128xf32>
    %181 = vector.broadcast %180 : vector<1x128xf32> to vector<16x128xf32>
    %182 = arith.addf %179, %181 : vector<16x128xf32>
    %cst_113 = arith.constant 0.000000e+00 : f32
    %183 = vector.broadcast %cst_113 : f32 to vector<16x128xf32>
    %184 = arith.maximumf %182, %183 : vector<16x128xf32>
    %185 = arith.truncf %184 : vector<16x128xf32> to vector<16x128xbf16>
    %c2_114 = arith.constant 2 : index
    %c384_115 = arith.constant 384 : index
    %c0_116 = arith.constant 0 : index
    %186 = vector.load %arg14[%c2_114, %c384_115, %c0_116] : memref<3x1024x128xbf16, #tpu.memory_space<vmem>>, vector<1x128x128xbf16>
    %187 = vector.shape_cast %186 : vector<1x128x128xbf16> to vector<128x128xbf16>
    %cst_117 = arith.constant dense<0.000000e+00> : vector<16x128xf32>
    %188 = tpu.matmul %185, %187, %cst_117 {dimension_numbers = #tpu.dot_dimension_numbers<[1], [0], [0], [1], [0, 0, 1, 1], [], []>} : vector<16x128xbf16>, vector<128x128xbf16>, vector<16x128xf32> -> vector<16x128xf32>
    %189 = vector.extract_strided_slice %157 {offsets = [1, 0], sizes = [1, 128], strides = [1, 1]} : vector<3x128xf32> to vector<1x128xf32>
    %190 = vector.broadcast %189 : vector<1x128xf32> to vector<16x128xf32>
    %191 = arith.addf %188, %190 : vector<16x128xf32>
    %192 = arith.truncf %191 : vector<16x128xf32> to vector<16x128xbf16>
    %cst_118 = arith.constant dense<0.000000e+00> : vector<64x128xf32>
    %193 = tpu.matmul %30, %192, %cst_118 {dimension_numbers = #tpu.dot_dimension_numbers<[1], [0], [0], [1], [0, 0, 1, 1], [], []>} : vector<64x16xbf16>, vector<16x128xbf16>, vector<64x128xf32> -> vector<64x128xf32>
    %194 = arith.truncf %193 : vector<64x128xf32> to vector<64x128xbf16>
    %195 = vector.extract_strided_slice %194 {offsets = [0, 0], sizes = [16, 128], strides = [1, 1]} : vector<64x128xbf16> to vector<16x128xbf16>
    %196 = vector.extract_strided_slice %194 {offsets = [16, 0], sizes = [16, 128], strides = [1, 1]} : vector<64x128xbf16> to vector<16x128xbf16>
    %197 = vector.extract_strided_slice %194 {offsets = [32, 0], sizes = [16, 128], strides = [1, 1]} : vector<64x128xbf16> to vector<16x128xbf16>
    %198 = vector.extract_strided_slice %194 {offsets = [48, 0], sizes = [16, 128], strides = [1, 1]} : vector<64x128xbf16> to vector<16x128xbf16>
    %199 = tpu.concatenate %195, %196, %197, %198 in 1 : vector<16x128xbf16>, vector<16x128xbf16>, vector<16x128xbf16>, vector<16x128xbf16> -> vector<16x512xbf16>
    %c2_119 = arith.constant 2 : index
    %c512_120 = arith.constant 512 : index
    %c0_121 = arith.constant 0 : index
    %200 = vector.load %arg14[%c2_119, %c512_120, %c0_121] : memref<3x1024x128xbf16, #tpu.memory_space<vmem>>, vector<1x512x128xbf16>
    %201 = vector.shape_cast %200 : vector<1x512x128xbf16> to vector<512x128xbf16>
    %cst_122 = arith.constant dense<0.000000e+00> : vector<16x128xf32>
    %202 = tpu.matmul %199, %201, %cst_122 {dimension_numbers = #tpu.dot_dimension_numbers<[1], [0], [0], [1], [0, 0, 1, 1], [], []>} : vector<16x512xbf16>, vector<512x128xbf16>, vector<16x128xf32> -> vector<16x128xf32>
    %203 = vector.extract_strided_slice %157 {offsets = [2, 0], sizes = [1, 128], strides = [1, 1]} : vector<3x128xf32> to vector<1x128xf32>
    %204 = vector.broadcast %203 : vector<1x128xf32> to vector<16x128xf32>
    %205 = arith.addf %202, %204 : vector<16x128xf32>
    %206 = arith.addf %149, %205 : vector<16x128xf32>
    %cst_123 = arith.constant 0.000000e+00 : f32
    %207 = vector.broadcast %cst_123 : f32 to vector<16x128xf32>
    %208 = arith.maximumf %206, %207 : vector<16x128xf32>
    %c3_i32_124 = arith.constant 3 : i32
    %209 = tpu.memref_slice %arg16[%c3_i32_124] : memref<4x!tpu.dma_semaphore, #tpu.memory_space<semaphore_mem>> -> memref<1x!tpu.dma_semaphore, #tpu.memory_space<semaphore_mem>>
    %210 = tpu.memref_squeeze %209 : memref<1x!tpu.dma_semaphore, #tpu.memory_space<semaphore_mem>> -> memref<!tpu.dma_semaphore, #tpu.memory_space<semaphore_mem>>
    tpu.wait_dma2 semaphore(%210 : memref<!tpu.dma_semaphore, #tpu.memory_space<semaphore_mem>>) src(%arg8 : memref<128x256xbf16, #tpu.memory_space<any>>) dst(%arg15 : memref<128x256xbf16, #tpu.memory_space<vmem>>)
    %211 = arith.truncf %208 : vector<16x128xf32> to vector<16x128xbf16>
    %c0_125 = arith.constant 0 : index
    %c0_126 = arith.constant 0 : index
    %212 = vector.load %arg15[%c0_125, %c0_126] : memref<128x256xbf16, #tpu.memory_space<vmem>>, vector<128x256xbf16>
    %cst_127 = arith.constant dense<0.000000e+00> : vector<16x256xf32>
    %213 = tpu.matmul %211, %212, %cst_127 {dimension_numbers = #tpu.dot_dimension_numbers<[1], [0], [0], [1], [0, 0, 1, 1], [], []>} : vector<16x128xbf16>, vector<128x256xbf16>, vector<16x256xf32> -> vector<16x256xf32>
    %c0_128 = arith.constant 0 : index
    %c0_129 = arith.constant 0 : index
    %214 = vector.load %arg9[%c0_128, %c0_129] : memref<1x256xf32, #tpu.memory_space<vmem>>, vector<1x256xf32>
    %215 = vector.broadcast %214 : vector<1x256xf32> to vector<16x256xf32>
    %216 = arith.addf %213, %215 : vector<16x256xf32>
    %c0_130 = arith.constant 0 : index
    %c0_131 = arith.constant 0 : index
    %217 = vector.load %arg12[%c0_130, %c0_131] : memref<16x256xf32, #tpu.memory_space<vmem>>, vector<16x256xf32>
    tpu.vector_store %arg12[%c0_130, %c0_131], %216 {strides = array<i32>} : memref<16x256xf32, #tpu.memory_space<vmem>>, vector<16x256xf32>,
    %218 = vector.extract_strided_slice %216 {offsets = [0, 0], sizes = [8, 256], strides = [1, 1]} : vector<16x256xf32> to vector<8x256xf32>
    %cst_132 = arith.constant dense<0xFF800000> : vector<256xf32>
    %219 = vector.multi_reduction <maximumf>, %218, %cst_132 [0] : vector<8x256xf32> to vector<256xf32>
    %220 = vector.shape_cast %219 : vector<256xf32> to vector<1x256xf32>
    %221 = vector.extract_strided_slice %216 {offsets = [8, 0], sizes = [8, 256], strides = [1, 1]} : vector<16x256xf32> to vector<8x256xf32>
    %cst_133 = arith.constant dense<0xFF800000> : vector<256xf32>
    %222 = vector.multi_reduction <maximumf>, %221, %cst_133 [0] : vector<8x256xf32> to vector<256xf32>
    %223 = vector.shape_cast %222 : vector<256xf32> to vector<1x256xf32>
    %224 = tpu.concatenate %220, %223 in 0 : vector<1x256xf32>, vector<1x256xf32> -> vector<2x256xf32>
    %c0_134 = arith.constant 0 : index
    %c0_135 = arith.constant 0 : index
    %225 = vector.load %arg10[%c0_134, %c0_135] : memref<256x2xf32, #tpu.memory_space<vmem>>, vector<256x2xf32>
    %cst_136 = arith.constant dense<0.000000e+00> : vector<2x2xf32>
    %226 = tpu.matmul %224, %225, %cst_136 {dimension_numbers = #tpu.dot_dimension_numbers<[1], [0], [0], [1], [0, 0, 1, 1], [], []>} : vector<2x256xf32>, vector<256x2xf32>, vector<2x2xf32> -> vector<2x2xf32>
    %c0_137 = arith.constant 0 : index
    %c0_138 = arith.constant 0 : index
    %227 = vector.load %arg11[%c0_137, %c0_138] : memref<1x2xf32, #tpu.memory_space<vmem>>, vector<1x2xf32>
    %228 = vector.broadcast %227 : vector<1x2xf32> to vector<2x2xf32>
    %229 = arith.addf %226, %228 : vector<2x2xf32>
    %c0_139 = arith.constant 0 : index
    %c0_140 = arith.constant 0 : index
    %230 = vector.load %arg13[%c0_139, %c0_140] : memref<2x2xf32, #tpu.memory_space<vmem>>, vector<2x2xf32>
    tpu.vector_store %arg13[%c0_139, %c0_140], %229 {strides = array<i32>} : memref<2x2xf32, #tpu.memory_space<vmem>>, vector<2x2xf32>,
    return
  }
  func.func @transform_0(%arg0: i32) -> (i32, i32) {
    %c0_i32 = arith.constant 0 : i32
    %c0_i32_0 = arith.constant 0 : i32
    %c0_i32_1 = arith.constant 0 : i32
    return %c0_i32, %c0_i32_0 : i32, i32
  }
  func.func @transform_1(%arg0: i32) -> (i32, i32) {
    %c0_i32 = arith.constant 0 : i32
    %c0_i32_0 = arith.constant 0 : i32
    %c0_i32_1 = arith.constant 0 : i32
    return %c0_i32, %c0_i32_0 : i32, i32
  }
  func.func @transform_2(%arg0: i32) -> (i32, i32) {
    %c0_i32 = arith.constant 0 : i32
    %c0_i32_0 = arith.constant 0 : i32
    %c0_i32_1 = arith.constant 0 : i32
    return %c0_i32, %c0_i32_0 : i32, i32
  }
  func.func @transform_3(%arg0: i32) -> (i32, i32) {
    %c0_i32 = arith.constant 0 : i32
    %c0_i32_0 = arith.constant 0 : i32
    %c0_i32_1 = arith.constant 0 : i32
    return %c0_i32, %c0_i32_0 : i32, i32
  }
  func.func @transform_4(%arg0: i32) -> (i32, i32) {
    %c0_i32 = arith.constant 0 : i32
    %c0_i32_0 = arith.constant 0 : i32
    %c0_i32_1 = arith.constant 0 : i32
    return %c0_i32, %c0_i32_0 : i32, i32
  }
  func.func @transform_6(%arg0: i32) -> (i32, i32, i32) {
    %c0_i32 = arith.constant 0 : i32
    %c0_i32_0 = arith.constant 0 : i32
    %c0_i32_1 = arith.constant 0 : i32
    %c0_i32_2 = arith.constant 0 : i32
    return %c0_i32, %c0_i32_0, %c0_i32_1 : i32, i32, i32
  }
  func.func @transform_8(%arg0: i32) -> (i32, i32) {
    %c0_i32 = arith.constant 0 : i32
    %c0_i32_0 = arith.constant 0 : i32
    %c0_i32_1 = arith.constant 0 : i32
    return %c0_i32, %c0_i32_0 : i32, i32
  }
  func.func @transform_9(%arg0: i32) -> (i32, i32) {
    %c0_i32 = arith.constant 0 : i32
    %c0_i32_0 = arith.constant 0 : i32
    %c0_i32_1 = arith.constant 0 : i32
    return %c0_i32, %c0_i32_0 : i32, i32
  }
  func.func @transform_10(%arg0: i32) -> (i32, i32) {
    %c0_i32 = arith.constant 0 : i32
    %c0_i32_0 = arith.constant 0 : i32
    %c0_i32_1 = arith.constant 0 : i32
    return %c0_i32, %c0_i32_0 : i32, i32
  }
  func.func @transform_11(%arg0: i32) -> (i32, i32) {
    %c0_i32 = arith.constant 0 : i32
    %c0_i32_0 = arith.constant 0 : i32
    %c0_i32_1 = arith.constant 0 : i32
    return %c0_i32, %c0_i32_0 : i32, i32
  }
  func.func @transform_12(%arg0: i32) -> (i32, i32) {
    %c0_i32 = arith.constant 0 : i32
    %c0_i32_0 = arith.constant 0 : i32
    %c0_i32_1 = arith.constant 0 : i32
    return %c0_i32, %c0_i32_0 : i32, i32
  }
}

</mosaic_0001>

<llo_original>
// kernel: tpu_custom_call.1
$region0: #{tpu_custom_call.1}
  #allocation0 [shape = 'u32[]', space=smem, size = 0x4, offset = 0x4, fixed_abs, tag = 'smem constant byte address 0x4 - core index']
  #allocation1 [shape = 'u32[144,128]{1,0:T(1,128)}', space=vmem, size = 0x12000, scoped, tag = 'internal scratch']
  #allocation2 [shape = 'bf16[3,1024,128]{2,1,0:T(16,128)(2,1)}', space=vmem, size = 0xc0000, scoped, tag = 'scratch operand']
  #allocation3 [shape = 'bf16[128,256]{1,0:T(16,128)(2,1)}', space=vmem, size = 0x10000, scoped, tag = 'scratch operand']
  #allocation4 [shape = 's32[4]{0}', space=sflag, size = 0x10, scoped, tag = 'scratch operand']
  #allocation11 [shape = 's32[]', space=sflag, size = 0x4, offset = 0, fixed_abs, tag = 'sflag constant byte address 0x0 - dummy sync flag']
  #allocation12 [shape = 's32[]', space=sflag, size = 0x4, offset = 0, fixed_abs, tag = 'sflag constant byte address 0x0 - dummy sync flag']
  #allocation13 [shape = 'u32[]', space=smem, size = 0x4, offset = 0x44, fixed_abs, tag = 'smem constant byte address 0x44 - assertion arg 0']
  #allocation14 [shape = 'u32[]', space=smem, size = 0x4, offset = 0x48, fixed_abs, tag = 'smem constant byte address 0x48 - assertion arg 1']
  #allocation15 [shape = 's32[]', space=sflag, size = 0x4, offset = 0, fixed_abs, tag = 'sflag constant byte address 0x0 - dummy sync flag']
  #allocation16 [shape = 's32[]', space=sflag, size = 0x4, offset = 0, fixed_abs, tag = 'sflag constant byte address 0x0 - dummy sync flag']
  #allocation17 [shape = 's32[]', space=sflag, size = 0x4, offset = 0, fixed_abs, tag = 'sflag constant byte address 0x0 - dummy sync flag']
  #allocation18 [shape = 's32[]', space=sflag, size = 0x4, offset = 0, fixed_abs, tag = 'sflag constant byte address 0x0 - dummy sync flag']
  #allocation19 [shape = 's32[]', space=sflag, size = 0x4, offset = 0, fixed_abs, tag = 'sflag constant byte address 0x0 - dummy sync flag']
  %s0 = inlined_call_operand.vmem [shape: bf16[16,800], index: 0, kind: input, shape index: {}]
  %s1 = inlined_call_operand.vmem [shape: f32[16,2], index: 1, kind: input, shape index: {}]
  %s2 = inlined_call_operand.vmem [shape: bf16[64,16], index: 2, kind: input, shape index: {}]
  %s3 = inlined_call_operand.hbm [shape: bf16[800,128], index: 3, kind: input, shape index: {}]
  %s4 = inlined_call_operand.vmem [shape: f32[1,128], index: 4, kind: input, shape index: {}]
  %s5 = inlined_call_operand.hbm [shape: bf16[3,1024,128], index: 5, kind: input, shape index: {}]
  %s6 = inlined_call_operand.vmem [shape: f32[3,3,128], index: 6, kind: input, shape index: {}]
  %s7 = inlined_call_operand.vmem [shape: bf16[128,256], index: 7, kind: input, shape index: {}]
  %s8 = inlined_call_operand.vmem [shape: f32[1,256], index: 8, kind: input, shape index: {}]
  %s9 = inlined_call_operand.vmem [shape: f32[256,2], index: 9, kind: input, shape index: {}]
  %s10 = inlined_call_operand.vmem [shape: f32[1,2], index: 10, kind: input, shape index: {}]
  %s11 = inlined_call_operand.hbm [shape: f32[16,256], index: 11, kind: output, shape index: {0}]
  %s12 = inlined_call_operand.hbm [shape: f32[2,2], index: 12, kind: output, shape index: {1}]
  %13 = xla_tuple %s11, %s12
  %s14 = sld [smem:[#allocation0]]
  $region107: #{tpu_custom_call.1} parent=0
    _
  %s16 = ssub.s32 1, %s14
  %s17 = scalar_select 0, %s16, %s14
  $region1: #{tpu_custom_call.1} parent=0
    #allocation5 [shape = 'u8[204800]{0}', space=vmem, size = 0x32000, scoped, tag = 'input window, operand 3, single buffered']
    #allocation6 [shape = 's32[1]{0}', space=sflag, size = 0x4, scoped, tag = 'scoped memory for tpu_custom_call.1']
    #allocation7 [shape = 's32[1]{0}', space=sflag, size = 0x4, scoped, tag = 'scoped memory for tpu_custom_call.1']
    #allocation8 [shape = 'u8[16384]{0}', space=vmem, size = 0x4000, scoped, tag = 'output window, operand 0, single buffered']
    #allocation9 [shape = 'u8[1024]{0}', space=vmem, size = 0x400, scoped, tag = 'output window, operand 1, single buffered']
    #allocation10 [shape = 's32[1]{0}', space=sflag, size = 0x4, scoped, tag = 'scoped memory for tpu_custom_call.1']
    %18 = vsyncpa [#allocation6], 0
    %19 = vsyncpa [#allocation7], 0
    %20 = vsyncpa [#allocation10], 0
    // Predicated region
    $region2: #{tpu_custom_call.1} parent=1 // pred_check
      _
    $region3: #{tpu_custom_call.1} parent=1 // pred_check_branch
      %22 = sbr.rel (0) target = $region5
    $region4: #{tpu_custom_call.1} parent=1 // pred_region
      _
    $region5: #{tpu_custom_call.1} parent=1 // pred_fallthru
      _
    // Predicated region
    $region6: #{tpu_custom_call.1} parent=1 // pred_check
      _
    $region7: #{tpu_custom_call.1} parent=1 // pred_check_branch
      %24 = sbr.rel (0) target = $region9
    $region8: #{tpu_custom_call.1} parent=1 // pred_region
      _
    $region9: #{tpu_custom_call.1} parent=1 // pred_fallthru
      _
    // Predicated region
    $region10: #{tpu_custom_call.1} parent=1 // pred_check
      _
    $region11: #{tpu_custom_call.1} parent=1 // pred_check_branch
      %26 = sbr.rel (0) target = $region13
    $region12: #{tpu_custom_call.1} parent=1 // pred_region
      _
    $region13: #{tpu_custom_call.1} parent=1 // pred_fallthru
      _
    // Predicated region
    $region14: #{tpu_custom_call.1} parent=1 // pred_check
      _
    $region15: #{tpu_custom_call.1} parent=1 // pred_check_branch
      %28 = sbr.rel (0) target = $region17
    $region16: #{tpu_custom_call.1} parent=1 // pred_region
      %s30 = ssub.s32 6400, 6400
      %31 = vsyncadd [#allocation6], %s30
      %s32 = sshll.u32 [#allocation5], 4
      %s33 = int_to_ptr.vmem [resolvable:$true] %s32
      %38 = dma.hbm_to_vmem [thread:$0]  %s3, 6400, %s33, [#allocation6], 64, 64, 4
    $region17: #{tpu_custom_call.1} parent=1 // pred_fallthru
      _
    // Predicated region
    $region18: #{tpu_custom_call.1} parent=1 // pred_check
      _
    $region19: #{tpu_custom_call.1} parent=1 // pred_check_branch
      %40 = sbr.rel (0) target = $region21
    $region20: #{tpu_custom_call.1} parent=1 // pred_region
      _
    $region21: #{tpu_custom_call.1} parent=1 // pred_fallthru
      _
    // Predicated region
    $region22: #{tpu_custom_call.1} parent=1 // pred_check
      _
    $region23: #{tpu_custom_call.1} parent=1 // pred_check_branch
      %42 = sbr.rel (0) target = $region25
    $region24: #{tpu_custom_call.1} parent=1 // pred_region
      _
    $region25: #{tpu_custom_call.1} parent=1 // pred_fallthru
      _
    // Predicated region
    $region26: #{tpu_custom_call.1} parent=1 // pred_check
      _
    $region27: #{tpu_custom_call.1} parent=1 // pred_check_branch
      %44 = sbr.rel (0) target = $region29
    $region28: #{tpu_custom_call.1} parent=1 // pred_region
      _
    $region29: #{tpu_custom_call.1} parent=1 // pred_fallthru
      _
    // Predicated region
    $region30: #{tpu_custom_call.1} parent=1 // pred_check
      _
    $region31: #{tpu_custom_call.1} parent=1 // pred_check_branch
      %46 = sbr.rel (0) target = $region33
    $region32: #{tpu_custom_call.1} parent=1 // pred_region
      _
    $region33: #{tpu_custom_call.1} parent=1 // pred_fallthru
      _
    // Predicated region
    $region34: #{tpu_custom_call.1} parent=1 // pred_check
      _
    $region35: #{tpu_custom_call.1} parent=1 // pred_check_branch
      %48 = sbr.rel (0) target = $region37
    $region36: #{tpu_custom_call.1} parent=1 // pred_region
      _
    $region37: #{tpu_custom_call.1} parent=1 // pred_fallthru
      _
    // Predicated region
    $region38: #{tpu_custom_call.1} parent=1 // pred_check
      _
    $region39: #{tpu_custom_call.1} parent=1 // pred_check_branch
      %50 = sbr.rel (0) target = $region41
    $region40: #{tpu_custom_call.1} parent=1 // pred_region
      %51 = dma.done [#allocation6], 6400
    $region41: #{tpu_custom_call.1} parent=1 // pred_fallthru
      _
    // Predicated region
    $region42: #{tpu_custom_call.1} parent=1 // pred_check
      _
    $region43: #{tpu_custom_call.1} parent=1 // pred_check_branch
      %54 = sbr.rel target = $region45
    $region44: #{tpu_custom_call.1} parent=1 // pred_region
      %55 = sst [smem:[#allocation13]] [#allocation12]
      %56 = sst [smem:[#allocation14]] [#allocation11]
    $region45: #{tpu_custom_call.1} parent=1 // pred_fallthru
      _
    %58 = shalt.err (0)
    %s60 = sshll.u32 [#allocation2], 4
    %s61 = int_to_ptr.vmem [resolvable:$true] %s60
    %63 = dma.hbm_to_vmem [thread:$0]  %s5, 8192, %s61, [#allocation4]
    %s64 = scalar_lea.hbm %s5, 8192
    %s65 = scalar_lea.vmem [#allocation2], 512
    %s66 = scalar_lea.sflag [#allocation4], 1
    // Predicated region
    $region46: #{tpu_custom_call.1} parent=1 // pred_check
      _
    $region47: #{tpu_custom_call.1} parent=1 // pred_check_branch
      %68 = sbr.rel target = $region49
    $region48: #{tpu_custom_call.1} parent=1 // pred_region
      %69 = sst [smem:[#allocation13]] [#allocation16]
      %70 = sst [smem:[#allocation14]] [#allocation15]
    $region49: #{tpu_custom_call.1} parent=1 // pred_fallthru
      _
    %72 = shalt.err (0)
    %s74 = sshll.u32 %s65, 4
    %s75 = int_to_ptr.vmem [resolvable:$true] %s74
    %77 = dma.hbm_to_vmem [thread:$0]  %s64, 8192, %s75, %s66
    %s78 = scalar_lea.hbm %s5, 16384
    %s79 = scalar_lea.vmem [#allocation2], 1024
    %s80 = scalar_lea.sflag [#allocation4], 2
    // Predicated region
    $region50: #{tpu_custom_call.1} parent=1 // pred_check
      _
    $region51: #{tpu_custom_call.1} parent=1 // pred_check_branch
      %82 = sbr.rel target = $region53
    $region52: #{tpu_custom_call.1} parent=1 // pred_region
      %83 = sst [smem:[#allocation13]] [#allocation18]
      %84 = sst [smem:[#allocation14]] [#allocation17]
    $region53: #{tpu_custom_call.1} parent=1 // pred_fallthru
      _
    %86 = shalt.err (0)
    %s88 = sshll.u32 %s79, 4
    %s89 = int_to_ptr.vmem [resolvable:$true] %s88
    %91 = dma.hbm_to_vmem [thread:$0]  %s78, 8192, %s89, %s80
    %s92 = scalar_lea.sflag [#allocation4], 3
    %p94 = scmp.lt.u32.totalorder 4, 8
    %p95 = pneg %p94
    // Predicated region
    $region54: #{tpu_custom_call.1} parent=1 // pred_check
      _
    $region55: #{tpu_custom_call.1} parent=1 // pred_check_branch
      %97 = sbr.rel (%p94) target = $region57
    $region56: #{tpu_custom_call.1} parent=1 // pred_region
      %s174 = sand.u32 4, 7
      %p175 = scmp.eq.s32.totalorder %s174, 0
      %p176 = pneg %p175
      // Predicated region
      $region69: #{tpu_custom_call.1} parent=56 // pred_check
        _
      $region70: #{tpu_custom_call.1} parent=56 // pred_check_branch
        %178 = sbr.rel (%p175) target = $region72
      $region71: #{tpu_custom_call.1} parent=56 // pred_region
        %s179 = sand.u32 4, 7
        %s180 = ssub.s32 4, %s179
        %s181 = scalar_lea.vmem %s7, %s180
        %s182 = ssub.s32 4, %s179
        %s183 = scalar_lea.vmem [#allocation3], %s182
        loop: start=0, step=1, limit=1
        $region73: #{tpu_custom_call.1} parent=71 // loop_pre_header
          _
        $region74: #{tpu_custom_call.1} parent=71 // loop_header
          %s185 = sphi 0, %s189
          %p186 = scmp.ge.s32.totalorder %s185, 1
          %s190 = sphi %s7, %s7
          %s191 = sphi [#allocation3], [#allocation3]
        $region75: #{tpu_custom_call.1} parent=71 // loop_header_branch
          %188 = sbr.rel (%p186) target = $region79
        $region76: #{tpu_custom_call.1} parent=71 // loop_body
          _
        $region77: #{tpu_custom_call.1} parent=71 // loop_footer
          %s189 = sadd.s32 1, %s185
        $region78: #{tpu_custom_call.1} parent=71 // loop_footer_branch
          %184 = sbr.rel target = $region74
        $region79: #{tpu_custom_call.1} parent=71 // loop_exit
          _
        %s192 = sshllo.u32 0, %s179
        loop: start=0, step=1, limit=1
        $region80: #{tpu_custom_call.1} parent=71 // loop_pre_header
          _
        $region81: #{tpu_custom_call.1} parent=71 // loop_header
          %s194 = sphi 0, %s198
          %p195 = scmp.ge.s32.totalorder %s194, 1
          %s199 = sphi %s181, %s181
          %s200 = sphi %s183, %s183
        $region82: #{tpu_custom_call.1} parent=71 // loop_header_branch
          %197 = sbr.rel (%p195) target = $region86
        $region83: #{tpu_custom_call.1} parent=71 // loop_body
          %v201 = vld [vmem:[%s199] sm:%s192]
          %202 = vst [vmem:[%s200] sm:%s192] %v201
          %v203 = vld [vmem:[%s199 + $0x8] sm:%s192]
          %204 = vst [vmem:[%s200 + $0x4] sm:%s192] %v203
          %v205 = vld [vmem:[%s199 + $0x4] sm:%s192]
          %206 = vst [vmem:[%s200 + $0x8] sm:%s192] %v205
          %v207 = vld [vmem:[%s199 + $0xc] sm:%s192]
          %208 = vst [vmem:[%s200 + $0xc] sm:%s192] %v207
          %v209 = vld [vmem:[%s199 + $0x10] sm:%s192]
          %210 = vst [vmem:[%s200 + $0x10] sm:%s192] %v209
          %v211 = vld [vmem:[%s199 + $0x18] sm:%s192]
          %212 = vst [vmem:[%s200 + $0x14] sm:%s192] %v211
          %v213 = vld [vmem:[%s199 + $0x14] sm:%s192]
          %214 = vst [vmem:[%s200 + $0x18] sm:%s192] %v213
          %v215 = vld [vmem:[%s199 + $0x1c] sm:%s192]
          %216 = vst [vmem:[%s200 + $0x1c] sm:%s192] %v215
          %v217 = vld [vmem:[%s199 + $0x20] sm:%s192]
          %218 = vst [vmem:[%s200 + $0x20] sm:%s192] %v217
          %v219 = vld [vmem:[%s199 + $0x28] sm:%s192]
          %220 = vst [vmem:[%s200 + $0x24] sm:%s192] %v219
          %v221 = vld [vmem:[%s199 + $0x24] sm:%s192]
          %222 = vst [vmem:[%s200 + $0x28] sm:%s192] %v221
          %v223 = vld [vmem:[%s199 + $0x2c] sm:%s192]
          %224 = vst [vmem:[%s200 + $0x2c] sm:%s192] %v223
          %v225 = vld [vmem:[%s199 + $0x30] sm:%s192]
          %226 = vst [vmem:[%s200 + $0x30] sm:%s192] %v225
          %v227 = vld [vmem:[%s199 + $0x38] sm:%s192]
          %228 = vst [vmem:[%s200 + $0x34] sm:%s192] %v227
          %v229 = vld [vmem:[%s199 + $0x34] sm:%s192]
          %230 = vst [vmem:[%s200 + $0x38] sm:%s192] %v229
          %v231 = vld [vmem:[%s199 + $0x3c] sm:%s192]
          %232 = vst [vmem:[%s200 + $0x3c] sm:%s192] %v231
          %v233 = vld [vmem:[%s199 + $0x40] sm:%s192]
          %234 = vst [vmem:[%s200 + $0x40] sm:%s192] %v233
          %v235 = vld [vmem:[%s199 + $0x48] sm:%s192]
          %236 = vst [vmem:[%s200 + $0x44] sm:%s192] %v235
          %v237 = vld [vmem:[%s199 + $0x44] sm:%s192]
          %238 = vst [vmem:[%s200 + $0x48] sm:%s192] %v237
          %v239 = vld [vmem:[%s199 + $0x4c] sm:%s192]
          %240 = vst [vmem:[%s200 + $0x4c] sm:%s192] %v239
          %v241 = vld [vmem:[%s199 + $0x50] sm:%s192]
          %242 = vst [vmem:[%s200 + $0x50] sm:%s192] %v241
          %v243 = vld [vmem:[%s199 + $0x58] sm:%s192]
          %244 = vst [vmem:[%s200 + $0x54] sm:%s192] %v243
          %v245 = vld [vmem:[%s199 + $0x54] sm:%s192]
          %246 = vst [vmem:[%s200 + $0x58] sm:%s192] %v245
          %v247 = vld [vmem:[%s199 + $0x5c] sm:%s192]
          %248 = vst [vmem:[%s200 + $0x5c] sm:%s192] %v247
          %v249 = vld [vmem:[%s199 + $0x60] sm:%s192]
          %250 = vst [vmem:[%s200 + $0x60] sm:%s192] %v249
          %v251 = vld [vmem:[%s199 + $0x68] sm:%s192]
          %252 = vst [vmem:[%s200 + $0x64] sm:%s192] %v251
          %v253 = vld [vmem:[%s199 + $0x64] sm:%s192]
          %254 = vst [vmem:[%s200 + $0x68] sm:%s192] %v253
          %v255 = vld [vmem:[%s199 + $0x6c] sm:%s192]
          %256 = vst [vmem:[%s200 + $0x6c] sm:%s192] %v255
          %v257 = vld [vmem:[%s199 + $0x70] sm:%s192]
          %258 = vst [vmem:[%s200 + $0x70] sm:%s192] %v257
          %v259 = vld [vmem:[%s199 + $0x78] sm:%s192]
          %260 = vst [vmem:[%s200 + $0x74] sm:%s192] %v259
          %v261 = vld [vmem:[%s199 + $0x74] sm:%s192]
          %262 = vst [vmem:[%s200 + $0x78] sm:%s192] %v261
          %v263 = vld [vmem:[%s199 + $0x7c] sm:%s192]
          %264 = vst [vmem:[%s200 + $0x7c] sm:%s192] %v263
        $region84: #{tpu_custom_call.1} parent=71 // loop_footer
          %s198 = sadd.s32 1, %s194
        $region85: #{tpu_custom_call.1} parent=71 // loop_footer_branch
          %193 = sbr.rel target = $region81
        $region86: #{tpu_custom_call.1} parent=71 // loop_exit
          _
      $region72: #{tpu_custom_call.1} parent=56 // pred_fallthru
        _
    $region57: #{tpu_custom_call.1} parent=1 // pred_fallthru
      _
    // Predicated region
    $region58: #{tpu_custom_call.1} parent=1 // pred_check
      %p98 = pneg %p94
    $region59: #{tpu_custom_call.1} parent=1 // pred_check_branch
      %100 = sbr.rel (%p98) target = $region61
    $region60: #{tpu_custom_call.1} parent=1 // pred_region
      %s101 = sshllo.u32 0, 4
      loop: start=0, step=1, limit=1
      $region62: #{tpu_custom_call.1} parent=60 // loop_pre_header
        _
      $region63: #{tpu_custom_call.1} parent=60 // loop_header
        %s103 = sphi 0, %s107
        %p104 = scmp.ge.s32.totalorder %s103, 1
        %s108 = sphi %s7, %s7
        %s109 = sphi [#allocation3], [#allocation3]
      $region64: #{tpu_custom_call.1} parent=60 // loop_header_branch
        %106 = sbr.rel (%p104) target = $region68
      $region65: #{tpu_custom_call.1} parent=60 // loop_body
        %v110 = vld [vmem:[%s108] sm:%s101]
        %111 = vst [vmem:[%s109] sm:%s101] %v110
        %v112 = vld [vmem:[%s108 + $0x8] sm:%s101]
        %113 = vst [vmem:[%s109 + $0x4] sm:%s101] %v112
        %v114 = vld [vmem:[%s108 + $0x4] sm:%s101]
        %115 = vst [vmem:[%s109 + $0x8] sm:%s101] %v114
        %v116 = vld [vmem:[%s108 + $0xc] sm:%s101]
        %117 = vst [vmem:[%s109 + $0xc] sm:%s101] %v116
        %v118 = vld [vmem:[%s108 + $0x10] sm:%s101]
        %119 = vst [vmem:[%s109 + $0x10] sm:%s101] %v118
        %v120 = vld [vmem:[%s108 + $0x18] sm:%s101]
        %121 = vst [vmem:[%s109 + $0x14] sm:%s101] %v120
        %v122 = vld [vmem:[%s108 + $0x14] sm:%s101]
        %123 = vst [vmem:[%s109 + $0x18] sm:%s101] %v122
        %v124 = vld [vmem:[%s108 + $0x1c] sm:%s101]
        %125 = vst [vmem:[%s109 + $0x1c] sm:%s101] %v124
        %v126 = vld [vmem:[%s108 + $0x20] sm:%s101]
        %127 = vst [vmem:[%s109 + $0x20] sm:%s101] %v126
        %v128 = vld [vmem:[%s108 + $0x28] sm:%s101]
        %129 = vst [vmem:[%s109 + $0x24] sm:%s101] %v128
        %v130 = vld [vmem:[%s108 + $0x24] sm:%s101]
        %131 = vst [vmem:[%s109 + $0x28] sm:%s101] %v130
        %v132 = vld [vmem:[%s108 + $0x2c] sm:%s101]
        %133 = vst [vmem:[%s109 + $0x2c] sm:%s101] %v132
        %v134 = vld [vmem:[%s108 + $0x30] sm:%s101]
        %135 = vst [vmem:[%s109 + $0x30] sm:%s101] %v134
        %v136 = vld [vmem:[%s108 + $0x38] sm:%s101]
        %137 = vst [vmem:[%s109 + $0x34] sm:%s101] %v136
        %v138 = vld [vmem:[%s108 + $0x34] sm:%s101]
        %139 = vst [vmem:[%s109 + $0x38] sm:%s101] %v138
        %v140 = vld [vmem:[%s108 + $0x3c] sm:%s101]
        %141 = vst [vmem:[%s109 + $0x3c] sm:%s101] %v140
        %v142 = vld [vmem:[%s108 + $0x40] sm:%s101]
        %143 = vst [vmem:[%s109 + $0x40] sm:%s101] %v142
        %v144 = vld [vmem:[%s108 + $0x48] sm:%s101]
        %145 = vst [vmem:[%s109 + $0x44] sm:%s101] %v144
        %v146 = vld [vmem:[%s108 + $0x44] sm:%s101]
        %147 = vst [vmem:[%s109 + $0x48] sm:%s101] %v146
        %v148 = vld [vmem:[%s108 + $0x4c] sm:%s101]
        %149 = vst [vmem:[%s109 + $0x4c] sm:%s101] %v148
        %v150 = vld [vmem:[%s108 + $0x50] sm:%s101]
        %151 = vst [vmem:[%s109 + $0x50] sm:%s101] %v150
        %v152 = vld [vmem:[%s108 + $0x58] sm:%s101]
        %153 = vst [vmem:[%s109 + $0x54] sm:%s101] %v152
        %v154 = vld [vmem:[%s108 + $0x54] sm:%s101]
        %155 = vst [vmem:[%s109 + $0x58] sm:%s101] %v154
        %v156 = vld [vmem:[%s108 + $0x5c] sm:%s101]
        %157 = vst [vmem:[%s109 + $0x5c] sm:%s101] %v156
        %v158 = vld [vmem:[%s108 + $0x60] sm:%s101]
        %159 = vst [vmem:[%s109 + $0x60] sm:%s101] %v158
        %v160 = vld [vmem:[%s108 + $0x68] sm:%s101]
        %161 = vst [vmem:[%s109 + $0x64] sm:%s101] %v160
        %v162 = vld [vmem:[%s108 + $0x64] sm:%s101]
        %163 = vst [vmem:[%s109 + $0x68] sm:%s101] %v162
        %v164 = vld [vmem:[%s108 + $0x6c] sm:%s101]
        %165 = vst [vmem:[%s109 + $0x6c] sm:%s101] %v164
        %v166 = vld [vmem:[%s108 + $0x70] sm:%s101]
        %167 = vst [vmem:[%s109 + $0x70] sm:%s101] %v166
        %v168 = vld [vmem:[%s108 + $0x78] sm:%s101]
        %169 = vst [vmem:[%s109 + $0x74] sm:%s101] %v168
        %v170 = vld [vmem:[%s108 + $0x74] sm:%s101]
        %171 = vst [vmem:[%s109 + $0x78] sm:%s101] %v170
        %v172 = vld [vmem:[%s108 + $0x7c] sm:%s101]
        %173 = vst [vmem:[%s109 + $0x7c] sm:%s101] %v172
      $region66: #{tpu_custom_call.1} parent=60 // loop_footer
        %s107 = sadd.s32 1, %s103
      $region67: #{tpu_custom_call.1} parent=60 // loop_footer_branch
        %102 = sbr.rel target = $region63
      $region68: #{tpu_custom_call.1} parent=60 // loop_exit
        _
    $region61: #{tpu_custom_call.1} parent=1 // pred_fallthru
      _
    // Predicated region
    $region87: #{tpu_custom_call.1} parent=1 // pred_check
      _
    $region88: #{tpu_custom_call.1} parent=1 // pred_check_branch
      %267 = sbr.rel (0) target = $region90
    $region89: #{tpu_custom_call.1} parent=1 // pred_region
      %268 = vsyncadd %s92, 2048
    $region90: #{tpu_custom_call.1} parent=1 // pred_fallthru
      _
    %v269 = vld [vmem:[%s0] sm:$0xff]
    %v270 = vld [vmem:[%s0 + $0x8] sm:$0xff]
    %v271 = vld [vmem:[%s0 + $0x10] sm:$0xff]
    %v272 = vld [vmem:[%s0 + $0x18] sm:$0xf]
    %v273 = vld [vmem:[%s0 + $0x1c] sm:$0xff]
    %v274 = vld [vmem:[%s0 + $0x24] sm:$0xff]
    %v275 = vld [vmem:[%s0 + $0x2c] sm:$0xff]
    %v276 = vld [vmem:[%s0 + $0x34] sm:$0xf]
    %v277 = vld [vmem:[#allocation5] sm:$0xf]
    %v278 = vld [vmem:[#allocation5 + $0x4] sm:$0xf]
    %v279 = vld [vmem:[#allocation5 + $0x8] sm:$0xf]
    %v280 = vld [vmem:[#allocation5 + $0xc] sm:$0xf]
    %v281 = vld [vmem:[#allocation5 + $0x10] sm:$0xf]
    %v282 = vld [vmem:[#allocation5 + $0x14] sm:$0xf]
    %v283 = vld [vmem:[#allocation5 + $0x18] sm:$0xf]
    %v284 = vld [vmem:[#allocation5 + $0x1c] sm:$0xf]
    %v285 = vld [vmem:[#allocation5 + $0x20] sm:$0xf]
    %v286 = vld [vmem:[#allocation5 + $0x24] sm:$0xf]
    %v287 = vld [vmem:[#allocation5 + $0x28] sm:$0xf]
    %v288 = vld [vmem:[#allocation5 + $0x2c] sm:$0xf]
    %v289 = vld [vmem:[#allocation5 + $0x30] sm:$0xf]
    %v290 = vld [vmem:[#allocation5 + $0x34] sm:$0xf]
    %v291 = vld [vmem:[#allocation5 + $0x38] sm:$0xf]
    %v292 = vld [vmem:[#allocation5 + $0x3c] sm:$0xf]
    %v293 = vld [vmem:[#allocation5 + $0x40] sm:$0xf]
    %v294 = vld [vmem:[#allocation5 + $0x44] sm:$0xf]
    %v295 = vld [vmem:[#allocation5 + $0x48] sm:$0xf]
    %v296 = vld [vmem:[#allocation5 + $0x4c] sm:$0xf]
    %v297 = vld [vmem:[#allocation5 + $0x50] sm:$0xf]
    %v298 = vld [vmem:[#allocation5 + $0x54] sm:$0xf]
    %v299 = vld [vmem:[#allocation5 + $0x58] sm:$0xf]
    %v300 = vld [vmem:[#allocation5 + $0x5c] sm:$0xf]
    %v301 = vld [vmem:[#allocation5 + $0x60] sm:$0xf]
    %v302 = vld [vmem:[#allocation5 + $0x64] sm:$0xf]
    %v303 = vld [vmem:[#allocation5 + $0x68] sm:$0xf]
    %v304 = vld [vmem:[#allocation5 + $0x6c] sm:$0xf]
    %v305 = vld [vmem:[#allocation5 + $0x70] sm:$0xf]
    %v306 = vld [vmem:[#allocation5 + $0x74] sm:$0xf]
    %v307 = vld [vmem:[#allocation5 + $0x78] sm:$0xf]
    %v308 = vld [vmem:[#allocation5 + $0x7c] sm:$0xf]
    %v309 = vld [vmem:[#allocation5 + $0x80] sm:$0xf]
    %v310 = vld [vmem:[#allocation5 + $0x84] sm:$0xf]
    %v311 = vld [vmem:[#allocation5 + $0x88] sm:$0xf]
    %v312 = vld [vmem:[#allocation5 + $0x8c] sm:$0xf]
    %v313 = vld [vmem:[#allocation5 + $0x90] sm:$0xf]
    %v314 = vld [vmem:[#allocation5 + $0x94] sm:$0xf]
    %v315 = vld [vmem:[#allocation5 + $0x98] sm:$0xf]
    %v316 = vld [vmem:[#allocation5 + $0x9c] sm:$0xf]
    %v317 = vld [vmem:[#allocation5 + $0xa0] sm:$0xf]
    %v318 = vld [vmem:[#allocation5 + $0xa4] sm:$0xf]
    %v319 = vld [vmem:[#allocation5 + $0xa8] sm:$0xf]
    %v320 = vld [vmem:[#allocation5 + $0xac] sm:$0xf]
    %v321 = vld [vmem:[#allocation5 + $0xb0] sm:$0xf]
    %v322 = vld [vmem:[#allocation5 + $0xb4] sm:$0xf]
    %v323 = vld [vmem:[#allocation5 + $0xb8] sm:$0xf]
    %v324 = vld [vmem:[#allocation5 + $0xbc] sm:$0xf]
    %v325 = vld [vmem:[#allocation5 + $0xc0] sm:$0xf]
    %v326 = vld [vmem:[#allocation5 + $0xc4] sm:$0xf]
    %v327 = vld [vmem:[#allocation5 + $0xc8] sm:$0xf]
    %v328 = vld [vmem:[#allocation5 + $0xcc] sm:$0xf]
    %v329 = vld [vmem:[#allocation5 + $0xd0] sm:$0xf]
    %v330 = vld [vmem:[#allocation5 + $0xd4] sm:$0xf]
    %v331 = vld [vmem:[#allocation5 + $0xd8] sm:$0xf]
    %v332 = vld [vmem:[#allocation5 + $0xdc] sm:$0xf]
    %v333 = vld [vmem:[#allocation5 + $0xe0] sm:$0xf]
    %v334 = vld [vmem:[#allocation5 + $0xe4] sm:$0xf]
    %v335 = vld [vmem:[#allocation5 + $0xe8] sm:$0xf]
    %v336 = vld [vmem:[#allocation5 + $0xec] sm:$0xf]
    %v337 = vld [vmem:[#allocation5 + $0xf0] sm:$0xf]
    %v338 = vld [vmem:[#allocation5 + $0xf4] sm:$0xf]
    %v339 = vld [vmem:[#allocation5 + $0xf8] sm:$0xf]
    %v340 = vld [vmem:[#allocation5 + $0xfc] sm:$0xf]
    %v341 = vld [vmem:[#allocation5 + $0x100] sm:$0xf]
    %v342 = vld [vmem:[#allocation5 + $0x104] sm:$0xf]
    %v343 = vld [vmem:[#allocation5 + $0x108] sm:$0xf]
    %v344 = vld [vmem:[#allocation5 + $0x10c] sm:$0xf]
    %v345 = vld [vmem:[#allocation5 + $0x110] sm:$0xf]
    %v346 = vld [vmem:[#allocation5 + $0x114] sm:$0xf]
    %v347 = vld [vmem:[#allocation5 + $0x118] sm:$0xf]
    %v348 = vld [vmem:[#allocation5 + $0x11c] sm:$0xf]
    %v349 = vld [vmem:[#allocation5 + $0x120] sm:$0xf]
    %v350 = vld [vmem:[#allocation5 + $0x124] sm:$0xf]
    %v351 = vld [vmem:[#allocation5 + $0x128] sm:$0xf]
    %v352 = vld [vmem:[#allocation5 + $0x12c] sm:$0xf]
    %v353 = vld [vmem:[#allocation5 + $0x130] sm:$0xf]
    %v354 = vld [vmem:[#allocation5 + $0x134] sm:$0xf]
    %v355 = vld [vmem:[#allocation5 + $0x138] sm:$0xf]
    %v356 = vld [vmem:[#allocation5 + $0x13c] sm:$0xf]
    %v357 = vld [vmem:[#allocation5 + $0x140] sm:$0xf]
    %v358 = vld [vmem:[#allocation5 + $0x144] sm:$0xf]
    %v359 = vld [vmem:[#allocation5 + $0x148] sm:$0xf]
    %v360 = vld [vmem:[#allocation5 + $0x14c] sm:$0xf]
    %v361 = vld [vmem:[#allocation5 + $0x150] sm:$0xf]
    %v362 = vld [vmem:[#allocation5 + $0x154] sm:$0xf]
    %v363 = vld [vmem:[#allocation5 + $0x158] sm:$0xf]
    %v364 = vld [vmem:[#allocation5 + $0x15c] sm:$0xf]
    %v365 = vld [vmem:[#allocation5 + $0x160] sm:$0xf]
    %v366 = vld [vmem:[#allocation5 + $0x164] sm:$0xf]
    %v367 = vld [vmem:[#allocation5 + $0x168] sm:$0xf]
    %v368 = vld [vmem:[#allocation5 + $0x16c] sm:$0xf]
    %v369 = vld [vmem:[#allocation5 + $0x170] sm:$0xf]
    %v370 = vld [vmem:[#allocation5 + $0x174] sm:$0xf]
    %v371 = vld [vmem:[#allocation5 + $0x178] sm:$0xf]
    %v372 = vld [vmem:[#allocation5 + $0x17c] sm:$0xf]
    %v373 = vld [vmem:[#allocation5 + $0x180] sm:$0xf]
    %v374 = vld [vmem:[#allocation5 + $0x184] sm:$0xf]
    %v375 = vld [vmem:[#allocation5 + $0x188] sm:$0xf]
    %v376 = vld [vmem:[#allocation5 + $0x18c] sm:$0xf]
    %v377 = vld [vmem:[%s4] sm:$0x1]
    %v379 = vlaneseq
    %v380 = vshrl.u32 %v379, 7
    %v381 = vsub.s32 0, %v380
    %v382 = vrot.slane %v377, %v381
    %v392 = vunpack.c.l.b16 %v269
    %v393 = vunpack.c.h.b16 %v269
    %v394 = vunpack.c.l.b16 %v270
    %v395 = vunpack.c.h.b16 %v270
    %v396 = vunpack.c.l.b16 %v271
    %v397 = vunpack.c.h.b16 %v271
    %v398 = vunpack.c.l.b16 %v272
    %v399 = vunpack.c.l.b16 %v273
    %v400 = vunpack.c.h.b16 %v273
    %v401 = vunpack.c.l.b16 %v274
    %v402 = vunpack.c.h.b16 %v274
    %v403 = vunpack.c.l.b16 %v275
    %v404 = vunpack.c.h.b16 %v275
    %v405 = vunpack.c.l.b16 %v276
    %v406 = vpack.c.b16 %v399, %v392
    %v407 = vpack.c.b16 %v400, %v393
    %v408 = vpack.c.b16 %v401, %v394
    %v409 = vpack.c.b16 %v402, %v395
    %v410 = vpack.c.b16 %v403, %v396
    %v411 = vpack.c.b16 %v404, %v397
    %v412 = vpack.c.b16 %v405, %v398
    %v519 = vunpack.c.l.b16 %v277
    %v520 = vunpack.c.l.b16 %v278
    %v521 = vunpack.c.l.b16 %v279
    %v522 = vunpack.c.l.b16 %v280
    %v523 = vunpack.c.l.b16 %v281
    %v524 = vunpack.c.l.b16 %v282
    %v525 = vunpack.c.l.b16 %v283
    %v526 = vunpack.c.l.b16 %v284
    %v527 = vunpack.c.l.b16 %v285
    %v528 = vunpack.c.l.b16 %v286
    %v529 = vunpack.c.l.b16 %v287
    %v530 = vunpack.c.l.b16 %v288
    %v531 = vunpack.c.l.b16 %v289
    %v532 = vunpack.c.l.b16 %v290
    %v533 = vunpack.c.l.b16 %v291
    %v534 = vunpack.c.l.b16 %v292
    %v535 = vunpack.c.l.b16 %v293
    %v536 = vunpack.c.l.b16 %v294
    %v537 = vunpack.c.l.b16 %v295
    %v538 = vunpack.c.l.b16 %v296
    %v539 = vunpack.c.l.b16 %v297
    %v540 = vunpack.c.l.b16 %v298
    %v541 = vunpack.c.l.b16 %v299
    %v542 = vunpack.c.l.b16 %v300
    %v543 = vunpack.c.l.b16 %v301
    %v544 = vunpack.c.l.b16 %v302
    %v545 = vunpack.c.l.b16 %v303
    %v546 = vunpack.c.l.b16 %v304
    %v547 = vunpack.c.l.b16 %v305
    %v548 = vunpack.c.l.b16 %v306
    %v549 = vunpack.c.l.b16 %v307
    %v550 = vunpack.c.l.b16 %v308
    %v551 = vunpack.c.l.b16 %v309
    %v552 = vunpack.c.l.b16 %v310
    %v553 = vunpack.c.l.b16 %v311
    %v554 = vunpack.c.l.b16 %v312
    %v555 = vunpack.c.l.b16 %v313
    %v556 = vunpack.c.l.b16 %v314
    %v557 = vunpack.c.l.b16 %v315
    %v558 = vunpack.c.l.b16 %v316
    %v559 = vunpack.c.l.b16 %v317
    %v560 = vunpack.c.l.b16 %v318
    %v561 = vunpack.c.l.b16 %v319
    %v562 = vunpack.c.l.b16 %v320
    %v563 = vunpack.c.l.b16 %v321
    %v564 = vunpack.c.l.b16 %v322
    %v565 = vunpack.c.l.b16 %v323
    %v566 = vunpack.c.l.b16 %v324
    %v567 = vunpack.c.l.b16 %v325
    %v568 = vunpack.c.l.b16 %v326
    %v569 = vunpack.c.l.b16 %v327
    %v570 = vunpack.c.l.b16 %v328
    %v571 = vunpack.c.l.b16 %v329
    %v572 = vunpack.c.l.b16 %v330
    %v573 = vunpack.c.l.b16 %v331
    %v574 = vunpack.c.l.b16 %v332
    %v575 = vunpack.c.l.b16 %v333
    %v576 = vunpack.c.l.b16 %v334
    %v577 = vunpack.c.l.b16 %v335
    %v578 = vunpack.c.l.b16 %v336
    %v579 = vunpack.c.l.b16 %v337
    %v580 = vunpack.c.l.b16 %v338
    %v581 = vunpack.c.l.b16 %v339
    %v582 = vunpack.c.l.b16 %v340
    %v583 = vunpack.c.l.b16 %v341
    %v584 = vunpack.c.l.b16 %v342
    %v585 = vunpack.c.l.b16 %v343
    %v586 = vunpack.c.l.b16 %v344
    %v587 = vunpack.c.l.b16 %v345
    %v588 = vunpack.c.l.b16 %v346
    %v589 = vunpack.c.l.b16 %v347
    %v590 = vunpack.c.l.b16 %v348
    %v591 = vunpack.c.l.b16 %v349
    %v592 = vunpack.c.l.b16 %v350
    %v593 = vunpack.c.l.b16 %v351
    %v594 = vunpack.c.l.b16 %v352
    %v595 = vunpack.c.l.b16 %v353
    %v596 = vunpack.c.l.b16 %v354
    %v597 = vunpack.c.l.b16 %v355
    %v598 = vunpack.c.l.b16 %v356
    %v599 = vunpack.c.l.b16 %v357
    %v600 = vunpack.c.l.b16 %v358
    %v601 = vunpack.c.l.b16 %v359
    %v602 = vunpack.c.l.b16 %v360
    %v603 = vunpack.c.l.b16 %v361
    %v604 = vunpack.c.l.b16 %v362
    %v605 = vunpack.c.l.b16 %v363
    %v606 = vunpack.c.l.b16 %v364
    %v607 = vunpack.c.l.b16 %v365
    %v608 = vunpack.c.l.b16 %v366
    %v609 = vunpack.c.l.b16 %v367
    %v610 = vunpack.c.l.b16 %v368
    %v611 = vunpack.c.l.b16 %v369
    %v612 = vunpack.c.l.b16 %v370
    %v613 = vunpack.c.l.b16 %v371
    %v614 = vunpack.c.l.b16 %v372
    %v615 = vunpack.c.l.b16 %v373
    %v616 = vunpack.c.l.b16 %v374
    %v617 = vunpack.c.l.b16 %v375
    %v618 = vunpack.c.l.b16 %v376
    %v619 = vpack.c.b16 %v520, %v519
    %v620 = vpack.c.b16 %v522, %v521
    %v621 = vpack.c.b16 %v524, %v523
    %v622 = vpack.c.b16 %v526, %v525
    %v623 = vpack.c.b16 %v528, %v527
    %v624 = vpack.c.b16 %v530, %v529
    %v625 = vpack.c.b16 %v532, %v531
    %v626 = vpack.c.b16 %v534, %v533
    %v627 = vpack.c.b16 %v536, %v535
    %v628 = vpack.c.b16 %v538, %v537
    %v629 = vpack.c.b16 %v540, %v539
    %v630 = vpack.c.b16 %v542, %v541
    %v631 = vpack.c.b16 %v544, %v543
    %v632 = vpack.c.b16 %v546, %v545
    %v633 = vpack.c.b16 %v548, %v547
    %v634 = vpack.c.b16 %v550, %v549
    %v635 = vpack.c.b16 %v552, %v551
    %v636 = vpack.c.b16 %v554, %v553
    %v637 = vpack.c.b16 %v556, %v555
    %v638 = vpack.c.b16 %v558, %v557
    %v639 = vpack.c.b16 %v560, %v559
    %v640 = vpack.c.b16 %v562, %v561
    %v641 = vpack.c.b16 %v564, %v563
    %v642 = vpack.c.b16 %v566, %v565
    %v643 = vpack.c.b16 %v568, %v567
    %v644 = vpack.c.b16 %v570, %v569
    %v645 = vpack.c.b16 %v572, %v571
    %v646 = vpack.c.b16 %v574, %v573
    %v647 = vpack.c.b16 %v576, %v575
    %v648 = vpack.c.b16 %v578, %v577
    %v649 = vpack.c.b16 %v580, %v579
    %v650 = vpack.c.b16 %v582, %v581
    %v651 = vpack.c.b16 %v584, %v583
    %v652 = vpack.c.b16 %v586, %v585
    %v653 = vpack.c.b16 %v588, %v587
    %v654 = vpack.c.b16 %v590, %v589
    %v655 = vpack.c.b16 %v592, %v591
    %v656 = vpack.c.b16 %v594, %v593
    %v657 = vpack.c.b16 %v596, %v595
    %v658 = vpack.c.b16 %v598, %v597
    %v659 = vpack.c.b16 %v600, %v599
    %v660 = vpack.c.b16 %v602, %v601
    %v661 = vpack.c.b16 %v604, %v603
    %v662 = vpack.c.b16 %v606, %v605
    %v663 = vpack.c.b16 %v608, %v607
    %v664 = vpack.c.b16 %v610, %v609
    %v665 = vpack.c.b16 %v612, %v611
    %v666 = vpack.c.b16 %v614, %v613
    %v667 = vpack.c.b16 %v616, %v615
    %v668 = vpack.c.b16 %v618, %v617
    %vm719 = vcmask 261120
    %v721 = vsel %vm719, %v412, 0
    %723 = vmatprep.subr.bf16.mxu0 0
    %724 = vmatpush1.bf16.msra.mxu0 %v619
    %725 = vmatprep.subr.bf16.mxu0 0
    %726 = vmatpush1.bf16.msra.mxu0 %v620
    %727 = vmatprep.subr.bf16.mxu0 0
    %728 = vmatpush1.bf16.msra.mxu0 %v621
    %729 = vmatprep.subr.bf16.mxu0 0
    %730 = vmatpush1.bf16.msra.mxu0 %v622
    %731 = vmatprep.subr.bf16.mxu0 0
    %732 = vmatpush1.bf16.msra.mxu0 %v623
    %733 = vmatprep.subr.bf16.mxu0 0
    %734 = vmatpush1.bf16.msra.mxu0 %v624
    %735 = vmatprep.subr.bf16.mxu0 0
    %736 = vmatpush1.bf16.msra.mxu0 %v625
    %737 = vmatprep.subr.bf16.mxu0 0
    %738 = vmatpush1.bf16.msra.mxu0 %v626
    %739 = vmatprep.subr.bf16.mxu0 0
    %740 = vmatpush1.bf16.msra.mxu0 %v627
    %741 = vmatprep.subr.bf16.mxu0 0
    %742 = vmatpush1.bf16.msra.mxu0 %v628
    %743 = vmatprep.subr.bf16.mxu0 0
    %744 = vmatpush1.bf16.msra.mxu0 %v629
    %745 = vmatprep.subr.bf16.mxu0 0
    %746 = vmatpush1.bf16.msra.mxu0 %v630
    %747 = vmatprep.subr.bf16.mxu0 0
    %748 = vmatpush1.bf16.msra.mxu0 %v631
    %749 = vmatprep.subr.bf16.mxu0 0
    %750 = vmatpush1.bf16.msra.mxu0 %v632
    %751 = vmatprep.subr.bf16.mxu0 0
    %752 = vmatpush1.bf16.msra.mxu0 %v633
    %753 = vmatprep.subr.bf16.mxu0 0
    %754 = vmatpush1.bf16.msra.mxu0 %v634
    %755 = vmatprep.mubr.bf16.mxu0 %v407
    %756 = vmatmul.mubr.bf16.gmra.mrb[0].mxu0 %v406
    %v757 = vpop.f32.mrb[0].mxu0
    %v758 = vadd.f32 %v382, %v757
    %v759 = vpop.f32.mrb[0].mxu0
    %v760 = vpop.f32.mrb[0].mxu0
    %v761 = vadd.f32 %v382, %v760
    %v762 = vpop.f32.mrb[0].mxu0
    %763 = vdwg.mxu0
    %764 = vmatprep.subr.bf16.mxu0 0
    %765 = vmatpush1.bf16.msra.mxu0 %v635
    %766 = vmatprep.subr.bf16.mxu0 0
    %767 = vmatpush1.bf16.msra.mxu0 %v636
    %768 = vmatprep.subr.bf16.mxu0 0
    %769 = vmatpush1.bf16.msra.mxu0 %v637
    %770 = vmatprep.subr.bf16.mxu0 0
    %771 = vmatpush1.bf16.msra.mxu0 %v638
    %772 = vmatprep.subr.bf16.mxu0 0
    %773 = vmatpush1.bf16.msra.mxu0 %v639
    %774 = vmatprep.subr.bf16.mxu0 0
    %775 = vmatpush1.bf16.msra.mxu0 %v640
    %776 = vmatprep.subr.bf16.mxu0 0
    %777 = vmatpush1.bf16.msra.mxu0 %v641
    %778 = vmatprep.subr.bf16.mxu0 0
    %779 = vmatpush1.bf16.msra.mxu0 %v642
    %780 = vmatprep.subr.bf16.mxu0 0
    %781 = vmatpush1.bf16.msra.mxu0 %v643
    %782 = vmatprep.subr.bf16.mxu0 0
    %783 = vmatpush1.bf16.msra.mxu0 %v644
    %784 = vmatprep.subr.bf16.mxu0 0
    %785 = vmatpush1.bf16.msra.mxu0 %v645
    %786 = vmatprep.subr.bf16.mxu0 0
    %787 = vmatpush1.bf16.msra.mxu0 %v646
    %788 = vmatprep.subr.bf16.mxu0 0
    %789 = vmatpush1.bf16.msra.mxu0 %v647
    %790 = vmatprep.subr.bf16.mxu0 0
    %791 = vmatpush1.bf16.msra.mxu0 %v648
    %792 = vmatprep.subr.bf16.mxu0 0
    %793 = vmatpush1.bf16.msra.mxu0 %v649
    %794 = vmatprep.subr.bf16.mxu0 0
    %795 = vmatpush1.bf16.msra.mxu0 %v650
    %796 = vmatprep.mubr.bf16.mxu0 %v409
    %797 = vmatmul.mubr.bf16.gmra.mrb[0].mxu0 %v408
    %v798 = vpop.f32.mrb[0].mxu0
    %v799 = vadd.f32 %v758, %v798
    %v800 = vpop.f32.mrb[0].mxu0
    %v801 = vpop.f32.mrb[0].mxu0
    %v802 = vadd.f32 %v761, %v801
    %v803 = vpop.f32.mrb[0].mxu0
    %804 = vdwg.mxu0
    %805 = vmatprep.subr.bf16.mxu0 0
    %806 = vmatpush1.bf16.msra.mxu0 %v651
    %807 = vmatprep.subr.bf16.mxu0 0
    %808 = vmatpush1.bf16.msra.mxu0 %v652
    %809 = vmatprep.subr.bf16.mxu0 0
    %810 = vmatpush1.bf16.msra.mxu0 %v653
    %811 = vmatprep.subr.bf16.mxu0 0
    %812 = vmatpush1.bf16.msra.mxu0 %v654
    %813 = vmatprep.subr.bf16.mxu0 0
    %814 = vmatpush1.bf16.msra.mxu0 %v655
    %815 = vmatprep.subr.bf16.mxu0 0
    %816 = vmatpush1.bf16.msra.mxu0 %v656
    %817 = vmatprep.subr.bf16.mxu0 0
    %818 = vmatpush1.bf16.msra.mxu0 %v657
    %819 = vmatprep.subr.bf16.mxu0 0
    %820 = vmatpush1.bf16.msra.mxu0 %v658
    %821 = vmatprep.subr.bf16.mxu0 0
    %822 = vmatpush1.bf16.msra.mxu0 %v659
    %823 = vmatprep.subr.bf16.mxu0 0
    %824 = vmatpush1.bf16.msra.mxu0 %v660
    %825 = vmatprep.subr.bf16.mxu0 0
    %826 = vmatpush1.bf16.msra.mxu0 %v661
    %827 = vmatprep.subr.bf16.mxu0 0
    %828 = vmatpush1.bf16.msra.mxu0 %v662
    %829 = vmatprep.subr.bf16.mxu0 0
    %830 = vmatpush1.bf16.msra.mxu0 %v663
    %831 = vmatprep.subr.bf16.mxu0 0
    %832 = vmatpush1.bf16.msra.mxu0 %v664
    %833 = vmatprep.subr.bf16.mxu0 0
    %834 = vmatpush1.bf16.msra.mxu0 %v665
    %835 = vmatprep.subr.bf16.mxu0 0
    %836 = vmatpush1.bf16.msra.mxu0 %v666
    %837 = vmatprep.mubr.bf16.mxu0 %v411
    %838 = vmatmul.mubr.bf16.gmra.mrb[0].mxu0 %v410
    %v839 = vpop.f32.mrb[0].mxu0
    %v840 = vadd.f32 %v799, %v839
    %v841 = vpop.f32.mrb[0].mxu0
    %v842 = vpop.f32.mrb[0].mxu0
    %v843 = vadd.f32 %v802, %v842
    %v844 = vpop.f32.mrb[0].mxu0
    %845 = vdwg.mxu0
    %846 = vmatprep.subr.bf16.mxu0 0
    %847 = vmatpush1.bf16.msra.mxu0 %v667
    %848 = vmatprep.subr.bf16.mxu0 0
    %849 = vmatpush1.bf16.msra.mxu0 %v668
    %850 = vmatprep.subr.bf16.mxu0 0
    %851 = vmatpush1.bf16.msra.mxu0 0
    %852 = vmatprep.subr.bf16.mxu0 0
    %853 = vmatpush1.bf16.msra.mxu0 0
    %854 = vmatprep.subr.bf16.mxu0 0
    %855 = vmatpush1.bf16.msra.mxu0 0
    %856 = vmatprep.subr.bf16.mxu0 0
    %857 = vmatpush1.bf16.msra.mxu0 0
    %858 = vmatprep.subr.bf16.mxu0 0
    %859 = vmatpush1.bf16.msra.mxu0 0
    %860 = vmatprep.subr.bf16.mxu0 0
    %861 = vmatpush1.bf16.msra.mxu0 0
    %862 = vmatprep.subr.bf16.mxu0 0
    %863 = vmatpush1.bf16.msra.mxu0 0
    %864 = vmatprep.subr.bf16.mxu0 0
    %865 = vmatpush1.bf16.msra.mxu0 0
    %866 = vmatprep.subr.bf16.mxu0 0
    %867 = vmatpush1.bf16.msra.mxu0 0
    %868 = vmatprep.subr.bf16.mxu0 0
    %869 = vmatpush1.bf16.msra.mxu0 0
    %870 = vmatprep.subr.bf16.mxu0 0
    %871 = vmatpush1.bf16.msra.mxu0 0
    %872 = vmatprep.subr.bf16.mxu0 0
    %873 = vmatpush1.bf16.msra.mxu0 0
    %874 = vmatprep.subr.bf16.mxu0 0
    %875 = vmatpush1.bf16.msra.mxu0 0
    %876 = vmatprep.subr.bf16.mxu0 0
    %877 = vmatpush1.bf16.msra.mxu0 0
    %878 = vmatprep.mubr.bf16.mxu0 0
    %879 = vmatmul.mubr.bf16.gmra.mrb[0].mxu0 %v721
    %v880 = vpop.f32.mrb[0].mxu0
    %v881 = vadd.f32 %v840, %v880
    %v882 = vpop.f32.mrb[0].mxu0
    %v883 = vpop.f32.mrb[0].mxu0
    %v884 = vadd.f32 %v843, %v883
    %v885 = vpop.f32.mrb[0].mxu0
    %886 = vdwg.mxu0
    %v887 = vmax.f32 %v881, 0.0
    %v888 = vmax.f32 %v884, 0.0
    %v889 = vld [vmem:[%s1] sm:$0xff]
    %v890 = vld [vmem:[%s1 + $0x8] sm:$0xff]
    %v891 = vld [vmem:[%s2] sm:$0xf]
    %v892 = vld [vmem:[%s2 + $0x4] sm:$0xf]
    %v893 = vld [vmem:[%s2 + $0x8] sm:$0xf]
    %v894 = vld [vmem:[%s2 + $0xc] sm:$0xf]
    %v895 = vld [vmem:[%s2 + $0x10] sm:$0xf]
    %v896 = vld [vmem:[%s2 + $0x14] sm:$0xf]
    %v897 = vld [vmem:[%s2 + $0x18] sm:$0xf]
    %v898 = vld [vmem:[%s2 + $0x1c] sm:$0xf]
    %s899 = smul.u32 4, 128
    %s900 = smul.u32 %s899, 1
    %s901 = sshll.u32 %s900, 4
    %902 = dma.done [#allocation4], %s901
    %v903 = vld [vmem:[%s6] sm:$0x7]
    %vm906 = vcmask 1040384
    %v907 = vrot.slane %v887, 7
    %v908 = vrot.slane %v888, 7
    %v909 = vsel %vm906, %v907, %v908
    %v912 = vsel %vm906, 0.0, %v907
    %914 = vset.pattern.permute.xlu0 0
    %915 = vperm.xlu0 %914, %v889
    %v916 = vpop.permute.xlu0 %915
    %919 = vset.pattern.permute.xlu0 0
    %920 = vperm.xlu0 %919, %v890
    %v921 = vpop.permute.xlu0 %920
    %v923 = vmul.f32 %v912, %v916
    %v924 = vmul.f32 %v909, %v921
    %vm925 = vcmask 1046528
    %v926 = vrot.slane %v887, 1
    %v927 = vrot.slane %v888, 1
    %v928 = vsel %vm925, %v926, %v927
    %v931 = vsel %vm925, %v927, 0.0
    %932 = vset.pattern.permute.xlu0 1
    %933 = vperm.xlu0 %932, %v889
    %v934 = vpop.permute.xlu0 %933
    %936 = vset.pattern.permute.xlu0 1
    %937 = vperm.xlu0 %936, %v890
    %v938 = vpop.permute.xlu0 %937
    %v940 = vmul.f32 %v928, %v934
    %v941 = vmul.f32 %v931, %v938
    %v942 = vpack.c.bf16 %v924, %v923
    %v943 = vld [vmem:[#allocation2] sm:$0xff]
    %v944 = vld [vmem:[#allocation2 + $0x8] sm:$0xff]
    %v945 = vld [vmem:[#allocation2 + $0x10] sm:$0xff]
    %v946 = vld [vmem:[#allocation2 + $0x18] sm:$0xff]
    %v947 = vld [vmem:[#allocation2 + $0x20] sm:$0xff]
    %v948 = vld [vmem:[#allocation2 + $0x28] sm:$0xff]
    %v949 = vld [vmem:[#allocation2 + $0x30] sm:$0xff]
    %v950 = vld [vmem:[#allocation2 + $0x38] sm:$0xff]
    %v951 = vpack.c.bf16 %v888, %v887
    %v952 = vld [vmem:[#allocation2 + $0x40] sm:$0xff]
    %v953 = vld [vmem:[#allocation2 + $0x48] sm:$0xff]
    %v954 = vld [vmem:[#allocation2 + $0x50] sm:$0xff]
    %v955 = vld [vmem:[#allocation2 + $0x58] sm:$0xff]
    %v956 = vld [vmem:[#allocation2 + $0x60] sm:$0xff]
    %v957 = vld [vmem:[#allocation2 + $0x68] sm:$0xff]
    %v958 = vld [vmem:[#allocation2 + $0x70] sm:$0xff]
    %v959 = vld [vmem:[#allocation2 + $0x78] sm:$0xff]
    %960 = vmatprep.subr.bf16.mxu0 0
    %961 = vmatpush1.bf16.msra.mxu0 %v952
    %962 = vmatprep.subr.bf16.mxu0 0
    %963 = vmatpush1.bf16.msra.mxu0 %v953
    %964 = vmatprep.subr.bf16.mxu0 0
    %965 = vmatpush1.bf16.msra.mxu0 %v954
    %966 = vmatprep.subr.bf16.mxu0 0
    %967 = vmatpush1.bf16.msra.mxu0 %v955
    %968 = vmatprep.subr.bf16.mxu0 0
    %969 = vmatpush1.bf16.msra.mxu0 %v956
    %970 = vmatprep.subr.bf16.mxu0 0
    %971 = vmatpush1.bf16.msra.mxu0 %v957
    %972 = vmatprep.subr.bf16.mxu0 0
    %973 = vmatpush1.bf16.msra.mxu0 %v958
    %974 = vmatprep.subr.bf16.mxu0 0
    %975 = vmatpush1.bf16.msra.mxu0 %v959
    %976 = vmatprep.subr.bf16.mxu0 0
    %977 = vmatpush1.bf16.msra.mxu0 0
    %978 = vmatprep.subr.bf16.mxu0 0
    %979 = vmatpush1.bf16.msra.mxu0 0
    %980 = vmatprep.subr.bf16.mxu0 0
    %981 = vmatpush1.bf16.msra.mxu0 0
    %982 = vmatprep.subr.bf16.mxu0 0
    %983 = vmatpush1.bf16.msra.mxu0 0
    %984 = vmatprep.subr.bf16.mxu0 0
    %985 = vmatpush1.bf16.msra.mxu0 0
    %986 = vmatprep.subr.bf16.mxu0 0
    %987 = vmatpush1.bf16.msra.mxu0 0
    %988 = vmatprep.subr.bf16.mxu0 0
    %989 = vmatpush1.bf16.msra.mxu0 0
    %990 = vmatprep.subr.bf16.mxu0 0
    %991 = vmatpush1.bf16.msra.mxu0 0
    %992 = vmatprep.mubr.bf16.mxu0 0
    %993 = vmatmul.mubr.bf16.gmra.mrb[0].mxu0 %v951
    %v994 = vpop.f32.mrb[0].mxu0
    %v995 = vadd.f32 0.0, %v994
    %v996 = vpop.f32.mrb[0].mxu0
    %v997 = vpop.f32.mrb[0].mxu0
    %v998 = vadd.f32 0.0, %v997
    %v999 = vpop.f32.mrb[0].mxu0
    %1000 = vdwg.mxu0
    %1001 = vmatprep.subr.bf16.mxu0 0
    %1002 = vmatpush1.bf16.msra.mxu0 %v943
    %1003 = vmatprep.subr.bf16.mxu0 0
    %1004 = vmatpush1.bf16.msra.mxu0 %v944
    %1005 = vmatprep.subr.bf16.mxu0 0
    %1006 = vmatpush1.bf16.msra.mxu0 %v945
    %1007 = vmatprep.subr.bf16.mxu0 0
    %1008 = vmatpush1.bf16.msra.mxu0 %v946
    %1009 = vmatprep.subr.bf16.mxu0 0
    %1010 = vmatpush1.bf16.msra.mxu0 %v947
    %1011 = vmatprep.subr.bf16.mxu0 0
    %1012 = vmatpush1.bf16.msra.mxu0 %v948
    %1013 = vmatprep.subr.bf16.mxu0 0
    %1014 = vmatpush1.bf16.msra.mxu0 %v949
    %1015 = vmatprep.subr.bf16.mxu0 0
    %1016 = vmatpush1.bf16.msra.mxu0 %v950
    %1017 = vmatprep.subr.bf16.mxu0 0
    %1018 = vmatpush1.bf16.msra.mxu0 0
    %1019 = vmatprep.subr.bf16.mxu0 0
    %1020 = vmatpush1.bf16.msra.mxu0 0
    %1021 = vmatprep.subr.bf16.mxu0 0
    %1022 = vmatpush1.bf16.msra.mxu0 0
    %1023 = vmatprep.subr.bf16.mxu0 0
    %1024 = vmatpush1.bf16.msra.mxu0 0
    %1025 = vmatprep.subr.bf16.mxu0 0
    %1026 = vmatpush1.bf16.msra.mxu0 0
    %1027 = vmatprep.subr.bf16.mxu0 0
    %1028 = vmatpush1.bf16.msra.mxu0 0
    %1029 = vmatprep.subr.bf16.mxu0 0
    %1030 = vmatpush1.bf16.msra.mxu0 0
    %1031 = vmatprep.subr.bf16.mxu0 0
    %1032 = vmatpush1.bf16.msra.mxu0 0
    %1033 = vmatprep.mubr.bf16.mxu0 0
    %1034 = vmatmul.mubr.bf16.gmra.mrb[0].mxu0 %v942
    %v1035 = vpop.f32.mrb[0].mxu0
    %v1036 = vadd.f32 %v995, %v1035
    %v1037 = vpop.f32.mrb[0].mxu0
    %v1038 = vpop.f32.mrb[0].mxu0
    %v1039 = vadd.f32 %v998, %v1038
    %v1040 = vpop.f32.mrb[0].mxu0
    %1041 = vdwg.mxu0
    %v1042 = vpack.c.bf16 %v941, %v940
    %v1043 = vld [vmem:[#allocation2 + $0x80] sm:$0xff]
    %v1044 = vld [vmem:[#allocation2 + $0x88] sm:$0xff]
    %v1045 = vld [vmem:[#allocation2 + $0x90] sm:$0xff]
    %v1046 = vld [vmem:[#allocation2 + $0x98] sm:$0xff]
    %v1047 = vld [vmem:[#allocation2 + $0xa0] sm:$0xff]
    %v1048 = vld [vmem:[#allocation2 + $0xa8] sm:$0xff]
    %v1049 = vld [vmem:[#allocation2 + $0xb0] sm:$0xff]
    %v1050 = vld [vmem:[#allocation2 + $0xb8] sm:$0xff]
    %1051 = vmatprep.subr.bf16.mxu0 0
    %1052 = vmatpush1.bf16.msra.mxu0 %v1043
    %1053 = vmatprep.subr.bf16.mxu0 0
    %1054 = vmatpush1.bf16.msra.mxu0 %v1044
    %1055 = vmatprep.subr.bf16.mxu0 0
    %1056 = vmatpush1.bf16.msra.mxu0 %v1045
    %1057 = vmatprep.subr.bf16.mxu0 0
    %1058 = vmatpush1.bf16.msra.mxu0 %v1046
    %1059 = vmatprep.subr.bf16.mxu0 0
    %1060 = vmatpush1.bf16.msra.mxu0 %v1047
    %1061 = vmatprep.subr.bf16.mxu0 0
    %1062 = vmatpush1.bf16.msra.mxu0 %v1048
    %1063 = vmatprep.subr.bf16.mxu0 0
    %1064 = vmatpush1.bf16.msra.mxu0 %v1049
    %1065 = vmatprep.subr.bf16.mxu0 0
    %1066 = vmatpush1.bf16.msra.mxu0 %v1050
    %1067 = vmatprep.subr.bf16.mxu0 0
    %1068 = vmatpush1.bf16.msra.mxu0 0
    %1069 = vmatprep.subr.bf16.mxu0 0
    %1070 = vmatpush1.bf16.msra.mxu0 0
    %1071 = vmatprep.subr.bf16.mxu0 0
    %1072 = vmatpush1.bf16.msra.mxu0 0
    %1073 = vmatprep.subr.bf16.mxu0 0
    %1074 = vmatpush1.bf16.msra.mxu0 0
    %1075 = vmatprep.subr.bf16.mxu0 0
    %1076 = vmatpush1.bf16.msra.mxu0 0
    %1077 = vmatprep.subr.bf16.mxu0 0
    %1078 = vmatpush1.bf16.msra.mxu0 0
    %1079 = vmatprep.subr.bf16.mxu0 0
    %1080 = vmatpush1.bf16.msra.mxu0 0
    %1081 = vmatprep.subr.bf16.mxu0 0
    %1082 = vmatpush1.bf16.msra.mxu0 0
    %1083 = vmatprep.mubr.bf16.mxu0 0
    %1084 = vmatmul.mubr.bf16.gmra.mrb[0].mxu0 %v1042
    %v1085 = vpop.f32.mrb[0].mxu0
    %v1086 = vadd.f32 0.0, %v1085
    %v1087 = vpop.f32.mrb[0].mxu0
    %v1088 = vpop.f32.mrb[0].mxu0
    %v1089 = vadd.f32 0.0, %v1088
    %v1090 = vpop.f32.mrb[0].mxu0
    %1091 = vdwg.mxu0
    %v1092 = vadd.f32 %v1036, %v1086
    %v1093 = vadd.f32 %v1039, %v1089
    %v1094 = vlaneseq
    %v1095 = vshrl.u32 %v1094, 7
    %v1096 = vsub.s32 0, %v1095
    %v1097 = vrot.slane %v903, %v1096
    %v1098 = vadd.f32 %v1092, %v1097
    %v1099 = vadd.f32 %v1093, %v1097
    %v1100 = vmax.f32 %v1098, 0.0
    %v1101 = vmax.f32 %v1099, 0.0
    %v1102 = vpack.c.bf16 %v1101, %v1100
    %v1103 = vld [vmem:[#allocation2 + $0xc0] sm:$0xff]
    %v1104 = vld [vmem:[#allocation2 + $0xc8] sm:$0xff]
    %v1105 = vld [vmem:[#allocation2 + $0xd0] sm:$0xff]
    %v1106 = vld [vmem:[#allocation2 + $0xd8] sm:$0xff]
    %v1107 = vld [vmem:[#allocation2 + $0xe0] sm:$0xff]
    %v1108 = vld [vmem:[#allocation2 + $0xe8] sm:$0xff]
    %v1109 = vld [vmem:[#allocation2 + $0xf0] sm:$0xff]
    %v1110 = vld [vmem:[#allocation2 + $0xf8] sm:$0xff]
    %v1111 = vlaneseq
    %v1112 = vshrl.u32 %v1111, 7
    %v1113 = vsub.s32 1, %v1112
    %v1114 = vrot.slane %v903, %v1113
    %1115 = vmatprep.subr.bf16.mxu0 0
    %1116 = vmatpush1.bf16.msra.mxu0 %v1103
    %1117 = vmatprep.subr.bf16.mxu0 0
    %1118 = vmatpush1.bf16.msra.mxu0 %v1104
    %1119 = vmatprep.subr.bf16.mxu0 0
    %1120 = vmatpush1.bf16.msra.mxu0 %v1105
    %1121 = vmatprep.subr.bf16.mxu0 0
    %1122 = vmatpush1.bf16.msra.mxu0 %v1106
    %1123 = vmatprep.subr.bf16.mxu0 0
    %1124 = vmatpush1.bf16.msra.mxu0 %v1107
    %1125 = vmatprep.subr.bf16.mxu0 0
    %1126 = vmatpush1.bf16.msra.mxu0 %v1108
    %1127 = vmatprep.subr.bf16.mxu0 0
    %1128 = vmatpush1.bf16.msra.mxu0 %v1109
    %1129 = vmatprep.subr.bf16.mxu0 0
    %1130 = vmatpush1.bf16.msra.mxu0 %v1110
    %1131 = vmatprep.subr.bf16.mxu0 0
    %1132 = vmatpush1.bf16.msra.mxu0 0
    %1133 = vmatprep.subr.bf16.mxu0 0
    %1134 = vmatpush1.bf16.msra.mxu0 0
    %1135 = vmatprep.subr.bf16.mxu0 0
    %1136 = vmatpush1.bf16.msra.mxu0 0
    %1137 = vmatprep.subr.bf16.mxu0 0
    %1138 = vmatpush1.bf16.msra.mxu0 0
    %1139 = vmatprep.subr.bf16.mxu0 0
    %1140 = vmatpush1.bf16.msra.mxu0 0
    %1141 = vmatprep.subr.bf16.mxu0 0
    %1142 = vmatpush1.bf16.msra.mxu0 0
    %1143 = vmatprep.subr.bf16.mxu0 0
    %1144 = vmatpush1.bf16.msra.mxu0 0
    %1145 = vmatprep.subr.bf16.mxu0 0
    %1146 = vmatpush1.bf16.msra.mxu0 0
    %1147 = vmatprep.mubr.bf16.mxu0 0
    %1148 = vmatmul.mubr.bf16.gmra.mrb[0].mxu0 %v1102
    %v1149 = vpop.f32.mrb[0].mxu0
    %v1150 = vadd.f32 %v1114, %v1149
    %v1151 = vpop.f32.mrb[0].mxu0
    %v1152 = vpop.f32.mrb[0].mxu0
    %v1153 = vadd.f32 %v1114, %v1152
    %v1154 = vpop.f32.mrb[0].mxu0
    %1155 = vdwg.mxu0
    %v1156 = vpack.c.bf16 %v1153, %v1150
    %v1165 = vunpack.c.l.b16 %v891
    %v1166 = vunpack.c.l.b16 %v892
    %v1167 = vunpack.c.l.b16 %v893
    %v1168 = vunpack.c.l.b16 %v894
    %v1169 = vunpack.c.l.b16 %v895
    %v1170 = vunpack.c.l.b16 %v896
    %v1171 = vunpack.c.l.b16 %v897
    %v1172 = vunpack.c.l.b16 %v898
    %v1173 = vpack.c.b16 %v1166, %v1165
    %v1174 = vpack.c.b16 %v1168, %v1167
    %v1175 = vpack.c.b16 %v1170, %v1169
    %v1176 = vpack.c.b16 %v1172, %v1171
    %vm1177 = vcmask 130048
    %v1179 = vsel %vm1177, %v1173, 0
    %v1182 = vsel %vm1177, %v1174, 0
    %v1185 = vsel %vm1177, %v1175, 0
    %v1188 = vsel %vm1177, %v1176, 0
    %1190 = vmatprep.subr.bf16.mxu0 0
    %1191 = vmatpush1.bf16.msra.mxu0 %v1156
    %1192 = vmatprep.subr.bf16.mxu0 0
    %1193 = vmatpush1.bf16.msra.mxu0 0
    %1194 = vmatprep.subr.bf16.mxu0 0
    %1195 = vmatpush1.bf16.msra.mxu0 0
    %1196 = vmatprep.subr.bf16.mxu0 0
    %1197 = vmatpush1.bf16.msra.mxu0 0
    %1198 = vmatprep.subr.bf16.mxu0 0
    %1199 = vmatpush1.bf16.msra.mxu0 0
    %1200 = vmatprep.subr.bf16.mxu0 0
    %1201 = vmatpush1.bf16.msra.mxu0 0
    %1202 = vmatprep.subr.bf16.mxu0 0
    %1203 = vmatpush1.bf16.msra.mxu0 0
    %1204 = vmatprep.subr.bf16.mxu0 0
    %1205 = vmatpush1.bf16.msra.mxu0 0
    %1206 = vmatprep.subr.bf16.mxu0 0
    %1207 = vmatpush1.bf16.msra.mxu0 0
    %1208 = vmatprep.subr.bf16.mxu0 0
    %1209 = vmatpush1.bf16.msra.mxu0 0
    %1210 = vmatprep.subr.bf16.mxu0 0
    %1211 = vmatpush1.bf16.msra.mxu0 0
    %1212 = vmatprep.subr.bf16.mxu0 0
    %1213 = vmatpush1.bf16.msra.mxu0 0
    %1214 = vmatprep.subr.bf16.mxu0 0
    %1215 = vmatpush1.bf16.msra.mxu0 0
    %1216 = vmatprep.subr.bf16.mxu0 0
    %1217 = vmatpush1.bf16.msra.mxu0 0
    %1218 = vmatprep.subr.bf16.mxu0 0
    %1219 = vmatpush1.bf16.msra.mxu0 0
    %1220 = vmatprep.subr.bf16.mxu0 0
    %1221 = vmatpush1.bf16.msra.mxu0 0
    %1222 = vmatprep.mubr.bf16.mxu0 0
    %1223 = vmatmul.mubr.bf16.gmra.mrb[0].mxu0 %v1179
    %v1224 = vpop.f32.mrb[0].mxu0
    %v1225 = vadd.f32 0.0, %v1224
    %v1226 = vpop.f32.mrb[0].mxu0
    %v1227 = vpop.f32.mrb[0].mxu0
    %v1228 = vadd.f32 0.0, %v1227
    %v1229 = vpop.f32.mrb[0].mxu0
    %1230 = vmatprep.mubr.bf16.mxu0 0
    %1231 = vmatmul.mubr.bf16.gmra.mrb[0].mxu0 %v1182
    %v1232 = vpop.f32.mrb[0].mxu0
    %v1233 = vadd.f32 0.0, %v1232
    %v1234 = vpop.f32.mrb[0].mxu0
    %v1235 = vpop.f32.mrb[0].mxu0
    %v1236 = vadd.f32 0.0, %v1235
    %v1237 = vpop.f32.mrb[0].mxu0
    %1238 = vmatprep.mubr.bf16.mxu0 0
    %1239 = vmatmul.mubr.bf16.gmra.mrb[0].mxu0 %v1185
    %v1240 = vpop.f32.mrb[0].mxu0
    %v1241 = vadd.f32 0.0, %v1240
    %v1242 = vpop.f32.mrb[0].mxu0
    %v1243 = vpop.f32.mrb[0].mxu0
    %v1244 = vadd.f32 0.0, %v1243
    %v1245 = vpop.f32.mrb[0].mxu0
    %1246 = vmatprep.mubr.bf16.mxu0 0
    %1247 = vmatmul.mubr.bf16.gmra.mrb[0].mxu0 %v1188
    %v1248 = vpop.f32.mrb[0].mxu0
    %v1249 = vadd.f32 0.0, %v1248
    %v1250 = vpop.f32.mrb[0].mxu0
    %v1251 = vpop.f32.mrb[0].mxu0
    %v1252 = vadd.f32 0.0, %v1251
    %v1253 = vpop.f32.mrb[0].mxu0
    %1254 = vdwg.mxu0
    %v1255 = vpack.c.bf16 %v1228, %v1225
    %v1256 = vpack.c.bf16 %v1236, %v1233
    %v1257 = vpack.c.bf16 %v1244, %v1241
    %v1258 = vpack.c.bf16 %v1252, %v1249
    %v1259 = vld [vmem:[#allocation2 + $0x100] sm:$0xff]
    %v1260 = vld [vmem:[#allocation2 + $0x108] sm:$0xff]
    %v1261 = vld [vmem:[#allocation2 + $0x110] sm:$0xff]
    %v1262 = vld [vmem:[#allocation2 + $0x118] sm:$0xff]
    %v1263 = vld [vmem:[#allocation2 + $0x120] sm:$0xff]
    %v1264 = vld [vmem:[#allocation2 + $0x128] sm:$0xff]
    %v1265 = vld [vmem:[#allocation2 + $0x130] sm:$0xff]
    %v1266 = vld [vmem:[#allocation2 + $0x138] sm:$0xff]
    %v1267 = vld [vmem:[#allocation2 + $0x140] sm:$0xff]
    %v1268 = vld [vmem:[#allocation2 + $0x148] sm:$0xff]
    %v1269 = vld [vmem:[#allocation2 + $0x150] sm:$0xff]
    %v1270 = vld [vmem:[#allocation2 + $0x158] sm:$0xff]
    %v1271 = vld [vmem:[#allocation2 + $0x160] sm:$0xff]
    %v1272 = vld [vmem:[#allocation2 + $0x168] sm:$0xff]
    %v1273 = vld [vmem:[#allocation2 + $0x170] sm:$0xff]
    %v1274 = vld [vmem:[#allocation2 + $0x178] sm:$0xff]
    %v1275 = vld [vmem:[#allocation2 + $0x180] sm:$0xff]
    %v1276 = vld [vmem:[#allocation2 + $0x188] sm:$0xff]
    %v1277 = vld [vmem:[#allocation2 + $0x190] sm:$0xff]
    %v1278 = vld [vmem:[#allocation2 + $0x198] sm:$0xff]
    %v1279 = vld [vmem:[#allocation2 + $0x1a0] sm:$0xff]
    %v1280 = vld [vmem:[#allocation2 + $0x1a8] sm:$0xff]
    %v1281 = vld [vmem:[#allocation2 + $0x1b0] sm:$0xff]
    %v1282 = vld [vmem:[#allocation2 + $0x1b8] sm:$0xff]
    %v1283 = vld [vmem:[#allocation2 + $0x1c0] sm:$0xff]
    %v1284 = vld [vmem:[#allocation2 + $0x1c8] sm:$0xff]
    %v1285 = vld [vmem:[#allocation2 + $0x1d0] sm:$0xff]
    %v1286 = vld [vmem:[#allocation2 + $0x1d8] sm:$0xff]
    %v1287 = vld [vmem:[#allocation2 + $0x1e0] sm:$0xff]
    %v1288 = vld [vmem:[#allocation2 + $0x1e8] sm:$0xff]
    %v1289 = vld [vmem:[#allocation2 + $0x1f0] sm:$0xff]
    %v1290 = vld [vmem:[#allocation2 + $0x1f8] sm:$0xff]
    %v1291 = vlaneseq
    %v1292 = vshrl.u32 %v1291, 7
    %v1293 = vsub.s32 2, %v1292
    %v1294 = vrot.slane %v903, %v1293
    %1295 = vmatprep.subr.bf16.mxu0 0
    %1296 = vmatpush1.bf16.msra.mxu0 %v1259
    %1297 = vmatprep.subr.bf16.mxu0 0
    %1298 = vmatpush1.bf16.msra.mxu0 %v1260
    %1299 = vmatprep.subr.bf16.mxu0 0
    %1300 = vmatpush1.bf16.msra.mxu0 %v1261
    %1301 = vmatprep.subr.bf16.mxu0 0
    %1302 = vmatpush1.bf16.msra.mxu0 %v1262
    %1303 = vmatprep.subr.bf16.mxu0 0
    %1304 = vmatpush1.bf16.msra.mxu0 %v1263
    %1305 = vmatprep.subr.bf16.mxu0 0
    %1306 = vmatpush1.bf16.msra.mxu0 %v1264
    %1307 = vmatprep.subr.bf16.mxu0 0
    %1308 = vmatpush1.bf16.msra.mxu0 %v1265
    %1309 = vmatprep.subr.bf16.mxu0 0
    %1310 = vmatpush1.bf16.msra.mxu0 %v1266
    %1311 = vmatprep.subr.bf16.mxu0 0
    %1312 = vmatpush1.bf16.msra.mxu0 %v1267
    %1313 = vmatprep.subr.bf16.mxu0 0
    %1314 = vmatpush1.bf16.msra.mxu0 %v1268
    %1315 = vmatprep.subr.bf16.mxu0 0
    %1316 = vmatpush1.bf16.msra.mxu0 %v1269
    %1317 = vmatprep.subr.bf16.mxu0 0
    %1318 = vmatpush1.bf16.msra.mxu0 %v1270
    %1319 = vmatprep.subr.bf16.mxu0 0
    %1320 = vmatpush1.bf16.msra.mxu0 %v1271
    %1321 = vmatprep.subr.bf16.mxu0 0
    %1322 = vmatpush1.bf16.msra.mxu0 %v1272
    %1323 = vmatprep.subr.bf16.mxu0 0
    %1324 = vmatpush1.bf16.msra.mxu0 %v1273
    %1325 = vmatprep.subr.bf16.mxu0 0
    %1326 = vmatpush1.bf16.msra.mxu0 %v1274
    %1327 = vmatprep.mubr.bf16.mxu0 %v1256
    %1328 = vmatmul.mubr.bf16.gmra.mrb[0].mxu0 %v1255
    %v1329 = vpop.f32.mrb[0].mxu0
    %v1330 = vadd.f32 %v1294, %v1329
    %v1331 = vpop.f32.mrb[0].mxu0
    %v1332 = vpop.f32.mrb[0].mxu0
    %v1333 = vadd.f32 %v1294, %v1332
    %v1334 = vpop.f32.mrb[0].mxu0
    %1335 = vdwg.mxu0
    %1336 = vmatprep.subr.bf16.mxu0 0
    %1337 = vmatpush1.bf16.msra.mxu0 %v1275
    %1338 = vmatprep.subr.bf16.mxu0 0
    %1339 = vmatpush1.bf16.msra.mxu0 %v1276
    %1340 = vmatprep.subr.bf16.mxu0 0
    %1341 = vmatpush1.bf16.msra.mxu0 %v1277
    %1342 = vmatprep.subr.bf16.mxu0 0
    %1343 = vmatpush1.bf16.msra.mxu0 %v1278
    %1344 = vmatprep.subr.bf16.mxu0 0
    %1345 = vmatpush1.bf16.msra.mxu0 %v1279
    %1346 = vmatprep.subr.bf16.mxu0 0
    %1347 = vmatpush1.bf16.msra.mxu0 %v1280
    %1348 = vmatprep.subr.bf16.mxu0 0
    %1349 = vmatpush1.bf16.msra.mxu0 %v1281
    %1350 = vmatprep.subr.bf16.mxu0 0
    %1351 = vmatpush1.bf16.msra.mxu0 %v1282
    %1352 = vmatprep.subr.bf16.mxu0 0
    %1353 = vmatpush1.bf16.msra.mxu0 %v1283
    %1354 = vmatprep.subr.bf16.mxu0 0
    %1355 = vmatpush1.bf16.msra.mxu0 %v1284
    %1356 = vmatprep.subr.bf16.mxu0 0
    %1357 = vmatpush1.bf16.msra.mxu0 %v1285
    %1358 = vmatprep.subr.bf16.mxu0 0
    %1359 = vmatpush1.bf16.msra.mxu0 %v1286
    %1360 = vmatprep.subr.bf16.mxu0 0
    %1361 = vmatpush1.bf16.msra.mxu0 %v1287
    %1362 = vmatprep.subr.bf16.mxu0 0
    %1363 = vmatpush1.bf16.msra.mxu0 %v1288
    %1364 = vmatprep.subr.bf16.mxu0 0
    %1365 = vmatpush1.bf16.msra.mxu0 %v1289
    %1366 = vmatprep.subr.bf16.mxu0 0
    %1367 = vmatpush1.bf16.msra.mxu0 %v1290
    %1368 = vmatprep.mubr.bf16.mxu0 %v1258
    %1369 = vmatmul.mubr.bf16.gmra.mrb[0].mxu0 %v1257
    %v1370 = vpop.f32.mrb[0].mxu0
    %v1371 = vadd.f32 %v1330, %v1370
    %v1372 = vpop.f32.mrb[0].mxu0
    %v1373 = vpop.f32.mrb[0].mxu0
    %v1374 = vadd.f32 %v1333, %v1373
    %v1375 = vpop.f32.mrb[0].mxu0
    %1376 = vdwg.mxu0
    %v1377 = vadd.f32 %v887, %v1371
    %v1378 = vadd.f32 %v888, %v1374
    %v1379 = vmax.f32 %v1377, 0.0
    %v1380 = vmax.f32 %v1378, 0.0
    %s1381 = sshll.u32 %s900, 4
    %1382 = dma.done %s66, %s1381
    %s1383 = scalar_lea.vmem %s6, 4
    %v1384 = vld [vmem:[%s1383] sm:$0x7]
    %v1387 = vrot.slane %v1379, 7
    %v1388 = vrot.slane %v1380, 7
    %v1389 = vsel %vm906, %v1387, %v1388
    %v1392 = vsel %vm906, 0.0, %v1387
    %v1393 = vmul.f32 %v1392, %v916
    %v1394 = vmul.f32 %v1389, %v921
    %v1395 = vrot.slane %v1379, 1
    %v1396 = vrot.slane %v1380, 1
    %v1397 = vsel %vm925, %v1395, %v1396
    %v1400 = vsel %vm925, %v1396, 0.0
    %v1401 = vmul.f32 %v1397, %v934
    %v1402 = vmul.f32 %v1400, %v938
    %v1403 = vpack.c.bf16 %v1394, %v1393
    %v1404 = vld [vmem:[%s65] sm:$0xff]
    %v1405 = vld [vmem:[%s65 + $0x8] sm:$0xff]
    %v1406 = vld [vmem:[%s65 + $0x10] sm:$0xff]
    %v1407 = vld [vmem:[%s65 + $0x18] sm:$0xff]
    %v1408 = vld [vmem:[%s65 + $0x20] sm:$0xff]
    %v1409 = vld [vmem:[%s65 + $0x28] sm:$0xff]
    %v1410 = vld [vmem:[%s65 + $0x30] sm:$0xff]
    %v1411 = vld [vmem:[%s65 + $0x38] sm:$0xff]
    %v1412 = vpack.c.bf16 %v1380, %v1379
    %v1413 = vld [vmem:[%s65 + $0x40] sm:$0xff]
    %v1414 = vld [vmem:[%s65 + $0x48] sm:$0xff]
    %v1415 = vld [vmem:[%s65 + $0x50] sm:$0xff]
    %v1416 = vld [vmem:[%s65 + $0x58] sm:$0xff]
    %v1417 = vld [vmem:[%s65 + $0x60] sm:$0xff]
    %v1418 = vld [vmem:[%s65 + $0x68] sm:$0xff]
    %v1419 = vld [vmem:[%s65 + $0x70] sm:$0xff]
    %v1420 = vld [vmem:[%s65 + $0x78] sm:$0xff]
    %1421 = vmatprep.subr.bf16.mxu0 0
    %1422 = vmatpush1.bf16.msra.mxu0 %v1413
    %1423 = vmatprep.subr.bf16.mxu0 0
    %1424 = vmatpush1.bf16.msra.mxu0 %v1414
    %1425 = vmatprep.subr.bf16.mxu0 0
    %1426 = vmatpush1.bf16.msra.mxu0 %v1415
    %1427 = vmatprep.subr.bf16.mxu0 0
    %1428 = vmatpush1.bf16.msra.mxu0 %v1416
    %1429 = vmatprep.subr.bf16.mxu0 0
    %1430 = vmatpush1.bf16.msra.mxu0 %v1417
    %1431 = vmatprep.subr.bf16.mxu0 0
    %1432 = vmatpush1.bf16.msra.mxu0 %v1418
    %1433 = vmatprep.subr.bf16.mxu0 0
    %1434 = vmatpush1.bf16.msra.mxu0 %v1419
    %1435 = vmatprep.subr.bf16.mxu0 0
    %1436 = vmatpush1.bf16.msra.mxu0 %v1420
    %1437 = vmatprep.subr.bf16.mxu0 0
    %1438 = vmatpush1.bf16.msra.mxu0 0
    %1439 = vmatprep.subr.bf16.mxu0 0
    %1440 = vmatpush1.bf16.msra.mxu0 0
    %1441 = vmatprep.subr.bf16.mxu0 0
    %1442 = vmatpush1.bf16.msra.mxu0 0
    %1443 = vmatprep.subr.bf16.mxu0 0
    %1444 = vmatpush1.bf16.msra.mxu0 0
    %1445 = vmatprep.subr.bf16.mxu0 0
    %1446 = vmatpush1.bf16.msra.mxu0 0
    %1447 = vmatprep.subr.bf16.mxu0 0
    %1448 = vmatpush1.bf16.msra.mxu0 0
    %1449 = vmatprep.subr.bf16.mxu0 0
    %1450 = vmatpush1.bf16.msra.mxu0 0
    %1451 = vmatprep.subr.bf16.mxu0 0
    %1452 = vmatpush1.bf16.msra.mxu0 0
    %1453 = vmatprep.mubr.bf16.mxu0 0
    %1454 = vmatmul.mubr.bf16.gmra.mrb[0].mxu0 %v1412
    %v1455 = vpop.f32.mrb[0].mxu0
    %v1456 = vadd.f32 0.0, %v1455
    %v1457 = vpop.f32.mrb[0].mxu0
    %v1458 = vpop.f32.mrb[0].mxu0
    %v1459 = vadd.f32 0.0, %v1458
    %v1460 = vpop.f32.mrb[0].mxu0
    %1461 = vdwg.mxu0
    %1462 = vmatprep.subr.bf16.mxu0 0
    %1463 = vmatpush1.bf16.msra.mxu0 %v1404
    %1464 = vmatprep.subr.bf16.mxu0 0
    %1465 = vmatpush1.bf16.msra.mxu0 %v1405
    %1466 = vmatprep.subr.bf16.mxu0 0
    %1467 = vmatpush1.bf16.msra.mxu0 %v1406
    %1468 = vmatprep.subr.bf16.mxu0 0
    %1469 = vmatpush1.bf16.msra.mxu0 %v1407
    %1470 = vmatprep.subr.bf16.mxu0 0
    %1471 = vmatpush1.bf16.msra.mxu0 %v1408
    %1472 = vmatprep.subr.bf16.mxu0 0
    %1473 = vmatpush1.bf16.msra.mxu0 %v1409
    %1474 = vmatprep.subr.bf16.mxu0 0
    %1475 = vmatpush1.bf16.msra.mxu0 %v1410
    %1476 = vmatprep.subr.bf16.mxu0 0
    %1477 = vmatpush1.bf16.msra.mxu0 %v1411
    %1478 = vmatprep.subr.bf16.mxu0 0
    %1479 = vmatpush1.bf16.msra.mxu0 0
    %1480 = vmatprep.subr.bf16.mxu0 0
    %1481 = vmatpush1.bf16.msra.mxu0 0
    %1482 = vmatprep.subr.bf16.mxu0 0
    %1483 = vmatpush1.bf16.msra.mxu0 0
    %1484 = vmatprep.subr.bf16.mxu0 0
    %1485 = vmatpush1.bf16.msra.mxu0 0
    %1486 = vmatprep.subr.bf16.mxu0 0
    %1487 = vmatpush1.bf16.msra.mxu0 0
    %1488 = vmatprep.subr.bf16.mxu0 0
    %1489 = vmatpush1.bf16.msra.mxu0 0
    %1490 = vmatprep.subr.bf16.mxu0 0
    %1491 = vmatpush1.bf16.msra.mxu0 0
    %1492 = vmatprep.subr.bf16.mxu0 0
    %1493 = vmatpush1.bf16.msra.mxu0 0
    %1494 = vmatprep.mubr.bf16.mxu0 0
    %1495 = vmatmul.mubr.bf16.gmra.mrb[0].mxu0 %v1403
    %v1496 = vpop.f32.mrb[0].mxu0
    %v1497 = vadd.f32 %v1456, %v1496
    %v1498 = vpop.f32.mrb[0].mxu0
    %v1499 = vpop.f32.mrb[0].mxu0
    %v1500 = vadd.f32 %v1459, %v1499
    %v1501 = vpop.f32.mrb[0].mxu0
    %1502 = vdwg.mxu0
    %v1503 = vpack.c.bf16 %v1402, %v1401
    %v1504 = vld [vmem:[%s65 + $0x80] sm:$0xff]
    %v1505 = vld [vmem:[%s65 + $0x88] sm:$0xff]
    %v1506 = vld [vmem:[%s65 + $0x90] sm:$0xff]
    %v1507 = vld [vmem:[%s65 + $0x98] sm:$0xff]
    %v1508 = vld [vmem:[%s65 + $0xa0] sm:$0xff]
    %v1509 = vld [vmem:[%s65 + $0xa8] sm:$0xff]
    %v1510 = vld [vmem:[%s65 + $0xb0] sm:$0xff]
    %v1511 = vld [vmem:[%s65 + $0xb8] sm:$0xff]
    %1512 = vmatprep.subr.bf16.mxu0 0
    %1513 = vmatpush1.bf16.msra.mxu0 %v1504
    %1514 = vmatprep.subr.bf16.mxu0 0
    %1515 = vmatpush1.bf16.msra.mxu0 %v1505
    %1516 = vmatprep.subr.bf16.mxu0 0
    %1517 = vmatpush1.bf16.msra.mxu0 %v1506
    %1518 = vmatprep.subr.bf16.mxu0 0
    %1519 = vmatpush1.bf16.msra.mxu0 %v1507
    %1520 = vmatprep.subr.bf16.mxu0 0
    %1521 = vmatpush1.bf16.msra.mxu0 %v1508
    %1522 = vmatprep.subr.bf16.mxu0 0
    %1523 = vmatpush1.bf16.msra.mxu0 %v1509
    %1524 = vmatprep.subr.bf16.mxu0 0
    %1525 = vmatpush1.bf16.msra.mxu0 %v1510
    %1526 = vmatprep.subr.bf16.mxu0 0
    %1527 = vmatpush1.bf16.msra.mxu0 %v1511
    %1528 = vmatprep.subr.bf16.mxu0 0
    %1529 = vmatpush1.bf16.msra.mxu0 0
    %1530 = vmatprep.subr.bf16.mxu0 0
    %1531 = vmatpush1.bf16.msra.mxu0 0
    %1532 = vmatprep.subr.bf16.mxu0 0
    %1533 = vmatpush1.bf16.msra.mxu0 0
    %1534 = vmatprep.subr.bf16.mxu0 0
    %1535 = vmatpush1.bf16.msra.mxu0 0
    %1536 = vmatprep.subr.bf16.mxu0 0
    %1537 = vmatpush1.bf16.msra.mxu0 0
    %1538 = vmatprep.subr.bf16.mxu0 0
    %1539 = vmatpush1.bf16.msra.mxu0 0
    %1540 = vmatprep.subr.bf16.mxu0 0
    %1541 = vmatpush1.bf16.msra.mxu0 0
    %1542 = vmatprep.subr.bf16.mxu0 0
    %1543 = vmatpush1.bf16.msra.mxu0 0
    %1544 = vmatprep.mubr.bf16.mxu0 0
    %1545 = vmatmul.mubr.bf16.gmra.mrb[0].mxu0 %v1503
    %v1546 = vpop.f32.mrb[0].mxu0
    %v1547 = vadd.f32 0.0, %v1546
    %v1548 = vpop.f32.mrb[0].mxu0
    %v1549 = vpop.f32.mrb[0].mxu0
    %v1550 = vadd.f32 0.0, %v1549
    %v1551 = vpop.f32.mrb[0].mxu0
    %1552 = vdwg.mxu0
    %v1553 = vadd.f32 %v1497, %v1547
    %v1554 = vadd.f32 %v1500, %v1550
    %v1555 = vlaneseq
    %v1556 = vshrl.u32 %v1555, 7
    %v1557 = vsub.s32 0, %v1556
    %v1558 = vrot.slane %v1384, %v1557
    %v1559 = vadd.f32 %v1553, %v1558
    %v1560 = vadd.f32 %v1554, %v1558
    %v1561 = vmax.f32 %v1559, 0.0
    %v1562 = vmax.f32 %v1560, 0.0
    %v1563 = vpack.c.bf16 %v1562, %v1561
    %v1564 = vld [vmem:[%s65 + $0xc0] sm:$0xff]
    %v1565 = vld [vmem:[%s65 + $0xc8] sm:$0xff]
    %v1566 = vld [vmem:[%s65 + $0xd0] sm:$0xff]
    %v1567 = vld [vmem:[%s65 + $0xd8] sm:$0xff]
    %v1568 = vld [vmem:[%s65 + $0xe0] sm:$0xff]
    %v1569 = vld [vmem:[%s65 + $0xe8] sm:$0xff]
    %v1570 = vld [vmem:[%s65 + $0xf0] sm:$0xff]
    %v1571 = vld [vmem:[%s65 + $0xf8] sm:$0xff]
    %v1572 = vlaneseq
    %v1573 = vshrl.u32 %v1572, 7
    %v1574 = vsub.s32 1, %v1573
    %v1575 = vrot.slane %v1384, %v1574
    %1576 = vmatprep.subr.bf16.mxu0 0
    %1577 = vmatpush1.bf16.msra.mxu0 %v1564
    %1578 = vmatprep.subr.bf16.mxu0 0
    %1579 = vmatpush1.bf16.msra.mxu0 %v1565
    %1580 = vmatprep.subr.bf16.mxu0 0
    %1581 = vmatpush1.bf16.msra.mxu0 %v1566
    %1582 = vmatprep.subr.bf16.mxu0 0
    %1583 = vmatpush1.bf16.msra.mxu0 %v1567
    %1584 = vmatprep.subr.bf16.mxu0 0
    %1585 = vmatpush1.bf16.msra.mxu0 %v1568
    %1586 = vmatprep.subr.bf16.mxu0 0
    %1587 = vmatpush1.bf16.msra.mxu0 %v1569
    %1588 = vmatprep.subr.bf16.mxu0 0
    %1589 = vmatpush1.bf16.msra.mxu0 %v1570
    %1590 = vmatprep.subr.bf16.mxu0 0
    %1591 = vmatpush1.bf16.msra.mxu0 %v1571
    %1592 = vmatprep.subr.bf16.mxu0 0
    %1593 = vmatpush1.bf16.msra.mxu0 0
    %1594 = vmatprep.subr.bf16.mxu0 0
    %1595 = vmatpush1.bf16.msra.mxu0 0
    %1596 = vmatprep.subr.bf16.mxu0 0
    %1597 = vmatpush1.bf16.msra.mxu0 0
    %1598 = vmatprep.subr.bf16.mxu0 0
    %1599 = vmatpush1.bf16.msra.mxu0 0
    %1600 = vmatprep.subr.bf16.mxu0 0
    %1601 = vmatpush1.bf16.msra.mxu0 0
    %1602 = vmatprep.subr.bf16.mxu0 0
    %1603 = vmatpush1.bf16.msra.mxu0 0
    %1604 = vmatprep.subr.bf16.mxu0 0
    %1605 = vmatpush1.bf16.msra.mxu0 0
    %1606 = vmatprep.subr.bf16.mxu0 0
    %1607 = vmatpush1.bf16.msra.mxu0 0
    %1608 = vmatprep.mubr.bf16.mxu0 0
    %1609 = vmatmul.mubr.bf16.gmra.mrb[0].mxu0 %v1563
    %v1610 = vpop.f32.mrb[0].mxu0
    %v1611 = vadd.f32 %v1575, %v1610
    %v1612 = vpop.f32.mrb[0].mxu0
    %v1613 = vpop.f32.mrb[0].mxu0
    %v1614 = vadd.f32 %v1575, %v1613
    %v1615 = vpop.f32.mrb[0].mxu0
    %1616 = vdwg.mxu0
    %v1617 = vpack.c.bf16 %v1614, %v1611
    %1618 = vmatprep.subr.bf16.mxu0 0
    %1619 = vmatpush1.bf16.msra.mxu0 %v1617
    %1620 = vmatprep.subr.bf16.mxu0 0
    %1621 = vmatpush1.bf16.msra.mxu0 0
    %1622 = vmatprep.subr.bf16.mxu0 0
    %1623 = vmatpush1.bf16.msra.mxu0 0
    %1624 = vmatprep.subr.bf16.mxu0 0
    %1625 = vmatpush1.bf16.msra.mxu0 0
    %1626 = vmatprep.subr.bf16.mxu0 0
    %1627 = vmatpush1.bf16.msra.mxu0 0
    %1628 = vmatprep.subr.bf16.mxu0 0
    %1629 = vmatpush1.bf16.msra.mxu0 0
    %1630 = vmatprep.subr.bf16.mxu0 0
    %1631 = vmatpush1.bf16.msra.mxu0 0
    %1632 = vmatprep.subr.bf16.mxu0 0
    %1633 = vmatpush1.bf16.msra.mxu0 0
    %1634 = vmatprep.subr.bf16.mxu0 0
    %1635 = vmatpush1.bf16.msra.mxu0 0
    %1636 = vmatprep.subr.bf16.mxu0 0
    %1637 = vmatpush1.bf16.msra.mxu0 0
    %1638 = vmatprep.subr.bf16.mxu0 0
    %1639 = vmatpush1.bf16.msra.mxu0 0
    %1640 = vmatprep.subr.bf16.mxu0 0
    %1641 = vmatpush1.bf16.msra.mxu0 0
    %1642 = vmatprep.subr.bf16.mxu0 0
    %1643 = vmatpush1.bf16.msra.mxu0 0
    %1644 = vmatprep.subr.bf16.mxu0 0
    %1645 = vmatpush1.bf16.msra.mxu0 0
    %1646 = vmatprep.subr.bf16.mxu0 0
    %1647 = vmatpush1.bf16.msra.mxu0 0
    %1648 = vmatprep.subr.bf16.mxu0 0
    %1649 = vmatpush1.bf16.msra.mxu0 0
    %1650 = vmatprep.mubr.bf16.mxu0 0
    %1651 = vmatmul.mubr.bf16.gmra.mrb[0].mxu0 %v1179
    %v1652 = vpop.f32.mrb[0].mxu0
    %v1653 = vadd.f32 0.0, %v1652
    %v1654 = vpop.f32.mrb[0].mxu0
    %v1655 = vpop.f32.mrb[0].mxu0
    %v1656 = vadd.f32 0.0, %v1655
    %v1657 = vpop.f32.mrb[0].mxu0
    %1658 = vmatprep.mubr.bf16.mxu0 0
    %1659 = vmatmul.mubr.bf16.gmra.mrb[0].mxu0 %v1182
    %v1660 = vpop.f32.mrb[0].mxu0
    %v1661 = vadd.f32 0.0, %v1660
    %v1662 = vpop.f32.mrb[0].mxu0
    %v1663 = vpop.f32.mrb[0].mxu0
    %v1664 = vadd.f32 0.0, %v1663
    %v1665 = vpop.f32.mrb[0].mxu0
    %1666 = vmatprep.mubr.bf16.mxu0 0
    %1667 = vmatmul.mubr.bf16.gmra.mrb[0].mxu0 %v1185
    %v1668 = vpop.f32.mrb[0].mxu0
    %v1669 = vadd.f32 0.0, %v1668
    %v1670 = vpop.f32.mrb[0].mxu0
    %v1671 = vpop.f32.mrb[0].mxu0
    %v1672 = vadd.f32 0.0, %v1671
    %v1673 = vpop.f32.mrb[0].mxu0
    %1674 = vmatprep.mubr.bf16.mxu0 0
    %1675 = vmatmul.mubr.bf16.gmra.mrb[0].mxu0 %v1188
    %v1676 = vpop.f32.mrb[0].mxu0
    %v1677 = vadd.f32 0.0, %v1676
    %v1678 = vpop.f32.mrb[0].mxu0
    %v1679 = vpop.f32.mrb[0].mxu0
    %v1680 = vadd.f32 0.0, %v1679
    %v1681 = vpop.f32.mrb[0].mxu0
    %1682 = vdwg.mxu0
    %v1683 = vpack.c.bf16 %v1656, %v1653
    %v1684 = vpack.c.bf16 %v1664, %v1661
    %v1685 = vpack.c.bf16 %v1672, %v1669
    %v1686 = vpack.c.bf16 %v1680, %v1677
    %v1687 = vld [vmem:[%s65 + $0x100] sm:$0xff]
    %v1688 = vld [vmem:[%s65 + $0x108] sm:$0xff]
    %v1689 = vld [vmem:[%s65 + $0x110] sm:$0xff]
    %v1690 = vld [vmem:[%s65 + $0x118] sm:$0xff]
    %v1691 = vld [vmem:[%s65 + $0x120] sm:$0xff]
    %v1692 = vld [vmem:[%s65 + $0x128] sm:$0xff]
    %v1693 = vld [vmem:[%s65 + $0x130] sm:$0xff]
    %v1694 = vld [vmem:[%s65 + $0x138] sm:$0xff]
    %v1695 = vld [vmem:[%s65 + $0x140] sm:$0xff]
    %v1696 = vld [vmem:[%s65 + $0x148] sm:$0xff]
    %v1697 = vld [vmem:[%s65 + $0x150] sm:$0xff]
    %v1698 = vld [vmem:[%s65 + $0x158] sm:$0xff]
    %v1699 = vld [vmem:[%s65 + $0x160] sm:$0xff]
    %v1700 = vld [vmem:[%s65 + $0x168] sm:$0xff]
    %v1701 = vld [vmem:[%s65 + $0x170] sm:$0xff]
    %v1702 = vld [vmem:[%s65 + $0x178] sm:$0xff]
    %v1703 = vld [vmem:[%s65 + $0x180] sm:$0xff]
    %v1704 = vld [vmem:[%s65 + $0x188] sm:$0xff]
    %v1705 = vld [vmem:[%s65 + $0x190] sm:$0xff]
    %v1706 = vld [vmem:[%s65 + $0x198] sm:$0xff]
    %v1707 = vld [vmem:[%s65 + $0x1a0] sm:$0xff]
    %v1708 = vld [vmem:[%s65 + $0x1a8] sm:$0xff]
    %v1709 = vld [vmem:[%s65 + $0x1b0] sm:$0xff]
    %v1710 = vld [vmem:[%s65 + $0x1b8] sm:$0xff]
    %v1711 = vld [vmem:[%s65 + $0x1c0] sm:$0xff]
    %v1712 = vld [vmem:[%s65 + $0x1c8] sm:$0xff]
    %v1713 = vld [vmem:[%s65 + $0x1d0] sm:$0xff]
    %v1714 = vld [vmem:[%s65 + $0x1d8] sm:$0xff]
    %v1715 = vld [vmem:[%s65 + $0x1e0] sm:$0xff]
    %v1716 = vld [vmem:[%s65 + $0x1e8] sm:$0xff]
    %v1717 = vld [vmem:[%s65 + $0x1f0] sm:$0xff]
    %v1718 = vld [vmem:[%s65 + $0x1f8] sm:$0xff]
    %v1719 = vlaneseq
    %v1720 = vshrl.u32 %v1719, 7
    %v1721 = vsub.s32 2, %v1720
    %v1722 = vrot.slane %v1384, %v1721
    %1723 = vmatprep.subr.bf16.mxu0 0
    %1724 = vmatpush1.bf16.msra.mxu0 %v1687
    %1725 = vmatprep.subr.bf16.mxu0 0
    %1726 = vmatpush1.bf16.msra.mxu0 %v1688
    %1727 = vmatprep.subr.bf16.mxu0 0
    %1728 = vmatpush1.bf16.msra.mxu0 %v1689
    %1729 = vmatprep.subr.bf16.mxu0 0
    %1730 = vmatpush1.bf16.msra.mxu0 %v1690
    %1731 = vmatprep.subr.bf16.mxu0 0
    %1732 = vmatpush1.bf16.msra.mxu0 %v1691
    %1733 = vmatprep.subr.bf16.mxu0 0
    %1734 = vmatpush1.bf16.msra.mxu0 %v1692
    %1735 = vmatprep.subr.bf16.mxu0 0
    %1736 = vmatpush1.bf16.msra.mxu0 %v1693
    %1737 = vmatprep.subr.bf16.mxu0 0
    %1738 = vmatpush1.bf16.msra.mxu0 %v1694
    %1739 = vmatprep.subr.bf16.mxu0 0
    %1740 = vmatpush1.bf16.msra.mxu0 %v1695
    %1741 = vmatprep.subr.bf16.mxu0 0
    %1742 = vmatpush1.bf16.msra.mxu0 %v1696
    %1743 = vmatprep.subr.bf16.mxu0 0
    %1744 = vmatpush1.bf16.msra.mxu0 %v1697
    %1745 = vmatprep.subr.bf16.mxu0 0
    %1746 = vmatpush1.bf16.msra.mxu0 %v1698
    %1747 = vmatprep.subr.bf16.mxu0 0
    %1748 = vmatpush1.bf16.msra.mxu0 %v1699
    %1749 = vmatprep.subr.bf16.mxu0 0
    %1750 = vmatpush1.bf16.msra.mxu0 %v1700
    %1751 = vmatprep.subr.bf16.mxu0 0
    %1752 = vmatpush1.bf16.msra.mxu0 %v1701
    %1753 = vmatprep.subr.bf16.mxu0 0
    %1754 = vmatpush1.bf16.msra.mxu0 %v1702
    %1755 = vmatprep.mubr.bf16.mxu0 %v1684
    %1756 = vmatmul.mubr.bf16.gmra.mrb[0].mxu0 %v1683
    %v1757 = vpop.f32.mrb[0].mxu0
    %v1758 = vadd.f32 %v1722, %v1757
    %v1759 = vpop.f32.mrb[0].mxu0
    %v1760 = vpop.f32.mrb[0].mxu0
    %v1761 = vadd.f32 %v1722, %v1760
    %v1762 = vpop.f32.mrb[0].mxu0
    %1763 = vdwg.mxu0
    %1764 = vmatprep.subr.bf16.mxu0 0
    %1765 = vmatpush1.bf16.msra.mxu0 %v1703
    %1766 = vmatprep.subr.bf16.mxu0 0
    %1767 = vmatpush1.bf16.msra.mxu0 %v1704
    %1768 = vmatprep.subr.bf16.mxu0 0
    %1769 = vmatpush1.bf16.msra.mxu0 %v1705
    %1770 = vmatprep.subr.bf16.mxu0 0
    %1771 = vmatpush1.bf16.msra.mxu0 %v1706
    %1772 = vmatprep.subr.bf16.mxu0 0
    %1773 = vmatpush1.bf16.msra.mxu0 %v1707
    %1774 = vmatprep.subr.bf16.mxu0 0
    %1775 = vmatpush1.bf16.msra.mxu0 %v1708
    %1776 = vmatprep.subr.bf16.mxu0 0
    %1777 = vmatpush1.bf16.msra.mxu0 %v1709
    %1778 = vmatprep.subr.bf16.mxu0 0
    %1779 = vmatpush1.bf16.msra.mxu0 %v1710
    %1780 = vmatprep.subr.bf16.mxu0 0
    %1781 = vmatpush1.bf16.msra.mxu0 %v1711
    %1782 = vmatprep.subr.bf16.mxu0 0
    %1783 = vmatpush1.bf16.msra.mxu0 %v1712
    %1784 = vmatprep.subr.bf16.mxu0 0
    %1785 = vmatpush1.bf16.msra.mxu0 %v1713
    %1786 = vmatprep.subr.bf16.mxu0 0
    %1787 = vmatpush1.bf16.msra.mxu0 %v1714
    %1788 = vmatprep.subr.bf16.mxu0 0
    %1789 = vmatpush1.bf16.msra.mxu0 %v1715
    %1790 = vmatprep.subr.bf16.mxu0 0
    %1791 = vmatpush1.bf16.msra.mxu0 %v1716
    %1792 = vmatprep.subr.bf16.mxu0 0
    %1793 = vmatpush1.bf16.msra.mxu0 %v1717
    %1794 = vmatprep.subr.bf16.mxu0 0
    %1795 = vmatpush1.bf16.msra.mxu0 %v1718
    %1796 = vmatprep.mubr.bf16.mxu0 %v1686
    %1797 = vmatmul.mubr.bf16.gmra.mrb[0].mxu0 %v1685
    %v1798 = vpop.f32.mrb[0].mxu0
    %v1799 = vadd.f32 %v1758, %v1798
    %v1800 = vpop.f32.mrb[0].mxu0
    %v1801 = vpop.f32.mrb[0].mxu0
    %v1802 = vadd.f32 %v1761, %v1801
    %v1803 = vpop.f32.mrb[0].mxu0
    %1804 = vdwg.mxu0
    %v1805 = vadd.f32 %v1379, %v1799
    %v1806 = vadd.f32 %v1380, %v1802
    %v1807 = vmax.f32 %v1805, 0.0
    %v1808 = vmax.f32 %v1806, 0.0
    %s1809 = sshll.u32 %s900, 4
    %1810 = dma.done %s80, %s1809
    %s1811 = scalar_lea.vmem %s6, 8
    %v1812 = vld [vmem:[%s1811] sm:$0x7]
    %v1815 = vrot.slane %v1807, 7
    %v1816 = vrot.slane %v1808, 7
    %v1817 = vsel %vm906, %v1815, %v1816
    %v1820 = vsel %vm906, 0.0, %v1815
    %v1821 = vmul.f32 %v1820, %v916
    %v1822 = vmul.f32 %v1817, %v921
    %v1823 = vrot.slane %v1807, 1
    %v1824 = vrot.slane %v1808, 1
    %v1825 = vsel %vm925, %v1823, %v1824
    %v1828 = vsel %vm925, %v1824, 0.0
    %v1829 = vmul.f32 %v1825, %v934
    %v1830 = vmul.f32 %v1828, %v938
    %v1831 = vpack.c.bf16 %v1822, %v1821
    %v1832 = vld [vmem:[%s79] sm:$0xff]
    %v1833 = vld [vmem:[%s79 + $0x8] sm:$0xff]
    %v1834 = vld [vmem:[%s79 + $0x10] sm:$0xff]
    %v1835 = vld [vmem:[%s79 + $0x18] sm:$0xff]
    %v1836 = vld [vmem:[%s79 + $0x20] sm:$0xff]
    %v1837 = vld [vmem:[%s79 + $0x28] sm:$0xff]
    %v1838 = vld [vmem:[%s79 + $0x30] sm:$0xff]
    %v1839 = vld [vmem:[%s79 + $0x38] sm:$0xff]
    %v1840 = vpack.c.bf16 %v1808, %v1807
    %v1841 = vld [vmem:[%s79 + $0x40] sm:$0xff]
    %v1842 = vld [vmem:[%s79 + $0x48] sm:$0xff]
    %v1843 = vld [vmem:[%s79 + $0x50] sm:$0xff]
    %v1844 = vld [vmem:[%s79 + $0x58] sm:$0xff]
    %v1845 = vld [vmem:[%s79 + $0x60] sm:$0xff]
    %v1846 = vld [vmem:[%s79 + $0x68] sm:$0xff]
    %v1847 = vld [vmem:[%s79 + $0x70] sm:$0xff]
    %v1848 = vld [vmem:[%s79 + $0x78] sm:$0xff]
    %1849 = vmatprep.subr.bf16.mxu0 0
    %1850 = vmatpush1.bf16.msra.mxu0 %v1841
    %1851 = vmatprep.subr.bf16.mxu0 0
    %1852 = vmatpush1.bf16.msra.mxu0 %v1842
    %1853 = vmatprep.subr.bf16.mxu0 0
    %1854 = vmatpush1.bf16.msra.mxu0 %v1843
    %1855 = vmatprep.subr.bf16.mxu0 0
    %1856 = vmatpush1.bf16.msra.mxu0 %v1844
    %1857 = vmatprep.subr.bf16.mxu0 0
    %1858 = vmatpush1.bf16.msra.mxu0 %v1845
    %1859 = vmatprep.subr.bf16.mxu0 0
    %1860 = vmatpush1.bf16.msra.mxu0 %v1846
    %1861 = vmatprep.subr.bf16.mxu0 0
    %1862 = vmatpush1.bf16.msra.mxu0 %v1847
    %1863 = vmatprep.subr.bf16.mxu0 0
    %1864 = vmatpush1.bf16.msra.mxu0 %v1848
    %1865 = vmatprep.subr.bf16.mxu0 0
    %1866 = vmatpush1.bf16.msra.mxu0 0
    %1867 = vmatprep.subr.bf16.mxu0 0
    %1868 = vmatpush1.bf16.msra.mxu0 0
    %1869 = vmatprep.subr.bf16.mxu0 0
    %1870 = vmatpush1.bf16.msra.mxu0 0
    %1871 = vmatprep.subr.bf16.mxu0 0
    %1872 = vmatpush1.bf16.msra.mxu0 0
    %1873 = vmatprep.subr.bf16.mxu0 0
    %1874 = vmatpush1.bf16.msra.mxu0 0
    %1875 = vmatprep.subr.bf16.mxu0 0
    %1876 = vmatpush1.bf16.msra.mxu0 0
    %1877 = vmatprep.subr.bf16.mxu0 0
    %1878 = vmatpush1.bf16.msra.mxu0 0
    %1879 = vmatprep.subr.bf16.mxu0 0
    %1880 = vmatpush1.bf16.msra.mxu0 0
    %1881 = vmatprep.mubr.bf16.mxu0 0
    %1882 = vmatmul.mubr.bf16.gmra.mrb[0].mxu0 %v1840
    %v1883 = vpop.f32.mrb[0].mxu0
    %v1884 = vadd.f32 0.0, %v1883
    %v1885 = vpop.f32.mrb[0].mxu0
    %v1886 = vpop.f32.mrb[0].mxu0
    %v1887 = vadd.f32 0.0, %v1886
    %v1888 = vpop.f32.mrb[0].mxu0
    %1889 = vdwg.mxu0
    %1890 = vmatprep.subr.bf16.mxu0 0
    %1891 = vmatpush1.bf16.msra.mxu0 %v1832
    %1892 = vmatprep.subr.bf16.mxu0 0
    %1893 = vmatpush1.bf16.msra.mxu0 %v1833
    %1894 = vmatprep.subr.bf16.mxu0 0
    %1895 = vmatpush1.bf16.msra.mxu0 %v1834
    %1896 = vmatprep.subr.bf16.mxu0 0
    %1897 = vmatpush1.bf16.msra.mxu0 %v1835
    %1898 = vmatprep.subr.bf16.mxu0 0
    %1899 = vmatpush1.bf16.msra.mxu0 %v1836
    %1900 = vmatprep.subr.bf16.mxu0 0
    %1901 = vmatpush1.bf16.msra.mxu0 %v1837
    %1902 = vmatprep.subr.bf16.mxu0 0
    %1903 = vmatpush1.bf16.msra.mxu0 %v1838
    %1904 = vmatprep.subr.bf16.mxu0 0
    %1905 = vmatpush1.bf16.msra.mxu0 %v1839
    %1906 = vmatprep.subr.bf16.mxu0 0
    %1907 = vmatpush1.bf16.msra.mxu0 0
    %1908 = vmatprep.subr.bf16.mxu0 0
    %1909 = vmatpush1.bf16.msra.mxu0 0
    %1910 = vmatprep.subr.bf16.mxu0 0
    %1911 = vmatpush1.bf16.msra.mxu0 0
    %1912 = vmatprep.subr.bf16.mxu0 0
    %1913 = vmatpush1.bf16.msra.mxu0 0
    %1914 = vmatprep.subr.bf16.mxu0 0
    %1915 = vmatpush1.bf16.msra.mxu0 0
    %1916 = vmatprep.subr.bf16.mxu0 0
    %1917 = vmatpush1.bf16.msra.mxu0 0
    %1918 = vmatprep.subr.bf16.mxu0 0
    %1919 = vmatpush1.bf16.msra.mxu0 0
    %1920 = vmatprep.subr.bf16.mxu0 0
    %1921 = vmatpush1.bf16.msra.mxu0 0
    %1922 = vmatprep.mubr.bf16.mxu0 0
    %1923 = vmatmul.mubr.bf16.gmra.mrb[0].mxu0 %v1831
    %v1924 = vpop.f32.mrb[0].mxu0
    %v1925 = vadd.f32 %v1884, %v1924
    %v1926 = vpop.f32.mrb[0].mxu0
    %v1927 = vpop.f32.mrb[0].mxu0
    %v1928 = vadd.f32 %v1887, %v1927
    %v1929 = vpop.f32.mrb[0].mxu0
    %1930 = vdwg.mxu0
    %v1931 = vpack.c.bf16 %v1830, %v1829
    %v1932 = vld [vmem:[%s79 + $0x80] sm:$0xff]
    %v1933 = vld [vmem:[%s79 + $0x88] sm:$0xff]
    %v1934 = vld [vmem:[%s79 + $0x90] sm:$0xff]
    %v1935 = vld [vmem:[%s79 + $0x98] sm:$0xff]
    %v1936 = vld [vmem:[%s79 + $0xa0] sm:$0xff]
    %v1937 = vld [vmem:[%s79 + $0xa8] sm:$0xff]
    %v1938 = vld [vmem:[%s79 + $0xb0] sm:$0xff]
    %v1939 = vld [vmem:[%s79 + $0xb8] sm:$0xff]
    %1940 = vmatprep.subr.bf16.mxu0 0
    %1941 = vmatpush1.bf16.msra.mxu0 %v1932
    %1942 = vmatprep.subr.bf16.mxu0 0
    %1943 = vmatpush1.bf16.msra.mxu0 %v1933
    %1944 = vmatprep.subr.bf16.mxu0 0
    %1945 = vmatpush1.bf16.msra.mxu0 %v1934
    %1946 = vmatprep.subr.bf16.mxu0 0
    %1947 = vmatpush1.bf16.msra.mxu0 %v1935
    %1948 = vmatprep.subr.bf16.mxu0 0
    %1949 = vmatpush1.bf16.msra.mxu0 %v1936
    %1950 = vmatprep.subr.bf16.mxu0 0
    %1951 = vmatpush1.bf16.msra.mxu0 %v1937
    %1952 = vmatprep.subr.bf16.mxu0 0
    %1953 = vmatpush1.bf16.msra.mxu0 %v1938
    %1954 = vmatprep.subr.bf16.mxu0 0
    %1955 = vmatpush1.bf16.msra.mxu0 %v1939
    %1956 = vmatprep.subr.bf16.mxu0 0
    %1957 = vmatpush1.bf16.msra.mxu0 0
    %1958 = vmatprep.subr.bf16.mxu0 0
    %1959 = vmatpush1.bf16.msra.mxu0 0
    %1960 = vmatprep.subr.bf16.mxu0 0
    %1961 = vmatpush1.bf16.msra.mxu0 0
    %1962 = vmatprep.subr.bf16.mxu0 0
    %1963 = vmatpush1.bf16.msra.mxu0 0
    %1964 = vmatprep.subr.bf16.mxu0 0
    %1965 = vmatpush1.bf16.msra.mxu0 0
    %1966 = vmatprep.subr.bf16.mxu0 0
    %1967 = vmatpush1.bf16.msra.mxu0 0
    %1968 = vmatprep.subr.bf16.mxu0 0
    %1969 = vmatpush1.bf16.msra.mxu0 0
    %1970 = vmatprep.subr.bf16.mxu0 0
    %1971 = vmatpush1.bf16.msra.mxu0 0
    %1972 = vmatprep.mubr.bf16.mxu0 0
    %1973 = vmatmul.mubr.bf16.gmra.mrb[0].mxu0 %v1931
    %v1974 = vpop.f32.mrb[0].mxu0
    %v1975 = vadd.f32 0.0, %v1974
    %v1976 = vpop.f32.mrb[0].mxu0
    %v1977 = vpop.f32.mrb[0].mxu0
    %v1978 = vadd.f32 0.0, %v1977
    %v1979 = vpop.f32.mrb[0].mxu0
    %1980 = vdwg.mxu0
    %v1981 = vadd.f32 %v1925, %v1975
    %v1982 = vadd.f32 %v1928, %v1978
    %v1983 = vlaneseq
    %v1984 = vshrl.u32 %v1983, 7
    %v1985 = vsub.s32 0, %v1984
    %v1986 = vrot.slane %v1812, %v1985
    %v1987 = vadd.f32 %v1981, %v1986
    %v1988 = vadd.f32 %v1982, %v1986
    %v1989 = vmax.f32 %v1987, 0.0
    %v1990 = vmax.f32 %v1988, 0.0
    %v1991 = vpack.c.bf16 %v1990, %v1989
    %v1992 = vld [vmem:[%s79 + $0xc0] sm:$0xff]
    %v1993 = vld [vmem:[%s79 + $0xc8] sm:$0xff]
    %v1994 = vld [vmem:[%s79 + $0xd0] sm:$0xff]
    %v1995 = vld [vmem:[%s79 + $0xd8] sm:$0xff]
    %v1996 = vld [vmem:[%s79 + $0xe0] sm:$0xff]
    %v1997 = vld [vmem:[%s79 + $0xe8] sm:$0xff]
    %v1998 = vld [vmem:[%s79 + $0xf0] sm:$0xff]
    %v1999 = vld [vmem:[%s79 + $0xf8] sm:$0xff]
    %v2000 = vlaneseq
    %v2001 = vshrl.u32 %v2000, 7
    %v2002 = vsub.s32 1, %v2001
    %v2003 = vrot.slane %v1812, %v2002
    %2004 = vmatprep.subr.bf16.mxu0 0
    %2005 = vmatpush1.bf16.msra.mxu0 %v1992
    %2006 = vmatprep.subr.bf16.mxu0 0
    %2007 = vmatpush1.bf16.msra.mxu0 %v1993
    %2008 = vmatprep.subr.bf16.mxu0 0
    %2009 = vmatpush1.bf16.msra.mxu0 %v1994
    %2010 = vmatprep.subr.bf16.mxu0 0
    %2011 = vmatpush1.bf16.msra.mxu0 %v1995
    %2012 = vmatprep.subr.bf16.mxu0 0
    %2013 = vmatpush1.bf16.msra.mxu0 %v1996
    %2014 = vmatprep.subr.bf16.mxu0 0
    %2015 = vmatpush1.bf16.msra.mxu0 %v1997
    %2016 = vmatprep.subr.bf16.mxu0 0
    %2017 = vmatpush1.bf16.msra.mxu0 %v1998
    %2018 = vmatprep.subr.bf16.mxu0 0
    %2019 = vmatpush1.bf16.msra.mxu0 %v1999
    %2020 = vmatprep.subr.bf16.mxu0 0
    %2021 = vmatpush1.bf16.msra.mxu0 0
    %2022 = vmatprep.subr.bf16.mxu0 0
    %2023 = vmatpush1.bf16.msra.mxu0 0
    %2024 = vmatprep.subr.bf16.mxu0 0
    %2025 = vmatpush1.bf16.msra.mxu0 0
    %2026 = vmatprep.subr.bf16.mxu0 0
    %2027 = vmatpush1.bf16.msra.mxu0 0
    %2028 = vmatprep.subr.bf16.mxu0 0
    %2029 = vmatpush1.bf16.msra.mxu0 0
    %2030 = vmatprep.subr.bf16.mxu0 0
    %2031 = vmatpush1.bf16.msra.mxu0 0
    %2032 = vmatprep.subr.bf16.mxu0 0
    %2033 = vmatpush1.bf16.msra.mxu0 0
    %2034 = vmatprep.subr.bf16.mxu0 0
    %2035 = vmatpush1.bf16.msra.mxu0 0
    %2036 = vmatprep.mubr.bf16.mxu0 0
    %2037 = vmatmul.mubr.bf16.gmra.mrb[0].mxu0 %v1991
    %v2038 = vpop.f32.mrb[0].mxu0
    %v2039 = vadd.f32 %v2003, %v2038
    %v2040 = vpop.f32.mrb[0].mxu0
    %v2041 = vpop.f32.mrb[0].mxu0
    %v2042 = vadd.f32 %v2003, %v2041
    %v2043 = vpop.f32.mrb[0].mxu0
    %2044 = vdwg.mxu0
    %v2045 = vpack.c.bf16 %v2042, %v2039
    %2046 = vmatprep.subr.bf16.mxu0 0
    %2047 = vmatpush1.bf16.msra.mxu0 %v2045
    %2048 = vmatprep.subr.bf16.mxu0 0
    %2049 = vmatpush1.bf16.msra.mxu0 0
    %2050 = vmatprep.subr.bf16.mxu0 0
    %2051 = vmatpush1.bf16.msra.mxu0 0
    %2052 = vmatprep.subr.bf16.mxu0 0
    %2053 = vmatpush1.bf16.msra.mxu0 0
    %2054 = vmatprep.subr.bf16.mxu0 0
    %2055 = vmatpush1.bf16.msra.mxu0 0
    %2056 = vmatprep.subr.bf16.mxu0 0
    %2057 = vmatpush1.bf16.msra.mxu0 0
    %2058 = vmatprep.subr.bf16.mxu0 0
    %2059 = vmatpush1.bf16.msra.mxu0 0
    %2060 = vmatprep.subr.bf16.mxu0 0
    %2061 = vmatpush1.bf16.msra.mxu0 0
    %2062 = vmatprep.subr.bf16.mxu0 0
    %2063 = vmatpush1.bf16.msra.mxu0 0
    %2064 = vmatprep.subr.bf16.mxu0 0
    %2065 = vmatpush1.bf16.msra.mxu0 0
    %2066 = vmatprep.subr.bf16.mxu0 0
    %2067 = vmatpush1.bf16.msra.mxu0 0
    %2068 = vmatprep.subr.bf16.mxu0 0
    %2069 = vmatpush1.bf16.msra.mxu0 0
    %2070 = vmatprep.subr.bf16.mxu0 0
    %2071 = vmatpush1.bf16.msra.mxu0 0
    %2072 = vmatprep.subr.bf16.mxu0 0
    %2073 = vmatpush1.bf16.msra.mxu0 0
    %2074 = vmatprep.subr.bf16.mxu0 0
    %2075 = vmatpush1.bf16.msra.mxu0 0
    %2076 = vmatprep.subr.bf16.mxu0 0
    %2077 = vmatpush1.bf16.msra.mxu0 0
    %2078 = vmatprep.mubr.bf16.mxu0 0
    %2079 = vmatmul.mubr.bf16.gmra.mrb[0].mxu0 %v1179
    %v2080 = vpop.f32.mrb[0].mxu0
    %v2081 = vadd.f32 0.0, %v2080
    %v2082 = vpop.f32.mrb[0].mxu0
    %v2083 = vpop.f32.mrb[0].mxu0
    %v2084 = vadd.f32 0.0, %v2083
    %v2085 = vpop.f32.mrb[0].mxu0
    %2086 = vmatprep.mubr.bf16.mxu0 0
    %2087 = vmatmul.mubr.bf16.gmra.mrb[0].mxu0 %v1182
    %v2088 = vpop.f32.mrb[0].mxu0
    %v2089 = vadd.f32 0.0, %v2088
    %v2090 = vpop.f32.mrb[0].mxu0
    %v2091 = vpop.f32.mrb[0].mxu0
    %v2092 = vadd.f32 0.0, %v2091
    %v2093 = vpop.f32.mrb[0].mxu0
    %2094 = vmatprep.mubr.bf16.mxu0 0
    %2095 = vmatmul.mubr.bf16.gmra.mrb[0].mxu0 %v1185
    %v2096 = vpop.f32.mrb[0].mxu0
    %v2097 = vadd.f32 0.0, %v2096
    %v2098 = vpop.f32.mrb[0].mxu0
    %v2099 = vpop.f32.mrb[0].mxu0
    %v2100 = vadd.f32 0.0, %v2099
    %v2101 = vpop.f32.mrb[0].mxu0
    %2102 = vmatprep.mubr.bf16.mxu0 0
    %2103 = vmatmul.mubr.bf16.gmra.mrb[0].mxu0 %v1188
    %v2104 = vpop.f32.mrb[0].mxu0
    %v2105 = vadd.f32 0.0, %v2104
    %v2106 = vpop.f32.mrb[0].mxu0
    %v2107 = vpop.f32.mrb[0].mxu0
    %v2108 = vadd.f32 0.0, %v2107
    %v2109 = vpop.f32.mrb[0].mxu0
    %2110 = vdwg.mxu0
    %v2111 = vpack.c.bf16 %v2084, %v2081
    %v2112 = vpack.c.bf16 %v2092, %v2089
    %v2113 = vpack.c.bf16 %v2100, %v2097
    %v2114 = vpack.c.bf16 %v2108, %v2105
    %v2115 = vld [vmem:[%s79 + $0x100] sm:$0xff]
    %v2116 = vld [vmem:[%s79 + $0x108] sm:$0xff]
    %v2117 = vld [vmem:[%s79 + $0x110] sm:$0xff]
    %v2118 = vld [vmem:[%s79 + $0x118] sm:$0xff]
    %v2119 = vld [vmem:[%s79 + $0x120] sm:$0xff]
    %v2120 = vld [vmem:[%s79 + $0x128] sm:$0xff]
    %v2121 = vld [vmem:[%s79 + $0x130] sm:$0xff]
    %v2122 = vld [vmem:[%s79 + $0x138] sm:$0xff]
    %v2123 = vld [vmem:[%s79 + $0x140] sm:$0xff]
    %v2124 = vld [vmem:[%s79 + $0x148] sm:$0xff]
    %v2125 = vld [vmem:[%s79 + $0x150] sm:$0xff]
    %v2126 = vld [vmem:[%s79 + $0x158] sm:$0xff]
    %v2127 = vld [vmem:[%s79 + $0x160] sm:$0xff]
    %v2128 = vld [vmem:[%s79 + $0x168] sm:$0xff]
    %v2129 = vld [vmem:[%s79 + $0x170] sm:$0xff]
    %v2130 = vld [vmem:[%s79 + $0x178] sm:$0xff]
    %v2131 = vld [vmem:[%s79 + $0x180] sm:$0xff]
    %v2132 = vld [vmem:[%s79 + $0x188] sm:$0xff]
    %v2133 = vld [vmem:[%s79 + $0x190] sm:$0xff]
    %v2134 = vld [vmem:[%s79 + $0x198] sm:$0xff]
    %v2135 = vld [vmem:[%s79 + $0x1a0] sm:$0xff]
    %v2136 = vld [vmem:[%s79 + $0x1a8] sm:$0xff]
    %v2137 = vld [vmem:[%s79 + $0x1b0] sm:$0xff]
    %v2138 = vld [vmem:[%s79 + $0x1b8] sm:$0xff]
    %v2139 = vld [vmem:[%s79 + $0x1c0] sm:$0xff]
    %v2140 = vld [vmem:[%s79 + $0x1c8] sm:$0xff]
    %v2141 = vld [vmem:[%s79 + $0x1d0] sm:$0xff]
    %v2142 = vld [vmem:[%s79 + $0x1d8] sm:$0xff]
    %v2143 = vld [vmem:[%s79 + $0x1e0] sm:$0xff]
    %v2144 = vld [vmem:[%s79 + $0x1e8] sm:$0xff]
    %v2145 = vld [vmem:[%s79 + $0x1f0] sm:$0xff]
    %v2146 = vld [vmem:[%s79 + $0x1f8] sm:$0xff]
    %v2147 = vlaneseq
    %v2148 = vshrl.u32 %v2147, 7
    %v2149 = vsub.s32 2, %v2148
    %v2150 = vrot.slane %v1812, %v2149
    %2151 = vmatprep.subr.bf16.mxu0 0
    %2152 = vmatpush1.bf16.msra.mxu0 %v2115
    %2153 = vmatprep.subr.bf16.mxu0 0
    %2154 = vmatpush1.bf16.msra.mxu0 %v2116
    %2155 = vmatprep.subr.bf16.mxu0 0
    %2156 = vmatpush1.bf16.msra.mxu0 %v2117
    %2157 = vmatprep.subr.bf16.mxu0 0
    %2158 = vmatpush1.bf16.msra.mxu0 %v2118
    %2159 = vmatprep.subr.bf16.mxu0 0
    %2160 = vmatpush1.bf16.msra.mxu0 %v2119
    %2161 = vmatprep.subr.bf16.mxu0 0
    %2162 = vmatpush1.bf16.msra.mxu0 %v2120
    %2163 = vmatprep.subr.bf16.mxu0 0
    %2164 = vmatpush1.bf16.msra.mxu0 %v2121
    %2165 = vmatprep.subr.bf16.mxu0 0
    %2166 = vmatpush1.bf16.msra.mxu0 %v2122
    %2167 = vmatprep.subr.bf16.mxu0 0
    %2168 = vmatpush1.bf16.msra.mxu0 %v2123
    %2169 = vmatprep.subr.bf16.mxu0 0
    %2170 = vmatpush1.bf16.msra.mxu0 %v2124
    %2171 = vmatprep.subr.bf16.mxu0 0
    %2172 = vmatpush1.bf16.msra.mxu0 %v2125
    %2173 = vmatprep.subr.bf16.mxu0 0
    %2174 = vmatpush1.bf16.msra.mxu0 %v2126
    %2175 = vmatprep.subr.bf16.mxu0 0
    %2176 = vmatpush1.bf16.msra.mxu0 %v2127
    %2177 = vmatprep.subr.bf16.mxu0 0
    %2178 = vmatpush1.bf16.msra.mxu0 %v2128
    %2179 = vmatprep.subr.bf16.mxu0 0
    %2180 = vmatpush1.bf16.msra.mxu0 %v2129
    %2181 = vmatprep.subr.bf16.mxu0 0
    %2182 = vmatpush1.bf16.msra.mxu0 %v2130
    %2183 = vmatprep.mubr.bf16.mxu0 %v2112
    %2184 = vmatmul.mubr.bf16.gmra.mrb[0].mxu0 %v2111
    %v2185 = vpop.f32.mrb[0].mxu0
    %v2186 = vadd.f32 %v2150, %v2185
    %v2187 = vpop.f32.mrb[0].mxu0
    %v2188 = vpop.f32.mrb[0].mxu0
    %v2189 = vadd.f32 %v2150, %v2188
    %v2190 = vpop.f32.mrb[0].mxu0
    %2191 = vdwg.mxu0
    %2192 = vmatprep.subr.bf16.mxu0 0
    %2193 = vmatpush1.bf16.msra.mxu0 %v2131
    %2194 = vmatprep.subr.bf16.mxu0 0
    %2195 = vmatpush1.bf16.msra.mxu0 %v2132
    %2196 = vmatprep.subr.bf16.mxu0 0
    %2197 = vmatpush1.bf16.msra.mxu0 %v2133
    %2198 = vmatprep.subr.bf16.mxu0 0
    %2199 = vmatpush1.bf16.msra.mxu0 %v2134
    %2200 = vmatprep.subr.bf16.mxu0 0
    %2201 = vmatpush1.bf16.msra.mxu0 %v2135
    %2202 = vmatprep.subr.bf16.mxu0 0
    %2203 = vmatpush1.bf16.msra.mxu0 %v2136
    %2204 = vmatprep.subr.bf16.mxu0 0
    %2205 = vmatpush1.bf16.msra.mxu0 %v2137
    %2206 = vmatprep.subr.bf16.mxu0 0
    %2207 = vmatpush1.bf16.msra.mxu0 %v2138
    %2208 = vmatprep.subr.bf16.mxu0 0
    %2209 = vmatpush1.bf16.msra.mxu0 %v2139
    %2210 = vmatprep.subr.bf16.mxu0 0
    %2211 = vmatpush1.bf16.msra.mxu0 %v2140
    %2212 = vmatprep.subr.bf16.mxu0 0
    %2213 = vmatpush1.bf16.msra.mxu0 %v2141
    %2214 = vmatprep.subr.bf16.mxu0 0
    %2215 = vmatpush1.bf16.msra.mxu0 %v2142
    %2216 = vmatprep.subr.bf16.mxu0 0
    %2217 = vmatpush1.bf16.msra.mxu0 %v2143
    %2218 = vmatprep.subr.bf16.mxu0 0
    %2219 = vmatpush1.bf16.msra.mxu0 %v2144
    %2220 = vmatprep.subr.bf16.mxu0 0
    %2221 = vmatpush1.bf16.msra.mxu0 %v2145
    %2222 = vmatprep.subr.bf16.mxu0 0
    %2223 = vmatpush1.bf16.msra.mxu0 %v2146
    %2224 = vmatprep.mubr.bf16.mxu0 %v2114
    %2225 = vmatmul.mubr.bf16.gmra.mrb[0].mxu0 %v2113
    %v2226 = vpop.f32.mrb[0].mxu0
    %v2227 = vadd.f32 %v2186, %v2226
    %v2228 = vpop.f32.mrb[0].mxu0
    %v2229 = vpop.f32.mrb[0].mxu0
    %v2230 = vadd.f32 %v2189, %v2229
    %v2231 = vpop.f32.mrb[0].mxu0
    %2232 = vdwg.mxu0
    %v2233 = vadd.f32 %v1807, %v2227
    %v2234 = vadd.f32 %v1808, %v2230
    %v2235 = vmax.f32 %v2233, 0.0
    %v2236 = vmax.f32 %v2234, 0.0
    %s2237 = smul.u32 4, 16
    %s2238 = smul.u32 %s2237, 2
    %s2239 = sshll.u32 %s2238, 4
    %2240 = dma.done %s92, %s2239
    %v2241 = vpack.c.bf16 %v2236, %v2235
    %v2242 = vld [vmem:[#allocation3] sm:$0xff]
    %v2243 = vld [vmem:[#allocation3 + $0x8] sm:$0xff]
    %v2244 = vld [vmem:[#allocation3 + $0x10] sm:$0xff]
    %v2245 = vld [vmem:[#allocation3 + $0x18] sm:$0xff]
    %v2246 = vld [vmem:[#allocation3 + $0x20] sm:$0xff]
    %v2247 = vld [vmem:[#allocation3 + $0x28] sm:$0xff]
    %v2248 = vld [vmem:[#allocation3 + $0x30] sm:$0xff]
    %v2249 = vld [vmem:[#allocation3 + $0x38] sm:$0xff]
    %v2250 = vld [vmem:[#allocation3 + $0x40] sm:$0xff]
    %v2251 = vld [vmem:[#allocation3 + $0x48] sm:$0xff]
    %v2252 = vld [vmem:[#allocation3 + $0x50] sm:$0xff]
    %v2253 = vld [vmem:[#allocation3 + $0x58] sm:$0xff]
    %v2254 = vld [vmem:[#allocation3 + $0x60] sm:$0xff]
    %v2255 = vld [vmem:[#allocation3 + $0x68] sm:$0xff]
    %v2256 = vld [vmem:[#allocation3 + $0x70] sm:$0xff]
    %v2257 = vld [vmem:[#allocation3 + $0x78] sm:$0xff]
    %v2258 = vld [vmem:[%s8] sm:$0x3]
    %v2260 = vlaneseq
    %v2261 = vshrl.u32 %v2260, 7
    %v2262 = vsub.s32 0, %v2261
    %v2263 = vrot.slane %v2258, %v2262
    %v2264 = vlaneseq
    %v2265 = vshrl.u32 %v2264, 7
    %v2266 = vsub.s32 1, %v2265
    %v2267 = vrot.slane %v2258, %v2266
    %2270 = vmatprep.subr.bf16.mxu0 %v2243
    %2271 = vmatpush1.bf16.msra.mxu0 %v2242
    %2272 = vmatprep.subr.bf16.mxu0 %v2245
    %2273 = vmatpush1.bf16.msra.mxu0 %v2244
    %2274 = vmatprep.subr.bf16.mxu0 %v2247
    %2275 = vmatpush1.bf16.msra.mxu0 %v2246
    %2276 = vmatprep.subr.bf16.mxu0 %v2249
    %2277 = vmatpush1.bf16.msra.mxu0 %v2248
    %2278 = vmatprep.subr.bf16.mxu0 %v2251
    %2279 = vmatpush1.bf16.msra.mxu0 %v2250
    %2280 = vmatprep.subr.bf16.mxu0 %v2253
    %2281 = vmatpush1.bf16.msra.mxu0 %v2252
    %2282 = vmatprep.subr.bf16.mxu0 %v2255
    %2283 = vmatpush1.bf16.msra.mxu0 %v2254
    %2284 = vmatprep.subr.bf16.mxu0 %v2257
    %2285 = vmatpush1.bf16.msra.mxu0 %v2256
    %2286 = vmatprep.subr.bf16.mxu0 0
    %2287 = vmatpush1.bf16.msra.mxu0 0
    %2288 = vmatprep.subr.bf16.mxu0 0
    %2289 = vmatpush1.bf16.msra.mxu0 0
    %2290 = vmatprep.subr.bf16.mxu0 0
    %2291 = vmatpush1.bf16.msra.mxu0 0
    %2292 = vmatprep.subr.bf16.mxu0 0
    %2293 = vmatpush1.bf16.msra.mxu0 0
    %2294 = vmatprep.subr.bf16.mxu0 0
    %2295 = vmatpush1.bf16.msra.mxu0 0
    %2296 = vmatprep.subr.bf16.mxu0 0
    %2297 = vmatpush1.bf16.msra.mxu0 0
    %2298 = vmatprep.subr.bf16.mxu0 0
    %2299 = vmatpush1.bf16.msra.mxu0 0
    %2300 = vmatprep.subr.bf16.mxu0 0
    %2301 = vmatpush1.bf16.msra.mxu0 0
    %2302 = vmatprep.mubr.bf16.mxu0 0
    %2303 = vmatmul.mubr.bf16.gmra.mrb[0].mxu0 %v2241
    %v2304 = vpop.f32.mrb[0].mxu0
    %v2305 = vadd.f32 %v2263, %v2304
    %v2306 = vpop.f32.mrb[0].mxu0
    %v2307 = vadd.f32 %v2267, %v2306
    %v2308 = vpop.f32.mrb[0].mxu0
    %v2309 = vadd.f32 %v2263, %v2308
    %v2310 = vpop.f32.mrb[0].mxu0
    %v2311 = vadd.f32 %v2267, %v2310
    %2312 = vdwg.mxu0
    %2313 = vst [vmem:[#allocation8] sm:$0xff] %v2305
    %2314 = vst [vmem:[#allocation8 + $0x8] sm:$0xff] %v2307
    %2315 = vst [vmem:[#allocation8 + $0x10] sm:$0xff] %v2309
    %2316 = vst [vmem:[#allocation8 + $0x18] sm:$0xff] %v2311
    %v2317 = vrot.slane %v2305, 4
    %v2318 = vmax.f32 %v2305, %v2317
    %v2319 = vrot.slane %v2318, 2
    %v2320 = vmax.f32 %v2318, %v2319
    %v2321 = vrot.slane %v2320, 1
    %v2322 = vmax.f32 %v2320, %v2321
    %v2323 = vrot.slane %v2307, 4
    %v2324 = vmax.f32 %v2307, %v2323
    %v2325 = vrot.slane %v2324, 2
    %v2326 = vmax.f32 %v2324, %v2325
    %v2327 = vrot.slane %v2326, 1
    %v2328 = vmax.f32 %v2326, %v2327
    %v2329 = vrot.slane %v2309, 4
    %v2330 = vmax.f32 %v2309, %v2329
    %v2331 = vrot.slane %v2330, 2
    %v2332 = vmax.f32 %v2330, %v2331
    %v2333 = vrot.slane %v2332, 1
    %v2334 = vmax.f32 %v2332, %v2333
    %v2335 = vrot.slane %v2311, 4
    %v2336 = vmax.f32 %v2311, %v2335
    %v2337 = vrot.slane %v2336, 2
    %v2338 = vmax.f32 %v2336, %v2337
    %v2339 = vrot.slane %v2338, 1
    %v2340 = vmax.f32 %v2338, %v2339
    %v2341 = vsel %vm906, %v2322, %v2334
    %v2342 = vsel %vm906, %v2328, %v2340
    %v2343 = vld [vmem:[%s9] sm:$0xff]
    %v2344 = vld [vmem:[%s9 + $0x8] sm:$0xff]
    %v2345 = vld [vmem:[%s9 + $0x10] sm:$0xff]
    %v2346 = vld [vmem:[%s9 + $0x18] sm:$0xff]
    %v2347 = vld [vmem:[%s9 + $0x20] sm:$0xff]
    %v2348 = vld [vmem:[%s9 + $0x28] sm:$0xff]
    %v2349 = vld [vmem:[%s9 + $0x30] sm:$0xff]
    %v2350 = vld [vmem:[%s9 + $0x38] sm:$0xff]
    %v2351 = vld [vmem:[%s9 + $0x40] sm:$0xff]
    %v2352 = vld [vmem:[%s9 + $0x48] sm:$0xff]
    %v2353 = vld [vmem:[%s9 + $0x50] sm:$0xff]
    %v2354 = vld [vmem:[%s9 + $0x58] sm:$0xff]
    %v2355 = vld [vmem:[%s9 + $0x60] sm:$0xff]
    %v2356 = vld [vmem:[%s9 + $0x68] sm:$0xff]
    %v2357 = vld [vmem:[%s9 + $0x70] sm:$0xff]
    %v2358 = vld [vmem:[%s9 + $0x78] sm:$0xff]
    %v2359 = vld [vmem:[%s9 + $0x80] sm:$0xff]
    %v2360 = vld [vmem:[%s9 + $0x88] sm:$0xff]
    %v2361 = vld [vmem:[%s9 + $0x90] sm:$0xff]
    %v2362 = vld [vmem:[%s9 + $0x98] sm:$0xff]
    %v2363 = vld [vmem:[%s9 + $0xa0] sm:$0xff]
    %v2364 = vld [vmem:[%s9 + $0xa8] sm:$0xff]
    %v2365 = vld [vmem:[%s9 + $0xb0] sm:$0xff]
    %v2366 = vld [vmem:[%s9 + $0xb8] sm:$0xff]
    %v2367 = vld [vmem:[%s9 + $0xc0] sm:$0xff]
    %v2368 = vld [vmem:[%s9 + $0xc8] sm:$0xff]
    %v2369 = vld [vmem:[%s9 + $0xd0] sm:$0xff]
    %v2370 = vld [vmem:[%s9 + $0xd8] sm:$0xff]
    %v2371 = vld [vmem:[%s9 + $0xe0] sm:$0xff]
    %v2372 = vld [vmem:[%s9 + $0xe8] sm:$0xff]
    %v2373 = vld [vmem:[%s9 + $0xf0] sm:$0xff]
    %v2374 = vld [vmem:[%s9 + $0xf8] sm:$0xff]
    %v2375 = vld [vmem:[%s10] sm:$0x1]
    %v2377 = vlaneseq
    %v2378 = vshrl.u32 %v2377, 7
    %v2379 = vsub.s32 0, %v2378
    %v2380 = vrot.slane %v2375, %v2379
    %2382 = vmatprep.subr.mxu0 0.0
    %2383 = vmatpush1.msra.mxu0 %v2343
    %2384 = vmatprep.subr.mxu0 0.0
    %2385 = vmatpush1.msra.mxu0 %v2344
    %2386 = vmatprep.subr.mxu0 0.0
    %2387 = vmatpush1.msra.mxu0 %v2345
    %2388 = vmatprep.subr.mxu0 0.0
    %2389 = vmatpush1.msra.mxu0 %v2346
    %2390 = vmatprep.subr.mxu0 0.0
    %2391 = vmatpush1.msra.mxu0 %v2347
    %2392 = vmatprep.subr.mxu0 0.0
    %2393 = vmatpush1.msra.mxu0 %v2348
    %2394 = vmatprep.subr.mxu0 0.0
    %2395 = vmatpush1.msra.mxu0 %v2349
    %2396 = vmatprep.subr.mxu0 0.0
    %2397 = vmatpush1.msra.mxu0 %v2350
    %2398 = vmatprep.subr.mxu0 0.0
    %2399 = vmatpush1.msra.mxu0 %v2351
    %2400 = vmatprep.subr.mxu0 0.0
    %2401 = vmatpush1.msra.mxu0 %v2352
    %2402 = vmatprep.subr.mxu0 0.0
    %2403 = vmatpush1.msra.mxu0 %v2353
    %2404 = vmatprep.subr.mxu0 0.0
    %2405 = vmatpush1.msra.mxu0 %v2354
    %2406 = vmatprep.subr.mxu0 0.0
    %2407 = vmatpush1.msra.mxu0 %v2355
    %2408 = vmatprep.subr.mxu0 0.0
    %2409 = vmatpush1.msra.mxu0 %v2356
    %2410 = vmatprep.subr.mxu0 0.0
    %2411 = vmatpush1.msra.mxu0 %v2357
    %2412 = vmatprep.subr.mxu0 0.0
    %2413 = vmatpush1.msra.mxu0 %v2358
    %2414 = vmatprep.subr.mxu0 0.0
    %2415 = vmatpush1.msra.mxu0 %v2359
    %2416 = vmatprep.subr.mxu0 0.0
    %2417 = vmatpush1.msra.mxu0 %v2360
    %2418 = vmatprep.subr.mxu0 0.0
    %2419 = vmatpush1.msra.mxu0 %v2361
    %2420 = vmatprep.subr.mxu0 0.0
    %2421 = vmatpush1.msra.mxu0 %v2362
    %2422 = vmatprep.subr.mxu0 0.0
    %2423 = vmatpush1.msra.mxu0 %v2363
    %2424 = vmatprep.subr.mxu0 0.0
    %2425 = vmatpush1.msra.mxu0 %v2364
    %2426 = vmatprep.subr.mxu0 0.0
    %2427 = vmatpush1.msra.mxu0 %v2365
    %2428 = vmatprep.subr.mxu0 0.0
    %2429 = vmatpush1.msra.mxu0 %v2366
    %2430 = vmatprep.subr.mxu0 0.0
    %2431 = vmatpush1.msra.mxu0 %v2367
    %2432 = vmatprep.subr.mxu0 0.0
    %2433 = vmatpush1.msra.mxu0 %v2368
    %2434 = vmatprep.subr.mxu0 0.0
    %2435 = vmatpush1.msra.mxu0 %v2369
    %2436 = vmatprep.subr.mxu0 0.0
    %2437 = vmatpush1.msra.mxu0 %v2370
    %2438 = vmatprep.subr.mxu0 0.0
    %2439 = vmatpush1.msra.mxu0 %v2371
    %2440 = vmatprep.subr.mxu0 0.0
    %2441 = vmatpush1.msra.mxu0 %v2372
    %2442 = vmatprep.subr.mxu0 0.0
    %2443 = vmatpush1.msra.mxu0 %v2373
    %2444 = vmatprep.subr.mxu0 0.0
    %2445 = vmatpush1.msra.mxu0 %v2374
    %2446 = vmatprep.mubr.f32.mxu0 %v2342
    %2447 = vmatmul.mubr.f32.gmra.mrb[0].mxu0 %v2341
    %v2448 = vpop.f32.mrb[0].mxu0
    %v2449 = vadd.f32 %v2380, %v2448
    %v2450 = vpop.f32.mrb[0].mxu0
    %2451 = vdwg.mxu0
    %vm2452 = vcmask 9216
    %2453 = vst.msk [vmem:[#allocation9] sm:$0x3] %vm2452, %v2449
    // Predicated region
    $region91: #{tpu_custom_call.1} parent=1 // pred_check
      _
    $region92: #{tpu_custom_call.1} parent=1 // pred_check_branch
      %2455 = sbr.rel (0) target = $region94
    $region93: #{tpu_custom_call.1} parent=1 // pred_region
      %s2457 = ssub.s32 512, 512
      %2458 = vsyncadd [#allocation7], %s2457
      %s2459 = sshll.u32 [#allocation8], 4
      %s2460 = int_to_ptr.vmem [resolvable:$true] %s2459
      %2465 = dma.vmem_to_hbm [thread:$0]  %s2460, 512, %s11, [#allocation7], 256, 256, 16
    $region94: #{tpu_custom_call.1} parent=1 // pred_fallthru
      _
    // Predicated region
    $region95: #{tpu_custom_call.1} parent=1 // pred_check
      _
    $region96: #{tpu_custom_call.1} parent=1 // pred_check_branch
      %2467 = sbr.rel (0) target = $region98
    $region97: #{tpu_custom_call.1} parent=1 // pred_region
      %s2469 = ssub.s32 32, 32
      %2470 = vsyncadd [#allocation10], %s2469
      %s2472 = sshll.u32 [#allocation9], 4
      %s2473 = int_to_ptr.vmem [resolvable:$true] %s2472
      %2475 = dma.vmem_to_hbm [thread:$0]  %s2473, 32, %s12, [#allocation10]
    $region98: #{tpu_custom_call.1} parent=1 // pred_fallthru
      _
    // Predicated region
    $region99: #{tpu_custom_call.1} parent=1 // pred_check
      _
    $region100: #{tpu_custom_call.1} parent=1 // pred_check_branch
      %2477 = sbr.rel (0) target = $region102
    $region101: #{tpu_custom_call.1} parent=1 // pred_region
      %2478 = dma.done [#allocation7], 512
    $region102: #{tpu_custom_call.1} parent=1 // pred_fallthru
      _
    // Predicated region
    $region103: #{tpu_custom_call.1} parent=1 // pred_check
      _
    $region104: #{tpu_custom_call.1} parent=1 // pred_check_branch
      %2480 = sbr.rel (0) target = $region106
    $region105: #{tpu_custom_call.1} parent=1 // pred_region
      %2481 = dma.done [#allocation10], 32
    $region106: #{tpu_custom_call.1} parent=1 // pred_fallthru
      _
    %2482 = vsyncpa [#allocation6], 1
    %2483 = vsyncpa [#allocation7], 1
    %2484 = vsyncpa [#allocation10], 1
  %2485 = vsyncmov [#allocation4]
  %s2486 = vpop.sfrf %2485
  %p2487 = scmp.eq.s32.totalorder %s2486, 0
  %p2488 = pneg %p2487
  %2490 = shalt.err (%p2488)
  %s2491 = scalar_lea.sflag [#allocation4], 1
  %2492 = vsyncmov %s2491
  %s2493 = vpop.sfrf %2492
  %p2494 = scmp.eq.s32.totalorder %s2493, 0
  %p2495 = pneg %p2494
  %2497 = shalt.err (%p2495)
  %s2498 = scalar_lea.sflag [#allocation4], 2
  %2499 = vsyncmov %s2498
  %s2500 = vpop.sfrf %2499
  %p2501 = scmp.eq.s32.totalorder %s2500, 0
  %p2502 = pneg %p2501
  %2504 = shalt.err (%p2502)
  %s2505 = scalar_lea.sflag [#allocation4], 3
  %2506 = vsyncmov %s2505
  %s2507 = vpop.sfrf %2506
  %p2508 = scmp.eq.s32.totalorder %s2507, 0
  %p2509 = pneg %p2508
  %2511 = shalt.err (%p2509)

</llo_original>
